<compile_context>
chip_gen: v7x
topology: tpu7x:2x2x1
jax: 0.10.0
libtpu: 0.0.40
codegen_flags: <defaults>
</compile_context>

<pallas_src>
import functools

import jax
import jax.numpy as jnp
import numpy as np
from jax.experimental import pallas as pl
from jax.experimental.pallas import tpu as pltpu

_GP = 128   # per-gate lane pitch: every gate block starts at a vreg boundary


# -----------------------------------------------------------------------------
# Kernel
# -----------------------------------------------------------------------------
def _cmn_kernel(x_ref, hist_ref, masks_ref, w_ref, b_ref, out_ref, hid_ref,
                *, hops, H, C, offs):
    f32, bf16 = jnp.float32, jnp.bfloat16
    B, Dm = x_ref.shape
    T = masks_ref.shape[2]
    H2 = 2 * H
    GP = _GP
    o_ihl, o_hhl, o_ihm, o_hhm, o_in, o_out = offs

    mask_own = masks_ref[0]                       # (B, T)
    mask_oth = masks_ref[1]

    # packed bf16 weights, sliced at static tile/vreg-aligned offsets
    wih_loc = w_ref[o_ihl:o_ihl + 2 * Dm, :]      # (2Dm, 3*GP)
    whh_loc = w_ref[o_hhl:o_hhl + H2, :]          # (2H , 3*GP)
    wih_mem = w_ref[o_ihm:o_ihm + H2, :]          # (2H , 3*GP)
    whh_mem = w_ref[o_hhm:o_hhm + H2, :]          # (2H , 3*GP)
    in_w = w_ref[o_in:o_in + Dm, :H]              # (Dm, H)
    out_w = w_ref[o_out:o_out + H, :C]            # (H , C)

    # packed f32 bias rows
    b_loc_gi = b_ref[0:1, :]                      # (1, 3*GP)
    b_loc_hn = b_ref[1:2, :H2]                    # (1, 2H)
    b_mem_gi = b_ref[2:3, :]                      # (1, 3*GP)
    b_mem_hn = b_ref[3:4, :H2]                    # (1, 2H)
    out_b = b_ref[4:5, :C]                        # (1, C)

    # ---------- fused (own|other) masked GRUCell recurrence over time --------
    # All W_ih·x contributions in ONE matmul; rows are t-major so gi[t] is a
    # contiguous (B, 3*GP) slab and every gate starts at a 128-lane boundary.
    gi = jnp.dot(hist_ref[...], wih_loc, preferred_element_type=f32) + b_loc_gi
    gi = gi.reshape(T, B, 3 * GP)

    # per-step (B, 2H) masks built in-kernel from the (B, T) inputs (hoisted
    # out of the recurrence; no redundant (T,B,2H) HBM input any more).
    lane2 = jax.lax.broadcasted_iota(jnp.int32, (B, H2), 1)
    m_steps = [
        jnp.where(lane2 < H,
                  jnp.broadcast_to(mask_own[:, t:t + 1], (B, H2)),
                  jnp.broadcast_to(mask_oth[:, t:t + 1], (B, H2)))
        for t in range(T)
    ]

    h2 = jnp.zeros((B, H2), f32)
    for t in range(T):                 # T static -> fully unrolled
        # ONE fused h @ W_hh matmul per serial step (gates lane-padded to 128)
        gh = jnp.dot(h2.astype(bf16), whh_loc, preferred_element_type=f32)
        gi_t = gi[t]
        # fused r|z sigmoid over a single 2*GP-lane slab (one EUP issue)
        rz = jax.nn.sigmoid(gi_t[:, :2 * GP] + gh[:, :2 * GP])
        r = rz[:, :H2]
        z = rz[:, GP:GP + H2]
        n = jnp.tanh(gi_t[:, 2 * GP:2 * GP + H2]
                     + r * (gh[:, 2 * GP:2 * GP + H2] + b_loc_hn))
        new_h = (1.0 - z) * n + z * h2
        m = m_steps[t]
        h2 = new_h * m + h2 * (1.0 - m)
        # linear-cost per-step store (off the serial dependency path)
        hid_ref[:, t:t + 1, :] = h2.reshape(B, 1, H2)

    # TODO(synk): nn.Dropout (local_dropout / attention_dropout) run as
    # eval-mode identities.
    hidden = jnp.tanh(hid_ref[...])                                   # (B, T, 2H)

    # ---------- fused memory nn.GRU.  The PyTorch code feeds (B,T,H) to a
    # batch_first=False GRU, so the recurrence runs over the *batch* dim with
    # T acting as the GRU batch.  Reproduced faithfully. ----------------------
    gim = jnp.dot(hidden.reshape(B * T, H2).astype(bf16), wih_mem,
                  preferred_element_type=f32) + b_mem_gi              # (B*T, 3GP)
    gim = gim.reshape(B, T, 3 * GP)

    hm = jnp.zeros((T, H2), f32)
    hms = []
    for b in range(B):                 # B static -> fully unrolled
        gh = jnp.dot(hm.astype(bf16), whh_mem, preferred_element_type=f32)
        gi_b = gim[b]
        rz = jax.nn.sigmoid(gi_b[:, :2 * GP] + gh[:, :2 * GP])
        r = rz[:, :H2]
        z = rz[:, GP:GP + H2]
        n = jnp.tanh(gi_b[:, 2 * GP:2 * GP + H2]
                     + r * (gh[:, 2 * GP:2 * GP + H2] + b_mem_hn))
        hm = (1.0 - z) * n + z * hm
        hms.append(hm)
    gru_out = jnp.stack(hms, axis=0)                                  # (B, T, 2H)

    # ---------- multi-hop attention ------------------------------------------
    go_own = gru_out[:, :, :H]                    # one-time lane split
    go_oth = gru_out[:, :, H:]
    mo_own = go_own * mask_own[:, :, None]
    mo_oth = go_oth * mask_oth[:, :, None]
    all_mask = mask_own + mask_oth                # may hit 2.0 — faithful to torch

    proj = jnp.tanh(jnp.dot(x_ref[...], in_w, preferred_element_type=f32))  # (B, H)

    def attention(inp, outp, proj_):
        score = jnp.tanh(jnp.sum(inp * proj_[:, None, :], axis=-1))   # (B, T)
        score = all_mask * score + (1.0 - all_mask) * (-10000.0)
        score = score - jnp.max(score, axis=-1, keepdims=True)
        e = jnp.exp(score)
        p = e * pl.reciprocal(jnp.sum(e, axis=-1, keepdims=True), approx=True)
        p = all_mask * p
        return jnp.sum(p[:, :, None] * outp, axis=1)                  # (B, H)

    for hop in range(hops):
        # hop 0 uses un-masked GRU outputs as the "input" memory; later hops
        # use the previous (masked) output memory — identical every hop since
        # the memory GRU is re-run on the same input deterministically.
        inp_own = go_own if hop == 0 else mo_own
        inp_oth = go_oth if hop == 0 else mo_oth
        w_own = attention(inp_own, mo_own, proj)
        w_oth = attention(inp_oth, mo_oth, proj)
        proj = jnp.tanh(proj + w_own + w_oth)

    logits = jnp.dot(proj.astype(bf16), out_w, preferred_element_type=f32) + out_b
    logits = logits - jnp.max(logits, axis=-1, keepdims=True)
    lse = jnp.log(jnp.sum(jnp.exp(logits), axis=-1, keepdims=True))
    out_ref[...] = logits - lse                                       # log_softmax


# -----------------------------------------------------------------------------
# Parameter fusion / packing helpers (wrapper-side, done once)
# -----------------------------------------------------------------------------
def _split_gates_t(W):
    """(3H, Din) torch layout -> three (Din, H) transposed gate blocks (r,z,n)."""
    H = W.shape[0] // 3
    return W[:H].T, W[H:2 * H].T, W[2 * H:].T


def _block_diag(A, B):
    top = jnp.concatenate([A, jnp.zeros((A.shape[0], B.shape[1]), A.dtype)], axis=1)
    bot = jnp.concatenate([jnp.zeros((B.shape[0], A.shape[1]), A.dtype), B], axis=1)
    return jnp.concatenate([top, bot], axis=0)


def _fuse_gate_weights(w_a, w_b):
    """Own/other (3H, Din) gate weights -> (2*Din, 3*_GP) block-diagonal slab
    with every gate's (2*Din, 2H) block zero-padded to a 128-lane pitch."""
    ga = _split_gates_t(jnp.asarray(w_a, jnp.float32))
    gb = _split_gates_t(jnp.asarray(w_b, jnp.float32))
    cols = []
    for g in range(3):
        blk = _block_diag(ga[g], gb[g])                       # (2*Din, 2H)
        blk = jnp.pad(blk, ((0, 0), (0, _GP - blk.shape[1])))
        cols.append(blk)
    return jnp.concatenate(cols, axis=1)                      # (2*Din, 3*_GP)


def _fuse_bias_rows(bih_a, bhh_a, bih_b, bhh_b):
    """Return (gi_row, hn_row), each (3*_GP,), in the lane-padded gate layout.
    r/z fold b_ih + b_hh; the n gate keeps b_hh separate (it sits inside
    r * (gh_n + b_hn) per the GRU definition)."""
    f32 = jnp.float32
    bih_a, bhh_a = jnp.asarray(bih_a, f32), jnp.asarray(bhh_a, f32)
    bih_b, bhh_b = jnp.asarray(bih_b, f32), jnp.asarray(bhh_b, f32)
    H = bih_a.shape[0] // 3
    g = lambda v, i: v[i * H:(i + 1) * H]
    gi_row = jnp.zeros((3 * _GP,), f32)
    gi_row = gi_row.at[0 * _GP:0 * _GP + 2 * H].set(
        jnp.concatenate([g(bih_a, 0) + g(bhh_a, 0), g(bih_b, 0) + g(bhh_b, 0)]))
    gi_row = gi_row.at[1 * _GP:1 * _GP + 2 * H].set(
        jnp.concatenate([g(bih_a, 1) + g(bhh_a, 1), g(bih_b, 1) + g(bhh_b, 1)]))
    gi_row = gi_row.at[2 * _GP:2 * _GP + 2 * H].set(
        jnp.concatenate([g(bih_a, 2), g(bih_b, 2)]))
    hn_row = jnp.zeros((3 * _GP,), f32).at[:2 * H].set(
        jnp.concatenate([g(bhh_a, 2), g(bhh_b, 2)]))
    return gi_row, hn_row


def _pack_rows(blocks):
    """Stack row-blocks (all 3*_GP columns) with each block padded to a
    multiple of 8 rows so every block starts sublane-tile-aligned."""
    offs, padded, r = [], [], 0
    for blk in blocks:
        offs.append(r)
        pad = (-blk.shape[0]) % 8
        if pad:
            blk = jnp.pad(blk, ((0, pad), (0, 0)))
        padded.append(blk)
        r += blk.shape[0]
    return jnp.concatenate(padded, axis=0), tuple(offs)


# -----------------------------------------------------------------------------
# Wrapper
# -----------------------------------------------------------------------------
def cmn_forward(in_modalities, params, hops):
    """in_modalities = [*modalities, *hist_own_mods, *hist_other_mods, own_mask, other_mask]."""
    mask_own, mask_oth = in_modalities[-2], in_modalities[-1]
    nm = (len(in_modalities) - 2) // 3
    x = jnp.concatenate(in_modalities[:nm], axis=-1)
    hist_own = jnp.concatenate(in_modalities[nm:2 * nm], axis=-1)
    hist_oth = jnp.concatenate(in_modalities[2 * nm:3 * nm], axis=-1)

    B, T, Dm = hist_own.shape
    H = params["in_w"].shape[0]
    C = params["out_w"].shape[0]
    f32, bf16 = jnp.float32, jnp.bfloat16
    assert 2 * H <= _GP and C <= 3 * _GP

    # ---- parameter fusion (own/other block-diag, 128-lane gate pitch) ----
    wih_loc = _fuse_gate_weights(params["own_wih"], params["oth_wih"])   # (2Dm, 384)
    whh_loc = _fuse_gate_weights(params["own_whh"], params["oth_whh"])   # (2H , 384)
    wih_mem = _fuse_gate_weights(params["memo_wih"], params["memx_wih"])
    whh_mem = _fuse_gate_weights(params["memo_whh"], params["memx_whh"])
    in_w_blk = jnp.pad(jnp.asarray(params["in_w"], f32).T, ((0, 0), (0, 3 * _GP - H)))
    out_w_blk = jnp.pad(jnp.asarray(params["out_w"], f32).T, ((0, 0), (0, 3 * _GP - C)))
    w_packed, offs = _pack_rows(
        [wih_loc, whh_loc, wih_mem, whh_mem, in_w_blk, out_w_blk])
    w_packed = w_packed.astype(bf16)            # single bf16 weight slab (1 DMA)

    b_loc_gi, b_loc_hn = _fuse_bias_rows(params["own_bih"], params["own_bhh"],
                                         params["oth_bih"], params["oth_bhh"])
    b_mem_gi, b_mem_hn = _fuse_bias_rows(params["memo_bih"], params["memo_bhh"],
                                         params["memx_bih"], params["memx_bhh"])
    b_packed = jnp.zeros((8, 3 * _GP), f32)
    b_packed = b_packed.at[0].set(b_loc_gi).at[1].set(b_loc_hn)
    b_packed = b_packed.at[2].set(b_mem_gi).at[3].set(b_mem_hn)
    b_packed = b_packed.at[4, :C].set(jnp.asarray(params["out_b"], f32))

    # ---- data marshalling (bf16 activations; t-major rows for the local GRU) ----
    x_bf = jnp.asarray(x, f32).astype(bf16)                               # (B, Dm)
    hist = jnp.concatenate([jnp.asarray(hist_own, f32),
                            jnp.asarray(hist_oth, f32)], axis=-1)         # (B, T, 2Dm)
    hist_tb = jnp.transpose(hist, (1, 0, 2)).reshape(T * B, 2 * Dm).astype(bf16)
    masks = jnp.stack([jnp.asarray(mask_own, f32),
                       jnp.asarray(mask_oth, f32)], axis=0)               # (2, B, T)

    kernel = functools.partial(_cmn_kernel, hops=hops, H=H, C=C, offs=offs)
    vmem = pl.BlockSpec(memory_space=pltpu.MemorySpace.VMEM)
    # TODO(synk): at realistic batch sizes expose a "parallel" grid axis over
    # independent conversations so v7x's second TensorCore is used (and tile
    # the gi/gim staging for its 64 MiB VMEM); at B=4 everything fits one
    # grid-less invocation.
    return pl.pallas_call(
        kernel,
        out_shape=jax.ShapeDtypeStruct((B, C), f32),
        in_specs=[vmem] * 5,
        out_specs=vmem,
        scratch_shapes=[pltpu.VMEM((B, T, 2 * H), f32)],
    )(x_bf, hist_tb, masks, w_packed, b_packed)


# -----------------------------------------------------------------------------
# Pure-JAX f32 reference (mirrors the PyTorch forward, eval mode)
# -----------------------------------------------------------------------------
def _gru_step_ref(x, h, w_ih, w_hh, b_ih, b_hh):
    H = h.shape[-1]
    gi = x @ w_ih.T + b_ih
    gh = h @ w_hh.T + b_hh
    r = jax.nn.sigmoid(gi[..., :H] + gh[..., :H])
    z = jax.nn.sigmoid(gi[..., H:2 * H] + gh[..., H:2 * H])
    n = jnp.tanh(gi[..., 2 * H:] + r * gh[..., 2 * H:])
    return (1.0 - z) * n + z * h


def cmn_reference(x, hist_own, hist_oth, m_own, m_oth, p, hops):
    B, T, _ = hist_own.shape
    H = p["in_w"].shape[0]

    def local(hist, mask, wih, whh, bih, bhh):
        h = jnp.zeros((B, H), jnp.float32)
        outs = []
        for t in range(T):
            nh = _gru_step_ref(hist[:, t, :], h, wih, whh, bih, bhh)
            m = mask[:, t][:, None]
            h = nh * m + h * (1.0 - m)
            outs.append(h)
        return jnp.stack(outs, axis=1)

    own_hidden = jnp.tanh(local(hist_own, m_own, p["own_wih"], p["own_whh"], p["own_bih"], p["own_bhh"]))
    oth_hidden = jnp.tanh(local(hist_oth, m_oth, p["oth_wih"], p["oth_whh"], p["oth_bih"], p["oth_bhh"]))

    def memgru(hid, wih, whh, bih, bhh):
        h = jnp.zeros((T, H), jnp.float32)
        outs = []
        for b in range(B):
            h = _gru_step_ref(hid[b], h, wih, whh, bih, bhh)
            outs.append(h)
        return jnp.stack(outs, axis=0)

    go_own = memgru(own_hidden, p["memo_wih"], p["memo_whh"], p["memo_bih"], p["memo_bhh"])
    go_oth = memgru(oth_hidden, p["memx_wih"], p["memx_whh"], p["memx_bih"], p["memx_bhh"])
    mo_own = go_own * m_own[:, :, None]
    mo_oth = go_oth * m_oth[:, :, None]
    all_mask = m_own + m_oth
    proj = jnp.tanh(x @ p["in_w"].T)

    def attn(inp, outp, proj):
        s = jnp.tanh(jnp.einsum("bth,bh->bt", inp, proj))
        s = all_mask * s + (1.0 - all_mask) * (-10000.0)
        s = jax.nn.softmax(s, axis=-1)
        s = all_mask * s
        return jnp.einsum("bt,bth->bh", s, outp)

    for hop in range(hops):
        io = go_own if hop == 0 else mo_own
        it = go_oth if hop == 0 else mo_oth
        proj = jnp.tanh(proj + attn(io, mo_own, proj) + attn(it, mo_oth, proj))

    logits = proj @ p["out_w"].T + p["out_b"]
    return jax.nn.log_softmax(logits, axis=-1)


# -----------------------------------------------------------------------------
# Deterministic parameter init (synthetic; PyTorch-shaped weights)
# -----------------------------------------------------------------------------
def init_params(key, Dm, H, C):
    keys = iter(jax.random.split(key, 32))
    u = lambda shape, s: jax.random.uniform(next(keys), shape, jnp.float32, -s, s)
    s = 1.0 / np.sqrt(H)
    p = {}
    for name, din in (("own", Dm), ("oth", Dm), ("memo", H), ("memx", H)):
        p[f"{name}_wih"] = u((3 * H, din), s)
        p[f"{name}_whh"] = u((3 * H, H), s)
        p[f"{name}_bih"] = u((3 * H,), s)
        p[f"{name}_bhh"] = u((3 * H,), s)
    p["in_w"] = u((H, Dm), 1.0 / np.sqrt(Dm))   # input_dense (no bias)
    p["out_w"] = u((C, H), s)                   # output_dense
    p["out_b"] = u((C,), s)
    return p


# -----------------------------------------------------------------------------
# Main
# -----------------------------------------------------------------------------
if __name__ == "__main__":
    B, T, H, C, HOPS = 4, 8, 32, 4, 3
    input_dims = (12, 20)            # two modalities -> D_m = 32
    Dm = sum(input_dims)

    key = jax.random.PRNGKey(0)
    k = iter(jax.random.split(key, 16))

    # build in_modalities exactly like the PyTorch module expects
    mods = [jax.random.normal(next(k), (B, d), jnp.float32) for d in input_dims]
    hown = [jax.random.normal(next(k), (B, T, d), jnp.float32) for d in input_dims]
    hoth = [jax.random.normal(next(k), (B, T, d), jnp.float32) for d in input_dims]
    mask_own = (jax.random.uniform(next(k), (B, T)) < 0.8).astype(jnp.float32)
    mask_oth = (jax.random.uniform(next(k), (B, T)) < 0.8).astype(jnp.float32)
    in_modalities = mods + hown + hoth + [mask_own, mask_oth]

    params = init_params(next(k), Dm, H, C)

    out = cmn_forward(in_modalities, params, HOPS)
    out = jax.block_until_ready(out)
    assert out.shape == (B, C)
    assert bool(jnp.all(jnp.isfinite(out)))

    # correctness check against a pure-f32 JAX reference of the same math.
    # The kernel uses bf16 matmul operands (f32 accumulation) per the TPU perf
    # guidance, so the tolerance is relaxed relative to a pure-f32 comparison.
    x = jnp.concatenate(mods, axis=-1)
    ho = jnp.concatenate(hown, axis=-1)
    ht = jnp.concatenate(hoth, axis=-1)
    ref = jax.block_until_ready(
        cmn_reference(x, ho, ht, mask_own, mask_oth, params, HOPS))
    np.testing.assert_allclose(np.asarray(out), np.asarray(ref), atol=5e-2, rtol=5e-2)

    print("KERNEL_OK")
</pallas_src>

<mosaic_0001>
module attributes {stable_mosaic.version = 11 : i64} {
  func.func @_cmn_kernel(%arg0: memref<4x32xbf16, #tpu.memory_space<vmem>>, %arg1: memref<32x64xbf16, #tpu.memory_space<vmem>>, %arg2: memref<2x4x8xf32, #tpu.memory_space<vmem>>, %arg3: memref<320x384xbf16, #tpu.memory_space<vmem>>, %arg4: memref<8x384xf32, #tpu.memory_space<vmem>>, %arg5: memref<4x4xf32, #tpu.memory_space<vmem>>, %arg6: memref<4x8x64xf32, #tpu.memory_space<vmem>>) attributes {dimension_semantics = [], scalar_prefetch = 0 : i64, scratch_operands = 1 : i64, tpu.core_type = #tpu.core_type<tc>} {
    %c0 = arith.constant 0 : index
    %c0_0 = arith.constant 0 : index
    %c0_1 = arith.constant 0 : index
    %0 = vector.load %arg2[%c0, %c0_0, %c0_1] : memref<2x4x8xf32, #tpu.memory_space<vmem>>, vector<1x4x8xf32>
    %1 = vector.shape_cast %0 : vector<1x4x8xf32> to vector<4x8xf32>
    %c1 = arith.constant 1 : index
    %c0_2 = arith.constant 0 : index
    %c0_3 = arith.constant 0 : index
    %2 = vector.load %arg2[%c1, %c0_2, %c0_3] : memref<2x4x8xf32, #tpu.memory_space<vmem>>, vector<1x4x8xf32>
    %3 = vector.shape_cast %2 : vector<1x4x8xf32> to vector<4x8xf32>
    %c0_4 = arith.constant 0 : index
    %c0_5 = arith.constant 0 : index
    %4 = vector.load %arg3[%c0_4, %c0_5] : memref<320x384xbf16, #tpu.memory_space<vmem>>, vector<64x384xbf16>
    %c64 = arith.constant 64 : index
    %c0_6 = arith.constant 0 : index
    %5 = vector.load %arg3[%c64, %c0_6] : memref<320x384xbf16, #tpu.memory_space<vmem>>, vector<64x384xbf16>
    %c128 = arith.constant 128 : index
    %c0_7 = arith.constant 0 : index
    %6 = vector.load %arg3[%c128, %c0_7] : memref<320x384xbf16, #tpu.memory_space<vmem>>, vector<64x384xbf16>
    %c192 = arith.constant 192 : index
    %c0_8 = arith.constant 0 : index
    %7 = vector.load %arg3[%c192, %c0_8] : memref<320x384xbf16, #tpu.memory_space<vmem>>, vector<64x384xbf16>
    %c256 = arith.constant 256 : index
    %c0_9 = arith.constant 0 : index
    %8 = vector.load %arg3[%c256, %c0_9] : memref<320x384xbf16, #tpu.memory_space<vmem>>, vector<32x32xbf16>
    %c288 = arith.constant 288 : index
    %c0_10 = arith.constant 0 : index
    %9 = vector.load %arg3[%c288, %c0_10] : memref<320x384xbf16, #tpu.memory_space<vmem>>, vector<32x4xbf16>
    %c0_11 = arith.constant 0 : index
    %c0_12 = arith.constant 0 : index
    %10 = vector.load %arg4[%c0_11, %c0_12] : memref<8x384xf32, #tpu.memory_space<vmem>>, vector<1x384xf32>
    %c1_13 = arith.constant 1 : index
    %c0_14 = arith.constant 0 : index
    %11 = vector.load %arg4[%c1_13, %c0_14] : memref<8x384xf32, #tpu.memory_space<vmem>>, vector<1x64xf32>
    %c2 = arith.constant 2 : index
    %c0_15 = arith.constant 0 : index
    %12 = vector.load %arg4[%c2, %c0_15] : memref<8x384xf32, #tpu.memory_space<vmem>>, vector<1x384xf32>
    %c3 = arith.constant 3 : index
    %c0_16 = arith.constant 0 : index
    %13 = vector.load %arg4[%c3, %c0_16] : memref<8x384xf32, #tpu.memory_space<vmem>>, vector<1x64xf32>
    %c4 = arith.constant 4 : index
    %c0_17 = arith.constant 0 : index
    %14 = vector.load %arg4[%c4, %c0_17] : memref<8x384xf32, #tpu.memory_space<vmem>>, vector<1x4xf32>
    %c0_18 = arith.constant 0 : index
    %c0_19 = arith.constant 0 : index
    %15 = vector.load %arg1[%c0_18, %c0_19] : memref<32x64xbf16, #tpu.memory_space<vmem>>, vector<32x64xbf16>
    %cst = arith.constant dense<0.000000e+00> : vector<32x384xf32>
    %16 = tpu.matmul %15, %4, %cst {dimension_numbers = #tpu.dot_dimension_numbers<[1], [0], [0], [1], [0, 0, 1, 1], [], []>} : vector<32x64xbf16>, vector<64x384xbf16>, vector<32x384xf32> -> vector<32x384xf32>
    %17 = vector.broadcast %10 : vector<1x384xf32> to vector<32x384xf32>
    %18 = arith.addf %16, %17 : vector<32x384xf32>
    %19 = vector.shape_cast %18 : vector<32x384xf32> to vector<8x4x384xf32>
    %20 = tpu.iota {dimensions = array<i32: 1>} : vector<4x64xi32>
    %c32_i32 = arith.constant 32 : i32
    %21 = vector.broadcast %c32_i32 : i32 to vector<4x64xi32>
    %22 = arith.cmpi slt, %20, %21 : vector<4x64xi32>
    %23 = vector.extract_strided_slice %1 {offsets = [0, 0], sizes = [4, 1], strides = [1, 1]} : vector<4x8xf32> to vector<4x1xf32>
    %24 = vector.shape_cast %23 : vector<4x1xf32> to vector<4x1xf32>
    %25 = vector.broadcast %24 : vector<4x1xf32> to vector<4x64xf32>
    %26 = vector.extract_strided_slice %3 {offsets = [0, 0], sizes = [4, 1], strides = [1, 1]} : vector<4x8xf32> to vector<4x1xf32>
    %27 = vector.shape_cast %26 : vector<4x1xf32> to vector<4x1xf32>
    %28 = vector.broadcast %27 : vector<4x1xf32> to vector<4x64xf32>
    %29 = arith.select %22, %25, %28 : vector<4x64xi1>, vector<4x64xf32>
    %c32_i32_20 = arith.constant 32 : i32
    %30 = vector.broadcast %c32_i32_20 : i32 to vector<4x64xi32>
    %31 = arith.cmpi slt, %20, %30 : vector<4x64xi32>
    %32 = vector.extract_strided_slice %1 {offsets = [0, 1], sizes = [4, 1], strides = [1, 1]} : vector<4x8xf32> to vector<4x1xf32>
    %33 = vector.shape_cast %32 : vector<4x1xf32> to vector<4x1xf32>
    %34 = vector.broadcast %33 : vector<4x1xf32> to vector<4x64xf32>
    %35 = vector.extract_strided_slice %3 {offsets = [0, 1], sizes = [4, 1], strides = [1, 1]} : vector<4x8xf32> to vector<4x1xf32>
    %36 = vector.shape_cast %35 : vector<4x1xf32> to vector<4x1xf32>
    %37 = vector.broadcast %36 : vector<4x1xf32> to vector<4x64xf32>
    %38 = arith.select %31, %34, %37 : vector<4x64xi1>, vector<4x64xf32>
    %c32_i32_21 = arith.constant 32 : i32
    %39 = vector.broadcast %c32_i32_21 : i32 to vector<4x64xi32>
    %40 = arith.cmpi slt, %20, %39 : vector<4x64xi32>
    %41 = vector.extract_strided_slice %1 {offsets = [0, 2], sizes = [4, 1], strides = [1, 1]} : vector<4x8xf32> to vector<4x1xf32>
    %42 = vector.shape_cast %41 : vector<4x1xf32> to vector<4x1xf32>
    %43 = vector.broadcast %42 : vector<4x1xf32> to vector<4x64xf32>
    %44 = vector.extract_strided_slice %3 {offsets = [0, 2], sizes = [4, 1], strides = [1, 1]} : vector<4x8xf32> to vector<4x1xf32>
    %45 = vector.shape_cast %44 : vector<4x1xf32> to vector<4x1xf32>
    %46 = vector.broadcast %45 : vector<4x1xf32> to vector<4x64xf32>
    %47 = arith.select %40, %43, %46 : vector<4x64xi1>, vector<4x64xf32>
    %c32_i32_22 = arith.constant 32 : i32
    %48 = vector.broadcast %c32_i32_22 : i32 to vector<4x64xi32>
    %49 = arith.cmpi slt, %20, %48 : vector<4x64xi32>
    %50 = vector.extract_strided_slice %1 {offsets = [0, 3], sizes = [4, 1], strides = [1, 1]} : vector<4x8xf32> to vector<4x1xf32>
    %51 = vector.shape_cast %50 : vector<4x1xf32> to vector<4x1xf32>
    %52 = vector.broadcast %51 : vector<4x1xf32> to vector<4x64xf32>
    %53 = vector.extract_strided_slice %3 {offsets = [0, 3], sizes = [4, 1], strides = [1, 1]} : vector<4x8xf32> to vector<4x1xf32>
    %54 = vector.shape_cast %53 : vector<4x1xf32> to vector<4x1xf32>
    %55 = vector.broadcast %54 : vector<4x1xf32> to vector<4x64xf32>
    %56 = arith.select %49, %52, %55 : vector<4x64xi1>, vector<4x64xf32>
    %c32_i32_23 = arith.constant 32 : i32
    %57 = vector.broadcast %c32_i32_23 : i32 to vector<4x64xi32>
    %58 = arith.cmpi slt, %20, %57 : vector<4x64xi32>
    %59 = vector.extract_strided_slice %1 {offsets = [0, 4], sizes = [4, 1], strides = [1, 1]} : vector<4x8xf32> to vector<4x1xf32>
    %60 = vector.shape_cast %59 : vector<4x1xf32> to vector<4x1xf32>
    %61 = vector.broadcast %60 : vector<4x1xf32> to vector<4x64xf32>
    %62 = vector.extract_strided_slice %3 {offsets = [0, 4], sizes = [4, 1], strides = [1, 1]} : vector<4x8xf32> to vector<4x1xf32>
    %63 = vector.shape_cast %62 : vector<4x1xf32> to vector<4x1xf32>
    %64 = vector.broadcast %63 : vector<4x1xf32> to vector<4x64xf32>
    %65 = arith.select %58, %61, %64 : vector<4x64xi1>, vector<4x64xf32>
    %c32_i32_24 = arith.constant 32 : i32
    %66 = vector.broadcast %c32_i32_24 : i32 to vector<4x64xi32>
    %67 = arith.cmpi slt, %20, %66 : vector<4x64xi32>
    %68 = vector.extract_strided_slice %1 {offsets = [0, 5], sizes = [4, 1], strides = [1, 1]} : vector<4x8xf32> to vector<4x1xf32>
    %69 = vector.shape_cast %68 : vector<4x1xf32> to vector<4x1xf32>
    %70 = vector.broadcast %69 : vector<4x1xf32> to vector<4x64xf32>
    %71 = vector.extract_strided_slice %3 {offsets = [0, 5], sizes = [4, 1], strides = [1, 1]} : vector<4x8xf32> to vector<4x1xf32>
    %72 = vector.shape_cast %71 : vector<4x1xf32> to vector<4x1xf32>
    %73 = vector.broadcast %72 : vector<4x1xf32> to vector<4x64xf32>
    %74 = arith.select %67, %70, %73 : vector<4x64xi1>, vector<4x64xf32>
    %c32_i32_25 = arith.constant 32 : i32
    %75 = vector.broadcast %c32_i32_25 : i32 to vector<4x64xi32>
    %76 = arith.cmpi slt, %20, %75 : vector<4x64xi32>
    %77 = vector.extract_strided_slice %1 {offsets = [0, 6], sizes = [4, 1], strides = [1, 1]} : vector<4x8xf32> to vector<4x1xf32>
    %78 = vector.shape_cast %77 : vector<4x1xf32> to vector<4x1xf32>
    %79 = vector.broadcast %78 : vector<4x1xf32> to vector<4x64xf32>
    %80 = vector.extract_strided_slice %3 {offsets = [0, 6], sizes = [4, 1], strides = [1, 1]} : vector<4x8xf32> to vector<4x1xf32>
    %81 = vector.shape_cast %80 : vector<4x1xf32> to vector<4x1xf32>
    %82 = vector.broadcast %81 : vector<4x1xf32> to vector<4x64xf32>
    %83 = arith.select %76, %79, %82 : vector<4x64xi1>, vector<4x64xf32>
    %c32_i32_26 = arith.constant 32 : i32
    %84 = vector.broadcast %c32_i32_26 : i32 to vector<4x64xi32>
    %85 = arith.cmpi slt, %20, %84 : vector<4x64xi32>
    %86 = vector.extract_strided_slice %1 {offsets = [0, 7], sizes = [4, 1], strides = [1, 1]} : vector<4x8xf32> to vector<4x1xf32>
    %87 = vector.shape_cast %86 : vector<4x1xf32> to vector<4x1xf32>
    %88 = vector.broadcast %87 : vector<4x1xf32> to vector<4x64xf32>
    %89 = vector.extract_strided_slice %3 {offsets = [0, 7], sizes = [4, 1], strides = [1, 1]} : vector<4x8xf32> to vector<4x1xf32>
    %90 = vector.shape_cast %89 : vector<4x1xf32> to vector<4x1xf32>
    %91 = vector.broadcast %90 : vector<4x1xf32> to vector<4x64xf32>
    %92 = arith.select %85, %88, %91 : vector<4x64xi1>, vector<4x64xf32>
    %cst_27 = arith.constant 0.000000e+00 : f32
    %93 = vector.broadcast %cst_27 : f32 to vector<4x64xf32>
    %94 = arith.truncf %93 : vector<4x64xf32> to vector<4x64xbf16>
    %cst_28 = arith.constant dense<0.000000e+00> : vector<4x384xf32>
    %95 = tpu.matmul %94, %5, %cst_28 {dimension_numbers = #tpu.dot_dimension_numbers<[1], [0], [0], [1], [0, 0, 1, 1], [], []>} : vector<4x64xbf16>, vector<64x384xbf16>, vector<4x384xf32> -> vector<4x384xf32>
    %96 = vector.extract_strided_slice %19 {offsets = [0, 0, 0], sizes = [1, 4, 384], strides = [1, 1, 1]} : vector<8x4x384xf32> to vector<1x4x384xf32>
    %97 = vector.shape_cast %96 : vector<1x4x384xf32> to vector<4x384xf32>
    %98 = vector.extract_strided_slice %97 {offsets = [0, 0], sizes = [4, 256], strides = [1, 1]} : vector<4x384xf32> to vector<4x256xf32>
    %99 = vector.extract_strided_slice %95 {offsets = [0, 0], sizes = [4, 256], strides = [1, 1]} : vector<4x384xf32> to vector<4x256xf32>
    %100 = arith.addf %98, %99 : vector<4x256xf32>
    %101 = arith.negf %100 : vector<4x256xf32>
    %102 = math.exp %101 : vector<4x256xf32>
    %cst_29 = arith.constant 1.000000e+00 : f32
    %103 = vector.broadcast %cst_29 : f32 to vector<4x256xf32>
    %104 = arith.addf %103, %102 : vector<4x256xf32>
    %105 = arith.divf %103, %104 : vector<4x256xf32>
    %106 = vector.extract_strided_slice %105 {offsets = [0, 0], sizes = [4, 64], strides = [1, 1]} : vector<4x256xf32> to vector<4x64xf32>
    %107 = vector.extract_strided_slice %105 {offsets = [0, 128], sizes = [4, 64], strides = [1, 1]} : vector<4x256xf32> to vector<4x64xf32>
    %108 = vector.extract_strided_slice %97 {offsets = [0, 256], sizes = [4, 64], strides = [1, 1]} : vector<4x384xf32> to vector<4x64xf32>
    %109 = vector.extract_strided_slice %95 {offsets = [0, 256], sizes = [4, 64], strides = [1, 1]} : vector<4x384xf32> to vector<4x64xf32>
    %110 = vector.broadcast %11 : vector<1x64xf32> to vector<4x64xf32>
    %111 = arith.addf %109, %110 : vector<4x64xf32>
    %112 = arith.mulf %106, %111 : vector<4x64xf32>
    %113 = arith.addf %108, %112 : vector<4x64xf32>
    %114 = math.tanh %113 : vector<4x64xf32>
    %cst_30 = arith.constant 1.000000e+00 : f32
    %115 = vector.broadcast %cst_30 : f32 to vector<4x64xf32>
    %116 = arith.subf %115, %107 : vector<4x64xf32>
    %117 = arith.mulf %116, %114 : vector<4x64xf32>
    %118 = arith.mulf %107, %93 : vector<4x64xf32>
    %119 = arith.addf %117, %118 : vector<4x64xf32>
    %120 = arith.mulf %119, %29 : vector<4x64xf32>
    %cst_31 = arith.constant 1.000000e+00 : f32
    %121 = vector.broadcast %cst_31 : f32 to vector<4x64xf32>
    %122 = arith.subf %121, %29 : vector<4x64xf32>
    %123 = arith.mulf %93, %122 : vector<4x64xf32>
    %124 = arith.addf %120, %123 : vector<4x64xf32>
    %125 = vector.shape_cast %124 : vector<4x64xf32> to vector<4x1x64xf32>
    %c0_32 = arith.constant 0 : index
    %c0_33 = arith.constant 0 : index
    %c0_34 = arith.constant 0 : index
    %126 = vector.load %arg6[%c0_32, %c0_33, %c0_34] : memref<4x8x64xf32, #tpu.memory_space<vmem>>, vector<4x1x64xf32>
    tpu.vector_store %arg6[%c0_32, %c0_33, %c0_34], %125 {strides = array<i32>} : memref<4x8x64xf32, #tpu.memory_space<vmem>>, vector<4x1x64xf32>,
    %127 = arith.truncf %124 : vector<4x64xf32> to vector<4x64xbf16>
    %cst_35 = arith.constant dense<0.000000e+00> : vector<4x384xf32>
    %128 = tpu.matmul %127, %5, %cst_35 {dimension_numbers = #tpu.dot_dimension_numbers<[1], [0], [0], [1], [0, 0, 1, 1], [], []>} : vector<4x64xbf16>, vector<64x384xbf16>, vector<4x384xf32> -> vector<4x384xf32>
    %129 = vector.extract_strided_slice %19 {offsets = [1, 0, 0], sizes = [1, 4, 384], strides = [1, 1, 1]} : vector<8x4x384xf32> to vector<1x4x384xf32>
    %130 = vector.shape_cast %129 : vector<1x4x384xf32> to vector<4x384xf32>
    %131 = vector.extract_strided_slice %130 {offsets = [0, 0], sizes = [4, 256], strides = [1, 1]} : vector<4x384xf32> to vector<4x256xf32>
    %132 = vector.extract_strided_slice %128 {offsets = [0, 0], sizes = [4, 256], strides = [1, 1]} : vector<4x384xf32> to vector<4x256xf32>
    %133 = arith.addf %131, %132 : vector<4x256xf32>
    %134 = arith.negf %133 : vector<4x256xf32>
    %135 = math.exp %134 : vector<4x256xf32>
    %cst_36 = arith.constant 1.000000e+00 : f32
    %136 = vector.broadcast %cst_36 : f32 to vector<4x256xf32>
    %137 = arith.addf %136, %135 : vector<4x256xf32>
    %138 = arith.divf %136, %137 : vector<4x256xf32>
    %139 = vector.extract_strided_slice %138 {offsets = [0, 0], sizes = [4, 64], strides = [1, 1]} : vector<4x256xf32> to vector<4x64xf32>
    %140 = vector.extract_strided_slice %138 {offsets = [0, 128], sizes = [4, 64], strides = [1, 1]} : vector<4x256xf32> to vector<4x64xf32>
    %141 = vector.extract_strided_slice %130 {offsets = [0, 256], sizes = [4, 64], strides = [1, 1]} : vector<4x384xf32> to vector<4x64xf32>
    %142 = vector.extract_strided_slice %128 {offsets = [0, 256], sizes = [4, 64], strides = [1, 1]} : vector<4x384xf32> to vector<4x64xf32>
    %143 = vector.broadcast %11 : vector<1x64xf32> to vector<4x64xf32>
    %144 = arith.addf %142, %143 : vector<4x64xf32>
    %145 = arith.mulf %139, %144 : vector<4x64xf32>
    %146 = arith.addf %141, %145 : vector<4x64xf32>
    %147 = math.tanh %146 : vector<4x64xf32>
    %cst_37 = arith.constant 1.000000e+00 : f32
    %148 = vector.broadcast %cst_37 : f32 to vector<4x64xf32>
    %149 = arith.subf %148, %140 : vector<4x64xf32>
    %150 = arith.mulf %149, %147 : vector<4x64xf32>
    %151 = arith.mulf %140, %124 : vector<4x64xf32>
    %152 = arith.addf %150, %151 : vector<4x64xf32>
    %153 = arith.mulf %152, %38 : vector<4x64xf32>
    %cst_38 = arith.constant 1.000000e+00 : f32
    %154 = vector.broadcast %cst_38 : f32 to vector<4x64xf32>
    %155 = arith.subf %154, %38 : vector<4x64xf32>
    %156 = arith.mulf %124, %155 : vector<4x64xf32>
    %157 = arith.addf %153, %156 : vector<4x64xf32>
    %158 = vector.shape_cast %157 : vector<4x64xf32> to vector<4x1x64xf32>
    %c0_39 = arith.constant 0 : index
    %c1_40 = arith.constant 1 : index
    %c0_41 = arith.constant 0 : index
    %159 = vector.load %arg6[%c0_39, %c1_40, %c0_41] : memref<4x8x64xf32, #tpu.memory_space<vmem>>, vector<4x1x64xf32>
    tpu.vector_store %arg6[%c0_39, %c1_40, %c0_41], %158 {strides = array<i32>} : memref<4x8x64xf32, #tpu.memory_space<vmem>>, vector<4x1x64xf32>,
    %160 = arith.truncf %157 : vector<4x64xf32> to vector<4x64xbf16>
    %cst_42 = arith.constant dense<0.000000e+00> : vector<4x384xf32>
    %161 = tpu.matmul %160, %5, %cst_42 {dimension_numbers = #tpu.dot_dimension_numbers<[1], [0], [0], [1], [0, 0, 1, 1], [], []>} : vector<4x64xbf16>, vector<64x384xbf16>, vector<4x384xf32> -> vector<4x384xf32>
    %162 = vector.extract_strided_slice %19 {offsets = [2, 0, 0], sizes = [1, 4, 384], strides = [1, 1, 1]} : vector<8x4x384xf32> to vector<1x4x384xf32>
    %163 = vector.shape_cast %162 : vector<1x4x384xf32> to vector<4x384xf32>
    %164 = vector.extract_strided_slice %163 {offsets = [0, 0], sizes = [4, 256], strides = [1, 1]} : vector<4x384xf32> to vector<4x256xf32>
    %165 = vector.extract_strided_slice %161 {offsets = [0, 0], sizes = [4, 256], strides = [1, 1]} : vector<4x384xf32> to vector<4x256xf32>
    %166 = arith.addf %164, %165 : vector<4x256xf32>
    %167 = arith.negf %166 : vector<4x256xf32>
    %168 = math.exp %167 : vector<4x256xf32>
    %cst_43 = arith.constant 1.000000e+00 : f32
    %169 = vector.broadcast %cst_43 : f32 to vector<4x256xf32>
    %170 = arith.addf %169, %168 : vector<4x256xf32>
    %171 = arith.divf %169, %170 : vector<4x256xf32>
    %172 = vector.extract_strided_slice %171 {offsets = [0, 0], sizes = [4, 64], strides = [1, 1]} : vector<4x256xf32> to vector<4x64xf32>
    %173 = vector.extract_strided_slice %171 {offsets = [0, 128], sizes = [4, 64], strides = [1, 1]} : vector<4x256xf32> to vector<4x64xf32>
    %174 = vector.extract_strided_slice %163 {offsets = [0, 256], sizes = [4, 64], strides = [1, 1]} : vector<4x384xf32> to vector<4x64xf32>
    %175 = vector.extract_strided_slice %161 {offsets = [0, 256], sizes = [4, 64], strides = [1, 1]} : vector<4x384xf32> to vector<4x64xf32>
    %176 = vector.broadcast %11 : vector<1x64xf32> to vector<4x64xf32>
    %177 = arith.addf %175, %176 : vector<4x64xf32>
    %178 = arith.mulf %172, %177 : vector<4x64xf32>
    %179 = arith.addf %174, %178 : vector<4x64xf32>
    %180 = math.tanh %179 : vector<4x64xf32>
    %cst_44 = arith.constant 1.000000e+00 : f32
    %181 = vector.broadcast %cst_44 : f32 to vector<4x64xf32>
    %182 = arith.subf %181, %173 : vector<4x64xf32>
    %183 = arith.mulf %182, %180 : vector<4x64xf32>
    %184 = arith.mulf %173, %157 : vector<4x64xf32>
    %185 = arith.addf %183, %184 : vector<4x64xf32>
    %186 = arith.mulf %185, %47 : vector<4x64xf32>
    %cst_45 = arith.constant 1.000000e+00 : f32
    %187 = vector.broadcast %cst_45 : f32 to vector<4x64xf32>
    %188 = arith.subf %187, %47 : vector<4x64xf32>
    %189 = arith.mulf %157, %188 : vector<4x64xf32>
    %190 = arith.addf %186, %189 : vector<4x64xf32>
    %191 = vector.shape_cast %190 : vector<4x64xf32> to vector<4x1x64xf32>
    %c0_46 = arith.constant 0 : index
    %c2_47 = arith.constant 2 : index
    %c0_48 = arith.constant 0 : index
    %192 = vector.load %arg6[%c0_46, %c2_47, %c0_48] : memref<4x8x64xf32, #tpu.memory_space<vmem>>, vector<4x1x64xf32>
    tpu.vector_store %arg6[%c0_46, %c2_47, %c0_48], %191 {strides = array<i32>} : memref<4x8x64xf32, #tpu.memory_space<vmem>>, vector<4x1x64xf32>,
    %193 = arith.truncf %190 : vector<4x64xf32> to vector<4x64xbf16>
    %cst_49 = arith.constant dense<0.000000e+00> : vector<4x384xf32>
    %194 = tpu.matmul %193, %5, %cst_49 {dimension_numbers = #tpu.dot_dimension_numbers<[1], [0], [0], [1], [0, 0, 1, 1], [], []>} : vector<4x64xbf16>, vector<64x384xbf16>, vector<4x384xf32> -> vector<4x384xf32>
    %195 = vector.extract_strided_slice %19 {offsets = [3, 0, 0], sizes = [1, 4, 384], strides = [1, 1, 1]} : vector<8x4x384xf32> to vector<1x4x384xf32>
    %196 = vector.shape_cast %195 : vector<1x4x384xf32> to vector<4x384xf32>
    %197 = vector.extract_strided_slice %196 {offsets = [0, 0], sizes = [4, 256], strides = [1, 1]} : vector<4x384xf32> to vector<4x256xf32>
    %198 = vector.extract_strided_slice %194 {offsets = [0, 0], sizes = [4, 256], strides = [1, 1]} : vector<4x384xf32> to vector<4x256xf32>
    %199 = arith.addf %197, %198 : vector<4x256xf32>
    %200 = arith.negf %199 : vector<4x256xf32>
    %201 = math.exp %200 : vector<4x256xf32>
    %cst_50 = arith.constant 1.000000e+00 : f32
    %202 = vector.broadcast %cst_50 : f32 to vector<4x256xf32>
    %203 = arith.addf %202, %201 : vector<4x256xf32>
    %204 = arith.divf %202, %203 : vector<4x256xf32>
    %205 = vector.extract_strided_slice %204 {offsets = [0, 0], sizes = [4, 64], strides = [1, 1]} : vector<4x256xf32> to vector<4x64xf32>
    %206 = vector.extract_strided_slice %204 {offsets = [0, 128], sizes = [4, 64], strides = [1, 1]} : vector<4x256xf32> to vector<4x64xf32>
    %207 = vector.extract_strided_slice %196 {offsets = [0, 256], sizes = [4, 64], strides = [1, 1]} : vector<4x384xf32> to vector<4x64xf32>
    %208 = vector.extract_strided_slice %194 {offsets = [0, 256], sizes = [4, 64], strides = [1, 1]} : vector<4x384xf32> to vector<4x64xf32>
    %209 = vector.broadcast %11 : vector<1x64xf32> to vector<4x64xf32>
    %210 = arith.addf %208, %209 : vector<4x64xf32>
    %211 = arith.mulf %205, %210 : vector<4x64xf32>
    %212 = arith.addf %207, %211 : vector<4x64xf32>
    %213 = math.tanh %212 : vector<4x64xf32>
    %cst_51 = arith.constant 1.000000e+00 : f32
    %214 = vector.broadcast %cst_51 : f32 to vector<4x64xf32>
    %215 = arith.subf %214, %206 : vector<4x64xf32>
    %216 = arith.mulf %215, %213 : vector<4x64xf32>
    %217 = arith.mulf %206, %190 : vector<4x64xf32>
    %218 = arith.addf %216, %217 : vector<4x64xf32>
    %219 = arith.mulf %218, %56 : vector<4x64xf32>
    %cst_52 = arith.constant 1.000000e+00 : f32
    %220 = vector.broadcast %cst_52 : f32 to vector<4x64xf32>
    %221 = arith.subf %220, %56 : vector<4x64xf32>
    %222 = arith.mulf %190, %221 : vector<4x64xf32>
    %223 = arith.addf %219, %222 : vector<4x64xf32>
    %224 = vector.shape_cast %223 : vector<4x64xf32> to vector<4x1x64xf32>
    %c0_53 = arith.constant 0 : index
    %c3_54 = arith.constant 3 : index
    %c0_55 = arith.constant 0 : index
    %225 = vector.load %arg6[%c0_53, %c3_54, %c0_55] : memref<4x8x64xf32, #tpu.memory_space<vmem>>, vector<4x1x64xf32>
    tpu.vector_store %arg6[%c0_53, %c3_54, %c0_55], %224 {strides = array<i32>} : memref<4x8x64xf32, #tpu.memory_space<vmem>>, vector<4x1x64xf32>,
    %226 = arith.truncf %223 : vector<4x64xf32> to vector<4x64xbf16>
    %cst_56 = arith.constant dense<0.000000e+00> : vector<4x384xf32>
    %227 = tpu.matmul %226, %5, %cst_56 {dimension_numbers = #tpu.dot_dimension_numbers<[1], [0], [0], [1], [0, 0, 1, 1], [], []>} : vector<4x64xbf16>, vector<64x384xbf16>, vector<4x384xf32> -> vector<4x384xf32>
    %228 = vector.extract_strided_slice %19 {offsets = [4, 0, 0], sizes = [1, 4, 384], strides = [1, 1, 1]} : vector<8x4x384xf32> to vector<1x4x384xf32>
    %229 = vector.shape_cast %228 : vector<1x4x384xf32> to vector<4x384xf32>
    %230 = vector.extract_strided_slice %229 {offsets = [0, 0], sizes = [4, 256], strides = [1, 1]} : vector<4x384xf32> to vector<4x256xf32>
    %231 = vector.extract_strided_slice %227 {offsets = [0, 0], sizes = [4, 256], strides = [1, 1]} : vector<4x384xf32> to vector<4x256xf32>
    %232 = arith.addf %230, %231 : vector<4x256xf32>
    %233 = arith.negf %232 : vector<4x256xf32>
    %234 = math.exp %233 : vector<4x256xf32>
    %cst_57 = arith.constant 1.000000e+00 : f32
    %235 = vector.broadcast %cst_57 : f32 to vector<4x256xf32>
    %236 = arith.addf %235, %234 : vector<4x256xf32>
    %237 = arith.divf %235, %236 : vector<4x256xf32>
    %238 = vector.extract_strided_slice %237 {offsets = [0, 0], sizes = [4, 64], strides = [1, 1]} : vector<4x256xf32> to vector<4x64xf32>
    %239 = vector.extract_strided_slice %237 {offsets = [0, 128], sizes = [4, 64], strides = [1, 1]} : vector<4x256xf32> to vector<4x64xf32>
    %240 = vector.extract_strided_slice %229 {offsets = [0, 256], sizes = [4, 64], strides = [1, 1]} : vector<4x384xf32> to vector<4x64xf32>
    %241 = vector.extract_strided_slice %227 {offsets = [0, 256], sizes = [4, 64], strides = [1, 1]} : vector<4x384xf32> to vector<4x64xf32>
    %242 = vector.broadcast %11 : vector<1x64xf32> to vector<4x64xf32>
    %243 = arith.addf %241, %242 : vector<4x64xf32>
    %244 = arith.mulf %238, %243 : vector<4x64xf32>
    %245 = arith.addf %240, %244 : vector<4x64xf32>
    %246 = math.tanh %245 : vector<4x64xf32>
    %cst_58 = arith.constant 1.000000e+00 : f32
    %247 = vector.broadcast %cst_58 : f32 to vector<4x64xf32>
    %248 = arith.subf %247, %239 : vector<4x64xf32>
    %249 = arith.mulf %248, %246 : vector<4x64xf32>
    %250 = arith.mulf %239, %223 : vector<4x64xf32>
    %251 = arith.addf %249, %250 : vector<4x64xf32>
    %252 = arith.mulf %251, %65 : vector<4x64xf32>
    %cst_59 = arith.constant 1.000000e+00 : f32
    %253 = vector.broadcast %cst_59 : f32 to vector<4x64xf32>
    %254 = arith.subf %253, %65 : vector<4x64xf32>
    %255 = arith.mulf %223, %254 : vector<4x64xf32>
    %256 = arith.addf %252, %255 : vector<4x64xf32>
    %257 = vector.shape_cast %256 : vector<4x64xf32> to vector<4x1x64xf32>
    %c0_60 = arith.constant 0 : index
    %c4_61 = arith.constant 4 : index
    %c0_62 = arith.constant 0 : index
    %258 = vector.load %arg6[%c0_60, %c4_61, %c0_62] : memref<4x8x64xf32, #tpu.memory_space<vmem>>, vector<4x1x64xf32>
    tpu.vector_store %arg6[%c0_60, %c4_61, %c0_62], %257 {strides = array<i32>} : memref<4x8x64xf32, #tpu.memory_space<vmem>>, vector<4x1x64xf32>,
    %259 = arith.truncf %256 : vector<4x64xf32> to vector<4x64xbf16>
    %cst_63 = arith.constant dense<0.000000e+00> : vector<4x384xf32>
    %260 = tpu.matmul %259, %5, %cst_63 {dimension_numbers = #tpu.dot_dimension_numbers<[1], [0], [0], [1], [0, 0, 1, 1], [], []>} : vector<4x64xbf16>, vector<64x384xbf16>, vector<4x384xf32> -> vector<4x384xf32>
    %261 = vector.extract_strided_slice %19 {offsets = [5, 0, 0], sizes = [1, 4, 384], strides = [1, 1, 1]} : vector<8x4x384xf32> to vector<1x4x384xf32>
    %262 = vector.shape_cast %261 : vector<1x4x384xf32> to vector<4x384xf32>
    %263 = vector.extract_strided_slice %262 {offsets = [0, 0], sizes = [4, 256], strides = [1, 1]} : vector<4x384xf32> to vector<4x256xf32>
    %264 = vector.extract_strided_slice %260 {offsets = [0, 0], sizes = [4, 256], strides = [1, 1]} : vector<4x384xf32> to vector<4x256xf32>
    %265 = arith.addf %263, %264 : vector<4x256xf32>
    %266 = arith.negf %265 : vector<4x256xf32>
    %267 = math.exp %266 : vector<4x256xf32>
    %cst_64 = arith.constant 1.000000e+00 : f32
    %268 = vector.broadcast %cst_64 : f32 to vector<4x256xf32>
    %269 = arith.addf %268, %267 : vector<4x256xf32>
    %270 = arith.divf %268, %269 : vector<4x256xf32>
    %271 = vector.extract_strided_slice %270 {offsets = [0, 0], sizes = [4, 64], strides = [1, 1]} : vector<4x256xf32> to vector<4x64xf32>
    %272 = vector.extract_strided_slice %270 {offsets = [0, 128], sizes = [4, 64], strides = [1, 1]} : vector<4x256xf32> to vector<4x64xf32>
    %273 = vector.extract_strided_slice %262 {offsets = [0, 256], sizes = [4, 64], strides = [1, 1]} : vector<4x384xf32> to vector<4x64xf32>
    %274 = vector.extract_strided_slice %260 {offsets = [0, 256], sizes = [4, 64], strides = [1, 1]} : vector<4x384xf32> to vector<4x64xf32>
    %275 = vector.broadcast %11 : vector<1x64xf32> to vector<4x64xf32>
    %276 = arith.addf %274, %275 : vector<4x64xf32>
    %277 = arith.mulf %271, %276 : vector<4x64xf32>
    %278 = arith.addf %273, %277 : vector<4x64xf32>
    %279 = math.tanh %278 : vector<4x64xf32>
    %cst_65 = arith.constant 1.000000e+00 : f32
    %280 = vector.broadcast %cst_65 : f32 to vector<4x64xf32>
    %281 = arith.subf %280, %272 : vector<4x64xf32>
    %282 = arith.mulf %281, %279 : vector<4x64xf32>
    %283 = arith.mulf %272, %256 : vector<4x64xf32>
    %284 = arith.addf %282, %283 : vector<4x64xf32>
    %285 = arith.mulf %284, %74 : vector<4x64xf32>
    %cst_66 = arith.constant 1.000000e+00 : f32
    %286 = vector.broadcast %cst_66 : f32 to vector<4x64xf32>
    %287 = arith.subf %286, %74 : vector<4x64xf32>
    %288 = arith.mulf %256, %287 : vector<4x64xf32>
    %289 = arith.addf %285, %288 : vector<4x64xf32>
    %290 = vector.shape_cast %289 : vector<4x64xf32> to vector<4x1x64xf32>
    %c0_67 = arith.constant 0 : index
    %c5 = arith.constant 5 : index
    %c0_68 = arith.constant 0 : index
    %291 = vector.load %arg6[%c0_67, %c5, %c0_68] : memref<4x8x64xf32, #tpu.memory_space<vmem>>, vector<4x1x64xf32>
    tpu.vector_store %arg6[%c0_67, %c5, %c0_68], %290 {strides = array<i32>} : memref<4x8x64xf32, #tpu.memory_space<vmem>>, vector<4x1x64xf32>,
    %292 = arith.truncf %289 : vector<4x64xf32> to vector<4x64xbf16>
    %cst_69 = arith.constant dense<0.000000e+00> : vector<4x384xf32>
    %293 = tpu.matmul %292, %5, %cst_69 {dimension_numbers = #tpu.dot_dimension_numbers<[1], [0], [0], [1], [0, 0, 1, 1], [], []>} : vector<4x64xbf16>, vector<64x384xbf16>, vector<4x384xf32> -> vector<4x384xf32>
    %294 = vector.extract_strided_slice %19 {offsets = [6, 0, 0], sizes = [1, 4, 384], strides = [1, 1, 1]} : vector<8x4x384xf32> to vector<1x4x384xf32>
    %295 = vector.shape_cast %294 : vector<1x4x384xf32> to vector<4x384xf32>
    %296 = vector.extract_strided_slice %295 {offsets = [0, 0], sizes = [4, 256], strides = [1, 1]} : vector<4x384xf32> to vector<4x256xf32>
    %297 = vector.extract_strided_slice %293 {offsets = [0, 0], sizes = [4, 256], strides = [1, 1]} : vector<4x384xf32> to vector<4x256xf32>
    %298 = arith.addf %296, %297 : vector<4x256xf32>
    %299 = arith.negf %298 : vector<4x256xf32>
    %300 = math.exp %299 : vector<4x256xf32>
    %cst_70 = arith.constant 1.000000e+00 : f32
    %301 = vector.broadcast %cst_70 : f32 to vector<4x256xf32>
    %302 = arith.addf %301, %300 : vector<4x256xf32>
    %303 = arith.divf %301, %302 : vector<4x256xf32>
    %304 = vector.extract_strided_slice %303 {offsets = [0, 0], sizes = [4, 64], strides = [1, 1]} : vector<4x256xf32> to vector<4x64xf32>
    %305 = vector.extract_strided_slice %303 {offsets = [0, 128], sizes = [4, 64], strides = [1, 1]} : vector<4x256xf32> to vector<4x64xf32>
    %306 = vector.extract_strided_slice %295 {offsets = [0, 256], sizes = [4, 64], strides = [1, 1]} : vector<4x384xf32> to vector<4x64xf32>
    %307 = vector.extract_strided_slice %293 {offsets = [0, 256], sizes = [4, 64], strides = [1, 1]} : vector<4x384xf32> to vector<4x64xf32>
    %308 = vector.broadcast %11 : vector<1x64xf32> to vector<4x64xf32>
    %309 = arith.addf %307, %308 : vector<4x64xf32>
    %310 = arith.mulf %304, %309 : vector<4x64xf32>
    %311 = arith.addf %306, %310 : vector<4x64xf32>
    %312 = math.tanh %311 : vector<4x64xf32>
    %cst_71 = arith.constant 1.000000e+00 : f32
    %313 = vector.broadcast %cst_71 : f32 to vector<4x64xf32>
    %314 = arith.subf %313, %305 : vector<4x64xf32>
    %315 = arith.mulf %314, %312 : vector<4x64xf32>
    %316 = arith.mulf %305, %289 : vector<4x64xf32>
    %317 = arith.addf %315, %316 : vector<4x64xf32>
    %318 = arith.mulf %317, %83 : vector<4x64xf32>
    %cst_72 = arith.constant 1.000000e+00 : f32
    %319 = vector.broadcast %cst_72 : f32 to vector<4x64xf32>
    %320 = arith.subf %319, %83 : vector<4x64xf32>
    %321 = arith.mulf %289, %320 : vector<4x64xf32>
    %322 = arith.addf %318, %321 : vector<4x64xf32>
    %323 = vector.shape_cast %322 : vector<4x64xf32> to vector<4x1x64xf32>
    %c0_73 = arith.constant 0 : index
    %c6 = arith.constant 6 : index
    %c0_74 = arith.constant 0 : index
    %324 = vector.load %arg6[%c0_73, %c6, %c0_74] : memref<4x8x64xf32, #tpu.memory_space<vmem>>, vector<4x1x64xf32>
    tpu.vector_store %arg6[%c0_73, %c6, %c0_74], %323 {strides = array<i32>} : memref<4x8x64xf32, #tpu.memory_space<vmem>>, vector<4x1x64xf32>,
    %325 = arith.truncf %322 : vector<4x64xf32> to vector<4x64xbf16>
    %cst_75 = arith.constant dense<0.000000e+00> : vector<4x384xf32>
    %326 = tpu.matmul %325, %5, %cst_75 {dimension_numbers = #tpu.dot_dimension_numbers<[1], [0], [0], [1], [0, 0, 1, 1], [], []>} : vector<4x64xbf16>, vector<64x384xbf16>, vector<4x384xf32> -> vector<4x384xf32>
    %327 = vector.extract_strided_slice %19 {offsets = [7, 0, 0], sizes = [1, 4, 384], strides = [1, 1, 1]} : vector<8x4x384xf32> to vector<1x4x384xf32>
    %328 = vector.shape_cast %327 : vector<1x4x384xf32> to vector<4x384xf32>
    %329 = vector.extract_strided_slice %328 {offsets = [0, 0], sizes = [4, 256], strides = [1, 1]} : vector<4x384xf32> to vector<4x256xf32>
    %330 = vector.extract_strided_slice %326 {offsets = [0, 0], sizes = [4, 256], strides = [1, 1]} : vector<4x384xf32> to vector<4x256xf32>
    %331 = arith.addf %329, %330 : vector<4x256xf32>
    %332 = arith.negf %331 : vector<4x256xf32>
    %333 = math.exp %332 : vector<4x256xf32>
    %cst_76 = arith.constant 1.000000e+00 : f32
    %334 = vector.broadcast %cst_76 : f32 to vector<4x256xf32>
    %335 = arith.addf %334, %333 : vector<4x256xf32>
    %336 = arith.divf %334, %335 : vector<4x256xf32>
    %337 = vector.extract_strided_slice %336 {offsets = [0, 0], sizes = [4, 64], strides = [1, 1]} : vector<4x256xf32> to vector<4x64xf32>
    %338 = vector.extract_strided_slice %336 {offsets = [0, 128], sizes = [4, 64], strides = [1, 1]} : vector<4x256xf32> to vector<4x64xf32>
    %339 = vector.extract_strided_slice %328 {offsets = [0, 256], sizes = [4, 64], strides = [1, 1]} : vector<4x384xf32> to vector<4x64xf32>
    %340 = vector.extract_strided_slice %326 {offsets = [0, 256], sizes = [4, 64], strides = [1, 1]} : vector<4x384xf32> to vector<4x64xf32>
    %341 = vector.broadcast %11 : vector<1x64xf32> to vector<4x64xf32>
    %342 = arith.addf %340, %341 : vector<4x64xf32>
    %343 = arith.mulf %337, %342 : vector<4x64xf32>
    %344 = arith.addf %339, %343 : vector<4x64xf32>
    %345 = math.tanh %344 : vector<4x64xf32>
    %cst_77 = arith.constant 1.000000e+00 : f32
    %346 = vector.broadcast %cst_77 : f32 to vector<4x64xf32>
    %347 = arith.subf %346, %338 : vector<4x64xf32>
    %348 = arith.mulf %347, %345 : vector<4x64xf32>
    %349 = arith.mulf %338, %322 : vector<4x64xf32>
    %350 = arith.addf %348, %349 : vector<4x64xf32>
    %351 = arith.mulf %350, %92 : vector<4x64xf32>
    %cst_78 = arith.constant 1.000000e+00 : f32
    %352 = vector.broadcast %cst_78 : f32 to vector<4x64xf32>
    %353 = arith.subf %352, %92 : vector<4x64xf32>
    %354 = arith.mulf %322, %353 : vector<4x64xf32>
    %355 = arith.addf %351, %354 : vector<4x64xf32>
    %356 = vector.shape_cast %355 : vector<4x64xf32> to vector<4x1x64xf32>
    %c0_79 = arith.constant 0 : index
    %c7 = arith.constant 7 : index
    %c0_80 = arith.constant 0 : index
    %357 = vector.load %arg6[%c0_79, %c7, %c0_80] : memref<4x8x64xf32, #tpu.memory_space<vmem>>, vector<4x1x64xf32>
    tpu.vector_store %arg6[%c0_79, %c7, %c0_80], %356 {strides = array<i32>} : memref<4x8x64xf32, #tpu.memory_space<vmem>>, vector<4x1x64xf32>,
    %c0_81 = arith.constant 0 : index
    %c0_82 = arith.constant 0 : index
    %c0_83 = arith.constant 0 : index
    %358 = vector.load %arg6[%c0_81, %c0_82, %c0_83] : memref<4x8x64xf32, #tpu.memory_space<vmem>>, vector<4x8x64xf32>
    %359 = math.tanh %358 : vector<4x8x64xf32>
    %360 = vector.shape_cast %359 : vector<4x8x64xf32> to vector<32x64xf32>
    %361 = arith.truncf %360 : vector<32x64xf32> to vector<32x64xbf16>
    %cst_84 = arith.constant dense<0.000000e+00> : vector<32x384xf32>
    %362 = tpu.matmul %361, %6, %cst_84 {dimension_numbers = #tpu.dot_dimension_numbers<[1], [0], [0], [1], [0, 0, 1, 1], [], []>} : vector<32x64xbf16>, vector<64x384xbf16>, vector<32x384xf32> -> vector<32x384xf32>
    %363 = vector.broadcast %12 : vector<1x384xf32> to vector<32x384xf32>
    %364 = arith.addf %362, %363 : vector<32x384xf32>
    %365 = vector.shape_cast %364 : vector<32x384xf32> to vector<4x8x384xf32>
    %cst_85 = arith.constant 0.000000e+00 : f32
    %366 = vector.broadcast %cst_85 : f32 to vector<8x64xf32>
    %367 = arith.truncf %366 : vector<8x64xf32> to vector<8x64xbf16>
    %cst_86 = arith.constant dense<0.000000e+00> : vector<8x384xf32>
    %368 = tpu.matmul %367, %7, %cst_86 {dimension_numbers = #tpu.dot_dimension_numbers<[1], [0], [0], [1], [0, 0, 1, 1], [], []>} : vector<8x64xbf16>, vector<64x384xbf16>, vector<8x384xf32> -> vector<8x384xf32>
    %369 = vector.extract_strided_slice %365 {offsets = [0, 0, 0], sizes = [1, 8, 384], strides = [1, 1, 1]} : vector<4x8x384xf32> to vector<1x8x384xf32>
    %370 = vector.shape_cast %369 : vector<1x8x384xf32> to vector<8x384xf32>
    %371 = vector.extract_strided_slice %370 {offsets = [0, 0], sizes = [8, 256], strides = [1, 1]} : vector<8x384xf32> to vector<8x256xf32>
    %372 = vector.extract_strided_slice %368 {offsets = [0, 0], sizes = [8, 256], strides = [1, 1]} : vector<8x384xf32> to vector<8x256xf32>
    %373 = arith.addf %371, %372 : vector<8x256xf32>
    %374 = arith.negf %373 : vector<8x256xf32>
    %375 = math.exp %374 : vector<8x256xf32>
    %cst_87 = arith.constant 1.000000e+00 : f32
    %376 = vector.broadcast %cst_87 : f32 to vector<8x256xf32>
    %377 = arith.addf %376, %375 : vector<8x256xf32>
    %378 = arith.divf %376, %377 : vector<8x256xf32>
    %379 = vector.extract_strided_slice %378 {offsets = [0, 0], sizes = [8, 64], strides = [1, 1]} : vector<8x256xf32> to vector<8x64xf32>
    %380 = vector.extract_strided_slice %378 {offsets = [0, 128], sizes = [8, 64], strides = [1, 1]} : vector<8x256xf32> to vector<8x64xf32>
    %381 = vector.extract_strided_slice %370 {offsets = [0, 256], sizes = [8, 64], strides = [1, 1]} : vector<8x384xf32> to vector<8x64xf32>
    %382 = vector.extract_strided_slice %368 {offsets = [0, 256], sizes = [8, 64], strides = [1, 1]} : vector<8x384xf32> to vector<8x64xf32>
    %383 = vector.broadcast %13 : vector<1x64xf32> to vector<8x64xf32>
    %384 = arith.addf %382, %383 : vector<8x64xf32>
    %385 = arith.mulf %379, %384 : vector<8x64xf32>
    %386 = arith.addf %381, %385 : vector<8x64xf32>
    %387 = math.tanh %386 : vector<8x64xf32>
    %cst_88 = arith.constant 1.000000e+00 : f32
    %388 = vector.broadcast %cst_88 : f32 to vector<8x64xf32>
    %389 = arith.subf %388, %380 : vector<8x64xf32>
    %390 = arith.mulf %389, %387 : vector<8x64xf32>
    %391 = arith.mulf %380, %366 : vector<8x64xf32>
    %392 = arith.addf %390, %391 : vector<8x64xf32>
    %393 = arith.truncf %392 : vector<8x64xf32> to vector<8x64xbf16>
    %cst_89 = arith.constant dense<0.000000e+00> : vector<8x384xf32>
    %394 = tpu.matmul %393, %7, %cst_89 {dimension_numbers = #tpu.dot_dimension_numbers<[1], [0], [0], [1], [0, 0, 1, 1], [], []>} : vector<8x64xbf16>, vector<64x384xbf16>, vector<8x384xf32> -> vector<8x384xf32>
    %395 = vector.extract_strided_slice %365 {offsets = [1, 0, 0], sizes = [1, 8, 384], strides = [1, 1, 1]} : vector<4x8x384xf32> to vector<1x8x384xf32>
    %396 = vector.shape_cast %395 : vector<1x8x384xf32> to vector<8x384xf32>
    %397 = vector.extract_strided_slice %396 {offsets = [0, 0], sizes = [8, 256], strides = [1, 1]} : vector<8x384xf32> to vector<8x256xf32>
    %398 = vector.extract_strided_slice %394 {offsets = [0, 0], sizes = [8, 256], strides = [1, 1]} : vector<8x384xf32> to vector<8x256xf32>
    %399 = arith.addf %397, %398 : vector<8x256xf32>
    %400 = arith.negf %399 : vector<8x256xf32>
    %401 = math.exp %400 : vector<8x256xf32>
    %cst_90 = arith.constant 1.000000e+00 : f32
    %402 = vector.broadcast %cst_90 : f32 to vector<8x256xf32>
    %403 = arith.addf %402, %401 : vector<8x256xf32>
    %404 = arith.divf %402, %403 : vector<8x256xf32>
    %405 = vector.extract_strided_slice %404 {offsets = [0, 0], sizes = [8, 64], strides = [1, 1]} : vector<8x256xf32> to vector<8x64xf32>
    %406 = vector.extract_strided_slice %404 {offsets = [0, 128], sizes = [8, 64], strides = [1, 1]} : vector<8x256xf32> to vector<8x64xf32>
    %407 = vector.extract_strided_slice %396 {offsets = [0, 256], sizes = [8, 64], strides = [1, 1]} : vector<8x384xf32> to vector<8x64xf32>
    %408 = vector.extract_strided_slice %394 {offsets = [0, 256], sizes = [8, 64], strides = [1, 1]} : vector<8x384xf32> to vector<8x64xf32>
    %409 = vector.broadcast %13 : vector<1x64xf32> to vector<8x64xf32>
    %410 = arith.addf %408, %409 : vector<8x64xf32>
    %411 = arith.mulf %405, %410 : vector<8x64xf32>
    %412 = arith.addf %407, %411 : vector<8x64xf32>
    %413 = math.tanh %412 : vector<8x64xf32>
    %cst_91 = arith.constant 1.000000e+00 : f32
    %414 = vector.broadcast %cst_91 : f32 to vector<8x64xf32>
    %415 = arith.subf %414, %406 : vector<8x64xf32>
    %416 = arith.mulf %415, %413 : vector<8x64xf32>
    %417 = arith.mulf %406, %392 : vector<8x64xf32>
    %418 = arith.addf %416, %417 : vector<8x64xf32>
    %419 = arith.truncf %418 : vector<8x64xf32> to vector<8x64xbf16>
    %cst_92 = arith.constant dense<0.000000e+00> : vector<8x384xf32>
    %420 = tpu.matmul %419, %7, %cst_92 {dimension_numbers = #tpu.dot_dimension_numbers<[1], [0], [0], [1], [0, 0, 1, 1], [], []>} : vector<8x64xbf16>, vector<64x384xbf16>, vector<8x384xf32> -> vector<8x384xf32>
    %421 = vector.extract_strided_slice %365 {offsets = [2, 0, 0], sizes = [1, 8, 384], strides = [1, 1, 1]} : vector<4x8x384xf32> to vector<1x8x384xf32>
    %422 = vector.shape_cast %421 : vector<1x8x384xf32> to vector<8x384xf32>
    %423 = vector.extract_strided_slice %422 {offsets = [0, 0], sizes = [8, 256], strides = [1, 1]} : vector<8x384xf32> to vector<8x256xf32>
    %424 = vector.extract_strided_slice %420 {offsets = [0, 0], sizes = [8, 256], strides = [1, 1]} : vector<8x384xf32> to vector<8x256xf32>
    %425 = arith.addf %423, %424 : vector<8x256xf32>
    %426 = arith.negf %425 : vector<8x256xf32>
    %427 = math.exp %426 : vector<8x256xf32>
    %cst_93 = arith.constant 1.000000e+00 : f32
    %428 = vector.broadcast %cst_93 : f32 to vector<8x256xf32>
    %429 = arith.addf %428, %427 : vector<8x256xf32>
    %430 = arith.divf %428, %429 : vector<8x256xf32>
    %431 = vector.extract_strided_slice %430 {offsets = [0, 0], sizes = [8, 64], strides = [1, 1]} : vector<8x256xf32> to vector<8x64xf32>
    %432 = vector.extract_strided_slice %430 {offsets = [0, 128], sizes = [8, 64], strides = [1, 1]} : vector<8x256xf32> to vector<8x64xf32>
    %433 = vector.extract_strided_slice %422 {offsets = [0, 256], sizes = [8, 64], strides = [1, 1]} : vector<8x384xf32> to vector<8x64xf32>
    %434 = vector.extract_strided_slice %420 {offsets = [0, 256], sizes = [8, 64], strides = [1, 1]} : vector<8x384xf32> to vector<8x64xf32>
    %435 = vector.broadcast %13 : vector<1x64xf32> to vector<8x64xf32>
    %436 = arith.addf %434, %435 : vector<8x64xf32>
    %437 = arith.mulf %431, %436 : vector<8x64xf32>
    %438 = arith.addf %433, %437 : vector<8x64xf32>
    %439 = math.tanh %438 : vector<8x64xf32>
    %cst_94 = arith.constant 1.000000e+00 : f32
    %440 = vector.broadcast %cst_94 : f32 to vector<8x64xf32>
    %441 = arith.subf %440, %432 : vector<8x64xf32>
    %442 = arith.mulf %441, %439 : vector<8x64xf32>
    %443 = arith.mulf %432, %418 : vector<8x64xf32>
    %444 = arith.addf %442, %443 : vector<8x64xf32>
    %445 = arith.truncf %444 : vector<8x64xf32> to vector<8x64xbf16>
    %cst_95 = arith.constant dense<0.000000e+00> : vector<8x384xf32>
    %446 = tpu.matmul %445, %7, %cst_95 {dimension_numbers = #tpu.dot_dimension_numbers<[1], [0], [0], [1], [0, 0, 1, 1], [], []>} : vector<8x64xbf16>, vector<64x384xbf16>, vector<8x384xf32> -> vector<8x384xf32>
    %447 = vector.extract_strided_slice %365 {offsets = [3, 0, 0], sizes = [1, 8, 384], strides = [1, 1, 1]} : vector<4x8x384xf32> to vector<1x8x384xf32>
    %448 = vector.shape_cast %447 : vector<1x8x384xf32> to vector<8x384xf32>
    %449 = vector.extract_strided_slice %448 {offsets = [0, 0], sizes = [8, 256], strides = [1, 1]} : vector<8x384xf32> to vector<8x256xf32>
    %450 = vector.extract_strided_slice %446 {offsets = [0, 0], sizes = [8, 256], strides = [1, 1]} : vector<8x384xf32> to vector<8x256xf32>
    %451 = arith.addf %449, %450 : vector<8x256xf32>
    %452 = arith.negf %451 : vector<8x256xf32>
    %453 = math.exp %452 : vector<8x256xf32>
    %cst_96 = arith.constant 1.000000e+00 : f32
    %454 = vector.broadcast %cst_96 : f32 to vector<8x256xf32>
    %455 = arith.addf %454, %453 : vector<8x256xf32>
    %456 = arith.divf %454, %455 : vector<8x256xf32>
    %457 = vector.extract_strided_slice %456 {offsets = [0, 0], sizes = [8, 64], strides = [1, 1]} : vector<8x256xf32> to vector<8x64xf32>
    %458 = vector.extract_strided_slice %456 {offsets = [0, 128], sizes = [8, 64], strides = [1, 1]} : vector<8x256xf32> to vector<8x64xf32>
    %459 = vector.extract_strided_slice %448 {offsets = [0, 256], sizes = [8, 64], strides = [1, 1]} : vector<8x384xf32> to vector<8x64xf32>
    %460 = vector.extract_strided_slice %446 {offsets = [0, 256], sizes = [8, 64], strides = [1, 1]} : vector<8x384xf32> to vector<8x64xf32>
    %461 = vector.broadcast %13 : vector<1x64xf32> to vector<8x64xf32>
    %462 = arith.addf %460, %461 : vector<8x64xf32>
    %463 = arith.mulf %457, %462 : vector<8x64xf32>
    %464 = arith.addf %459, %463 : vector<8x64xf32>
    %465 = math.tanh %464 : vector<8x64xf32>
    %cst_97 = arith.constant 1.000000e+00 : f32
    %466 = vector.broadcast %cst_97 : f32 to vector<8x64xf32>
    %467 = arith.subf %466, %458 : vector<8x64xf32>
    %468 = arith.mulf %467, %465 : vector<8x64xf32>
    %469 = arith.mulf %458, %444 : vector<8x64xf32>
    %470 = arith.addf %468, %469 : vector<8x64xf32>
    %471 = vector.shape_cast %392 : vector<8x64xf32> to vector<1x8x64xf32>
    %472 = vector.shape_cast %418 : vector<8x64xf32> to vector<1x8x64xf32>
    %473 = vector.shape_cast %444 : vector<8x64xf32> to vector<1x8x64xf32>
    %474 = vector.shape_cast %470 : vector<8x64xf32> to vector<1x8x64xf32>
    %475 = tpu.concatenate %471, %472, %473, %474 in 0 : vector<1x8x64xf32>, vector<1x8x64xf32>, vector<1x8x64xf32>, vector<1x8x64xf32> -> vector<4x8x64xf32>
    %476 = vector.extract_strided_slice %475 {offsets = [0, 0, 0], sizes = [4, 8, 32], strides = [1, 1, 1]} : vector<4x8x64xf32> to vector<4x8x32xf32>
    %477 = vector.extract_strided_slice %475 {offsets = [0, 0, 32], sizes = [4, 8, 32], strides = [1, 1, 1]} : vector<4x8x64xf32> to vector<4x8x32xf32>
    %478 = vector.shape_cast %1 : vector<4x8xf32> to vector<4x8x1xf32>
    %479 = vector.broadcast %478 : vector<4x8x1xf32> to vector<4x8x32xf32>
    %480 = arith.mulf %476, %479 : vector<4x8x32xf32>
    %481 = vector.shape_cast %3 : vector<4x8xf32> to vector<4x8x1xf32>
    %482 = vector.broadcast %481 : vector<4x8x1xf32> to vector<4x8x32xf32>
    %483 = arith.mulf %477, %482 : vector<4x8x32xf32>
    %484 = arith.addf %1, %3 : vector<4x8xf32>
    %c0_98 = arith.constant 0 : index
    %c0_99 = arith.constant 0 : index
    %485 = vector.load %arg0[%c0_98, %c0_99] : memref<4x32xbf16, #tpu.memory_space<vmem>>, vector<4x32xbf16>
    %cst_100 = arith.constant dense<0.000000e+00> : vector<4x32xf32>
    %486 = tpu.matmul %485, %8, %cst_100 {dimension_numbers = #tpu.dot_dimension_numbers<[1], [0], [0], [1], [0, 0, 1, 1], [], []>} : vector<4x32xbf16>, vector<32x32xbf16>, vector<4x32xf32> -> vector<4x32xf32>
    %487 = math.tanh %486 : vector<4x32xf32>
    %488 = vector.shape_cast %487 : vector<4x32xf32> to vector<4x1x32xf32>
    %489 = vector.broadcast %488 : vector<4x1x32xf32> to vector<4x8x32xf32>
    %490 = arith.mulf %476, %489 : vector<4x8x32xf32>
    %cst_101 = arith.constant dense<0.000000e+00> : vector<4x8xf32>
    %491 = vector.multi_reduction <add>, %490, %cst_101 [2] : vector<4x8x32xf32> to vector<4x8xf32>
    %492 = math.tanh %491 : vector<4x8xf32>
    %493 = arith.mulf %484, %492 : vector<4x8xf32>
    %cst_102 = arith.constant 1.000000e+00 : f32
    %494 = vector.broadcast %cst_102 : f32 to vector<4x8xf32>
    %495 = arith.subf %494, %484 : vector<4x8xf32>
    %cst_103 = arith.constant -1.000000e+04 : f32
    %496 = vector.broadcast %cst_103 : f32 to vector<4x8xf32>
    %497 = arith.mulf %495, %496 : vector<4x8xf32>
    %498 = arith.addf %493, %497 : vector<4x8xf32>
    %cst_104 = arith.constant dense<0xFF800000> : vector<4xf32>
    %499 = vector.multi_reduction <maximumf>, %498, %cst_104 [1] : vector<4x8xf32> to vector<4xf32>
    %500 = vector.shape_cast %499 : vector<4xf32> to vector<4x1xf32>
    %501 = vector.broadcast %500 : vector<4x1xf32> to vector<4x8xf32>
    %502 = arith.subf %498, %501 : vector<4x8xf32>
    %503 = math.exp %502 : vector<4x8xf32>
    %cst_105 = arith.constant dense<0.000000e+00> : vector<4xf32>
    %504 = vector.multi_reduction <add>, %503, %cst_105 [1] : vector<4x8xf32> to vector<4xf32>
    %505 = vector.shape_cast %504 : vector<4xf32> to vector<4x1xf32>
    %506 = tpu.reciprocal %505 {approx = true} : vector<4x1xf32> -> vector<4x1xf32>
    %507 = vector.broadcast %506 : vector<4x1xf32> to vector<4x8xf32>
    %508 = arith.mulf %503, %507 : vector<4x8xf32>
    %509 = arith.mulf %484, %508 : vector<4x8xf32>
    %510 = vector.shape_cast %509 : vector<4x8xf32> to vector<4x8x1xf32>
    %511 = vector.broadcast %510 : vector<4x8x1xf32> to vector<4x8x32xf32>
    %512 = arith.mulf %511, %480 : vector<4x8x32xf32>
    %cst_106 = arith.constant dense<0.000000e+00> : vector<4x32xf32>
    %513 = vector.multi_reduction <add>, %512, %cst_106 [1] : vector<4x8x32xf32> to vector<4x32xf32>
    %514 = vector.shape_cast %487 : vector<4x32xf32> to vector<4x1x32xf32>
    %515 = vector.broadcast %514 : vector<4x1x32xf32> to vector<4x8x32xf32>
    %516 = arith.mulf %477, %515 : vector<4x8x32xf32>
    %cst_107 = arith.constant dense<0.000000e+00> : vector<4x8xf32>
    %517 = vector.multi_reduction <add>, %516, %cst_107 [2] : vector<4x8x32xf32> to vector<4x8xf32>
    %518 = math.tanh %517 : vector<4x8xf32>
    %519 = arith.mulf %484, %518 : vector<4x8xf32>
    %cst_108 = arith.constant 1.000000e+00 : f32
    %520 = vector.broadcast %cst_108 : f32 to vector<4x8xf32>
    %521 = arith.subf %520, %484 : vector<4x8xf32>
    %cst_109 = arith.constant -1.000000e+04 : f32
    %522 = vector.broadcast %cst_109 : f32 to vector<4x8xf32>
    %523 = arith.mulf %521, %522 : vector<4x8xf32>
    %524 = arith.addf %519, %523 : vector<4x8xf32>
    %cst_110 = arith.constant dense<0xFF800000> : vector<4xf32>
    %525 = vector.multi_reduction <maximumf>, %524, %cst_110 [1] : vector<4x8xf32> to vector<4xf32>
    %526 = vector.shape_cast %525 : vector<4xf32> to vector<4x1xf32>
    %527 = vector.broadcast %526 : vector<4x1xf32> to vector<4x8xf32>
    %528 = arith.subf %524, %527 : vector<4x8xf32>
    %529 = math.exp %528 : vector<4x8xf32>
    %cst_111 = arith.constant dense<0.000000e+00> : vector<4xf32>
    %530 = vector.multi_reduction <add>, %529, %cst_111 [1] : vector<4x8xf32> to vector<4xf32>
    %531 = vector.shape_cast %530 : vector<4xf32> to vector<4x1xf32>
    %532 = tpu.reciprocal %531 {approx = true} : vector<4x1xf32> -> vector<4x1xf32>
    %533 = vector.broadcast %532 : vector<4x1xf32> to vector<4x8xf32>
    %534 = arith.mulf %529, %533 : vector<4x8xf32>
    %535 = arith.mulf %484, %534 : vector<4x8xf32>
    %536 = vector.shape_cast %535 : vector<4x8xf32> to vector<4x8x1xf32>
    %537 = vector.broadcast %536 : vector<4x8x1xf32> to vector<4x8x32xf32>
    %538 = arith.mulf %537, %483 : vector<4x8x32xf32>
    %cst_112 = arith.constant dense<0.000000e+00> : vector<4x32xf32>
    %539 = vector.multi_reduction <add>, %538, %cst_112 [1] : vector<4x8x32xf32> to vector<4x32xf32>
    %540 = arith.addf %487, %513 : vector<4x32xf32>
    %541 = arith.addf %540, %539 : vector<4x32xf32>
    %542 = math.tanh %541 : vector<4x32xf32>
    %543 = vector.shape_cast %542 : vector<4x32xf32> to vector<4x1x32xf32>
    %544 = vector.broadcast %543 : vector<4x1x32xf32> to vector<4x8x32xf32>
    %545 = arith.mulf %480, %544 : vector<4x8x32xf32>
    %cst_113 = arith.constant dense<0.000000e+00> : vector<4x8xf32>
    %546 = vector.multi_reduction <add>, %545, %cst_113 [2] : vector<4x8x32xf32> to vector<4x8xf32>
    %547 = math.tanh %546 : vector<4x8xf32>
    %548 = arith.mulf %484, %547 : vector<4x8xf32>
    %cst_114 = arith.constant 1.000000e+00 : f32
    %549 = vector.broadcast %cst_114 : f32 to vector<4x8xf32>
    %550 = arith.subf %549, %484 : vector<4x8xf32>
    %cst_115 = arith.constant -1.000000e+04 : f32
    %551 = vector.broadcast %cst_115 : f32 to vector<4x8xf32>
    %552 = arith.mulf %550, %551 : vector<4x8xf32>
    %553 = arith.addf %548, %552 : vector<4x8xf32>
    %cst_116 = arith.constant dense<0xFF800000> : vector<4xf32>
    %554 = vector.multi_reduction <maximumf>, %553, %cst_116 [1] : vector<4x8xf32> to vector<4xf32>
    %555 = vector.shape_cast %554 : vector<4xf32> to vector<4x1xf32>
    %556 = vector.broadcast %555 : vector<4x1xf32> to vector<4x8xf32>
    %557 = arith.subf %553, %556 : vector<4x8xf32>
    %558 = math.exp %557 : vector<4x8xf32>
    %cst_117 = arith.constant dense<0.000000e+00> : vector<4xf32>
    %559 = vector.multi_reduction <add>, %558, %cst_117 [1] : vector<4x8xf32> to vector<4xf32>
    %560 = vector.shape_cast %559 : vector<4xf32> to vector<4x1xf32>
    %561 = tpu.reciprocal %560 {approx = true} : vector<4x1xf32> -> vector<4x1xf32>
    %562 = vector.broadcast %561 : vector<4x1xf32> to vector<4x8xf32>
    %563 = arith.mulf %558, %562 : vector<4x8xf32>
    %564 = arith.mulf %484, %563 : vector<4x8xf32>
    %565 = vector.shape_cast %564 : vector<4x8xf32> to vector<4x8x1xf32>
    %566 = vector.broadcast %565 : vector<4x8x1xf32> to vector<4x8x32xf32>
    %567 = arith.mulf %566, %480 : vector<4x8x32xf32>
    %cst_118 = arith.constant dense<0.000000e+00> : vector<4x32xf32>
    %568 = vector.multi_reduction <add>, %567, %cst_118 [1] : vector<4x8x32xf32> to vector<4x32xf32>
    %569 = vector.shape_cast %542 : vector<4x32xf32> to vector<4x1x32xf32>
    %570 = vector.broadcast %569 : vector<4x1x32xf32> to vector<4x8x32xf32>
    %571 = arith.mulf %483, %570 : vector<4x8x32xf32>
    %cst_119 = arith.constant dense<0.000000e+00> : vector<4x8xf32>
    %572 = vector.multi_reduction <add>, %571, %cst_119 [2] : vector<4x8x32xf32> to vector<4x8xf32>
    %573 = math.tanh %572 : vector<4x8xf32>
    %574 = arith.mulf %484, %573 : vector<4x8xf32>
    %cst_120 = arith.constant 1.000000e+00 : f32
    %575 = vector.broadcast %cst_120 : f32 to vector<4x8xf32>
    %576 = arith.subf %575, %484 : vector<4x8xf32>
    %cst_121 = arith.constant -1.000000e+04 : f32
    %577 = vector.broadcast %cst_121 : f32 to vector<4x8xf32>
    %578 = arith.mulf %576, %577 : vector<4x8xf32>
    %579 = arith.addf %574, %578 : vector<4x8xf32>
    %cst_122 = arith.constant dense<0xFF800000> : vector<4xf32>
    %580 = vector.multi_reduction <maximumf>, %579, %cst_122 [1] : vector<4x8xf32> to vector<4xf32>
    %581 = vector.shape_cast %580 : vector<4xf32> to vector<4x1xf32>
    %582 = vector.broadcast %581 : vector<4x1xf32> to vector<4x8xf32>
    %583 = arith.subf %579, %582 : vector<4x8xf32>
    %584 = math.exp %583 : vector<4x8xf32>
    %cst_123 = arith.constant dense<0.000000e+00> : vector<4xf32>
    %585 = vector.multi_reduction <add>, %584, %cst_123 [1] : vector<4x8xf32> to vector<4xf32>
    %586 = vector.shape_cast %585 : vector<4xf32> to vector<4x1xf32>
    %587 = tpu.reciprocal %586 {approx = true} : vector<4x1xf32> -> vector<4x1xf32>
    %588 = vector.broadcast %587 : vector<4x1xf32> to vector<4x8xf32>
    %589 = arith.mulf %584, %588 : vector<4x8xf32>
    %590 = arith.mulf %484, %589 : vector<4x8xf32>
    %591 = vector.shape_cast %590 : vector<4x8xf32> to vector<4x8x1xf32>
    %592 = vector.broadcast %591 : vector<4x8x1xf32> to vector<4x8x32xf32>
    %593 = arith.mulf %592, %483 : vector<4x8x32xf32>
    %cst_124 = arith.constant dense<0.000000e+00> : vector<4x32xf32>
    %594 = vector.multi_reduction <add>, %593, %cst_124 [1] : vector<4x8x32xf32> to vector<4x32xf32>
    %595 = arith.addf %542, %568 : vector<4x32xf32>
    %596 = arith.addf %595, %594 : vector<4x32xf32>
    %597 = math.tanh %596 : vector<4x32xf32>
    %598 = vector.shape_cast %597 : vector<4x32xf32> to vector<4x1x32xf32>
    %599 = vector.broadcast %598 : vector<4x1x32xf32> to vector<4x8x32xf32>
    %600 = arith.mulf %480, %599 : vector<4x8x32xf32>
    %cst_125 = arith.constant dense<0.000000e+00> : vector<4x8xf32>
    %601 = vector.multi_reduction <add>, %600, %cst_125 [2] : vector<4x8x32xf32> to vector<4x8xf32>
    %602 = math.tanh %601 : vector<4x8xf32>
    %603 = arith.mulf %484, %602 : vector<4x8xf32>
    %cst_126 = arith.constant 1.000000e+00 : f32
    %604 = vector.broadcast %cst_126 : f32 to vector<4x8xf32>
    %605 = arith.subf %604, %484 : vector<4x8xf32>
    %cst_127 = arith.constant -1.000000e+04 : f32
    %606 = vector.broadcast %cst_127 : f32 to vector<4x8xf32>
    %607 = arith.mulf %605, %606 : vector<4x8xf32>
    %608 = arith.addf %603, %607 : vector<4x8xf32>
    %cst_128 = arith.constant dense<0xFF800000> : vector<4xf32>
    %609 = vector.multi_reduction <maximumf>, %608, %cst_128 [1] : vector<4x8xf32> to vector<4xf32>
    %610 = vector.shape_cast %609 : vector<4xf32> to vector<4x1xf32>
    %611 = vector.broadcast %610 : vector<4x1xf32> to vector<4x8xf32>
    %612 = arith.subf %608, %611 : vector<4x8xf32>
    %613 = math.exp %612 : vector<4x8xf32>
    %cst_129 = arith.constant dense<0.000000e+00> : vector<4xf32>
    %614 = vector.multi_reduction <add>, %613, %cst_129 [1] : vector<4x8xf32> to vector<4xf32>
    %615 = vector.shape_cast %614 : vector<4xf32> to vector<4x1xf32>
    %616 = tpu.reciprocal %615 {approx = true} : vector<4x1xf32> -> vector<4x1xf32>
    %617 = vector.broadcast %616 : vector<4x1xf32> to vector<4x8xf32>
    %618 = arith.mulf %613, %617 : vector<4x8xf32>
    %619 = arith.mulf %484, %618 : vector<4x8xf32>
    %620 = vector.shape_cast %619 : vector<4x8xf32> to vector<4x8x1xf32>
    %621 = vector.broadcast %620 : vector<4x8x1xf32> to vector<4x8x32xf32>
    %622 = arith.mulf %621, %480 : vector<4x8x32xf32>
    %cst_130 = arith.constant dense<0.000000e+00> : vector<4x32xf32>
    %623 = vector.multi_reduction <add>, %622, %cst_130 [1] : vector<4x8x32xf32> to vector<4x32xf32>
    %624 = vector.shape_cast %597 : vector<4x32xf32> to vector<4x1x32xf32>
    %625 = vector.broadcast %624 : vector<4x1x32xf32> to vector<4x8x32xf32>
    %626 = arith.mulf %483, %625 : vector<4x8x32xf32>
    %cst_131 = arith.constant dense<0.000000e+00> : vector<4x8xf32>
    %627 = vector.multi_reduction <add>, %626, %cst_131 [2] : vector<4x8x32xf32> to vector<4x8xf32>
    %628 = math.tanh %627 : vector<4x8xf32>
    %629 = arith.mulf %484, %628 : vector<4x8xf32>
    %cst_132 = arith.constant 1.000000e+00 : f32
    %630 = vector.broadcast %cst_132 : f32 to vector<4x8xf32>
    %631 = arith.subf %630, %484 : vector<4x8xf32>
    %cst_133 = arith.constant -1.000000e+04 : f32
    %632 = vector.broadcast %cst_133 : f32 to vector<4x8xf32>
    %633 = arith.mulf %631, %632 : vector<4x8xf32>
    %634 = arith.addf %629, %633 : vector<4x8xf32>
    %cst_134 = arith.constant dense<0xFF800000> : vector<4xf32>
    %635 = vector.multi_reduction <maximumf>, %634, %cst_134 [1] : vector<4x8xf32> to vector<4xf32>
    %636 = vector.shape_cast %635 : vector<4xf32> to vector<4x1xf32>
    %637 = vector.broadcast %636 : vector<4x1xf32> to vector<4x8xf32>
    %638 = arith.subf %634, %637 : vector<4x8xf32>
    %639 = math.exp %638 : vector<4x8xf32>
    %cst_135 = arith.constant dense<0.000000e+00> : vector<4xf32>
    %640 = vector.multi_reduction <add>, %639, %cst_135 [1] : vector<4x8xf32> to vector<4xf32>
    %641 = vector.shape_cast %640 : vector<4xf32> to vector<4x1xf32>
    %642 = tpu.reciprocal %641 {approx = true} : vector<4x1xf32> -> vector<4x1xf32>
    %643 = vector.broadcast %642 : vector<4x1xf32> to vector<4x8xf32>
    %644 = arith.mulf %639, %643 : vector<4x8xf32>
    %645 = arith.mulf %484, %644 : vector<4x8xf32>
    %646 = vector.shape_cast %645 : vector<4x8xf32> to vector<4x8x1xf32>
    %647 = vector.broadcast %646 : vector<4x8x1xf32> to vector<4x8x32xf32>
    %648 = arith.mulf %647, %483 : vector<4x8x32xf32>
    %cst_136 = arith.constant dense<0.000000e+00> : vector<4x32xf32>
    %649 = vector.multi_reduction <add>, %648, %cst_136 [1] : vector<4x8x32xf32> to vector<4x32xf32>
    %650 = arith.addf %597, %623 : vector<4x32xf32>
    %651 = arith.addf %650, %649 : vector<4x32xf32>
    %652 = math.tanh %651 : vector<4x32xf32>
    %653 = arith.truncf %652 : vector<4x32xf32> to vector<4x32xbf16>
    %cst_137 = arith.constant dense<0.000000e+00> : vector<4x4xf32>
    %654 = tpu.matmul %653, %9, %cst_137 {dimension_numbers = #tpu.dot_dimension_numbers<[1], [0], [0], [1], [0, 0, 1, 1], [], []>} : vector<4x32xbf16>, vector<32x4xbf16>, vector<4x4xf32> -> vector<4x4xf32>
    %655 = vector.broadcast %14 : vector<1x4xf32> to vector<4x4xf32>
    %656 = arith.addf %654, %655 : vector<4x4xf32>
    %cst_138 = arith.constant dense<0xFF800000> : vector<4xf32>
    %657 = vector.multi_reduction <maximumf>, %656, %cst_138 [1] : vector<4x4xf32> to vector<4xf32>
    %658 = vector.shape_cast %657 : vector<4xf32> to vector<4x1xf32>
    %659 = vector.broadcast %658 : vector<4x1xf32> to vector<4x4xf32>
    %660 = arith.subf %656, %659 : vector<4x4xf32>
    %661 = math.exp %660 : vector<4x4xf32>
    %cst_139 = arith.constant dense<0.000000e+00> : vector<4xf32>
    %662 = vector.multi_reduction <add>, %661, %cst_139 [1] : vector<4x4xf32> to vector<4xf32>
    %663 = vector.shape_cast %662 : vector<4xf32> to vector<4x1xf32>
    %664 = math.log %663 : vector<4x1xf32>
    %665 = vector.broadcast %664 : vector<4x1xf32> to vector<4x4xf32>
    %666 = arith.subf %660, %665 : vector<4x4xf32>
    %c0_140 = arith.constant 0 : index
    %c0_141 = arith.constant 0 : index
    %667 = vector.load %arg5[%c0_140, %c0_141] : memref<4x4xf32, #tpu.memory_space<vmem>>, vector<4x4xf32>
    tpu.vector_store %arg5[%c0_140, %c0_141], %666 {strides = array<i32>} : memref<4x4xf32, #tpu.memory_space<vmem>>, vector<4x4xf32>,
    return
  }
}

</mosaic_0001>

<llo_original>
// kernel: tpu_custom_call.1
$region0: #{tpu_custom_call.1}
  #allocation0 [shape = 'u32[]', space=smem, size = 0x4, offset = 0x4, fixed_abs, tag = 'smem constant byte address 0x4 - core index']
  #allocation1 [shape = 'u32[144,128]{1,0:T(1,128)}', space=vmem, size = 0x12000, scoped, tag = 'internal scratch']
  #allocation2 [shape = 'f32[4,8,64]{2,1,0:T(8,128)}', space=vmem, size = 0x4000, scoped, tag = 'scratch operand']
  %s0 = inlined_call_operand.hbm [shape: bf16[4,32], index: 0, kind: input, shape index: {}]
  %s1 = inlined_call_operand.hbm [shape: bf16[32,64], index: 1, kind: input, shape index: {}]
  %s2 = inlined_call_operand.hbm [shape: f32[2,4,8], index: 2, kind: input, shape index: {}]
  %s3 = inlined_call_operand.hbm [shape: bf16[320,384], index: 3, kind: input, shape index: {}]
  %s4 = inlined_call_operand.hbm [shape: f32[8,384], index: 4, kind: input, shape index: {}]
  %s5 = inlined_call_operand.hbm [shape: f32[4,4], index: 5, kind: output, shape index: {}]
  %s6 = sld [smem:[#allocation0]]
  $region50: #{tpu_custom_call.1} parent=0
    _
  %s8 = ssub.s32 1, %s6
  %s9 = scalar_select 0, %s8, %s6
  $region1: #{tpu_custom_call.1} parent=0
    #allocation3 [shape = 'u8[1024]{0}', space=vmem, size = 0x400, scoped, tag = 'input window, operand 0, single buffered']
    #allocation4 [shape = 's32[1]{0}', space=sflag, size = 0x4, scoped, tag = 'scoped memory for tpu_custom_call.1']
    #allocation5 [shape = 's32[1]{0}', space=sflag, size = 0x4, scoped, tag = 'scoped memory for tpu_custom_call.1']
    #allocation6 [shape = 'u8[8192]{0}', space=vmem, size = 0x2000, scoped, tag = 'input window, operand 1, single buffered']
    #allocation7 [shape = 's32[1]{0}', space=sflag, size = 0x4, scoped, tag = 'scoped memory for tpu_custom_call.1']
    #allocation8 [shape = 'u8[4096]{0}', space=vmem, size = 0x1000, scoped, tag = 'input window, operand 2, single buffered']
    #allocation9 [shape = 'u8[245760]{0}', space=vmem, size = 0x3c000, scoped, tag = 'input window, operand 3, single buffered']
    #allocation10 [shape = 's32[1]{0}', space=sflag, size = 0x4, scoped, tag = 'scoped memory for tpu_custom_call.1']
    #allocation11 [shape = 'u8[12288]{0}', space=vmem, size = 0x3000, scoped, tag = 'input window, operand 4, single buffered']
    #allocation12 [shape = 'u8[2048]{0}', space=vmem, size = 0x800, scoped, tag = 'output window, operand 0, single buffered']
    %10 = vsyncpa [#allocation4], 0
    %11 = vsyncpa [#allocation7], 0
    %12 = vsyncpa [#allocation10], 0
    %13 = vsyncpa [#allocation5], 0
    // Predicated region
    $region2: #{tpu_custom_call.1} parent=1 // pred_check
      _
    $region3: #{tpu_custom_call.1} parent=1 // pred_check_branch
      %15 = sbr.rel (0) target = $region5
    $region4: #{tpu_custom_call.1} parent=1 // pred_region
      %s17 = ssub.s32 32, 32
      %18 = vsyncadd [#allocation4], %s17
      %s20 = sshll.u32 [#allocation3], 4
      %s21 = int_to_ptr.vmem [resolvable:$true] %s20
      %23 = dma.hbm_to_vmem [thread:$0]  %s0, 32, %s21, [#allocation4]
    $region5: #{tpu_custom_call.1} parent=1 // pred_fallthru
      _
    // Predicated region
    $region6: #{tpu_custom_call.1} parent=1 // pred_check
      _
    $region7: #{tpu_custom_call.1} parent=1 // pred_check_branch
      %25 = sbr.rel (0) target = $region9
    $region8: #{tpu_custom_call.1} parent=1 // pred_region
      %s27 = ssub.s32 256, 256
      %28 = vsyncadd [#allocation7], %s27
      %s29 = sshll.u32 [#allocation6], 4
      %s30 = int_to_ptr.vmem [resolvable:$true] %s29
      %35 = dma.hbm_to_vmem [thread:$0]  %s1, 256, %s30, [#allocation7], 64, 64, 4
    $region9: #{tpu_custom_call.1} parent=1 // pred_fallthru
      _
    // Predicated region
    $region10: #{tpu_custom_call.1} parent=1 // pred_check
      _
    $region11: #{tpu_custom_call.1} parent=1 // pred_check_branch
      %37 = sbr.rel (0) target = $region13
    $region12: #{tpu_custom_call.1} parent=1 // pred_region
      %s39 = ssub.s32 128, 128
      %40 = vsyncadd [#allocation7], %s39
      %s41 = sshll.u32 [#allocation8], 4
      %s42 = int_to_ptr.vmem [resolvable:$true] %s41
      %47 = dma.hbm_to_vmem [thread:$0]  %s2, 128, %s42, [#allocation7], 64, 64, 4
    $region13: #{tpu_custom_call.1} parent=1 // pred_fallthru
      _
    // Predicated region
    $region14: #{tpu_custom_call.1} parent=1 // pred_check
      _
    $region15: #{tpu_custom_call.1} parent=1 // pred_check_branch
      %49 = sbr.rel (0) target = $region17
    $region16: #{tpu_custom_call.1} parent=1 // pred_region
      %s51 = ssub.s32 7680, 7680
      %52 = vsyncadd [#allocation10], %s51
      %s53 = sshll.u32 [#allocation9], 4
      %s54 = int_to_ptr.vmem [resolvable:$true] %s53
      %59 = dma.hbm_to_vmem [thread:$0]  %s3, 7680, %s54, [#allocation10], 192, 192, 12
    $region17: #{tpu_custom_call.1} parent=1 // pred_fallthru
      _
    // Predicated region
    $region18: #{tpu_custom_call.1} parent=1 // pred_check
      _
    $region19: #{tpu_custom_call.1} parent=1 // pred_check_branch
      %61 = sbr.rel (0) target = $region21
    $region20: #{tpu_custom_call.1} parent=1 // pred_region
      %s63 = ssub.s32 384, 384
      %64 = vsyncadd [#allocation10], %s63
      %s66 = sshll.u32 [#allocation11], 4
      %s67 = int_to_ptr.vmem [resolvable:$true] %s66
      %69 = dma.hbm_to_vmem [thread:$0]  %s4, 384, %s67, [#allocation10]
    $region21: #{tpu_custom_call.1} parent=1 // pred_fallthru
      _
    // Predicated region
    $region22: #{tpu_custom_call.1} parent=1 // pred_check
      _
    $region23: #{tpu_custom_call.1} parent=1 // pred_check_branch
      %71 = sbr.rel (0) target = $region25
    $region24: #{tpu_custom_call.1} parent=1 // pred_region
      %72 = dma.done [#allocation4], 32
    $region25: #{tpu_custom_call.1} parent=1 // pred_fallthru
      _
    // Predicated region
    $region26: #{tpu_custom_call.1} parent=1 // pred_check
      _
    $region27: #{tpu_custom_call.1} parent=1 // pred_check_branch
      %74 = sbr.rel (0) target = $region29
    $region28: #{tpu_custom_call.1} parent=1 // pred_region
      %75 = dma.done [#allocation7], 256
    $region29: #{tpu_custom_call.1} parent=1 // pred_fallthru
      _
    // Predicated region
    $region30: #{tpu_custom_call.1} parent=1 // pred_check
      _
    $region31: #{tpu_custom_call.1} parent=1 // pred_check_branch
      %77 = sbr.rel (0) target = $region33
    $region32: #{tpu_custom_call.1} parent=1 // pred_region
      %78 = dma.done [#allocation7], 128
    $region33: #{tpu_custom_call.1} parent=1 // pred_fallthru
      _
    // Predicated region
    $region34: #{tpu_custom_call.1} parent=1 // pred_check
      _
    $region35: #{tpu_custom_call.1} parent=1 // pred_check_branch
      %80 = sbr.rel (0) target = $region37
    $region36: #{tpu_custom_call.1} parent=1 // pred_region
      %81 = dma.done [#allocation10], 7680
    $region37: #{tpu_custom_call.1} parent=1 // pred_fallthru
      _
    // Predicated region
    $region38: #{tpu_custom_call.1} parent=1 // pred_check
      _
    $region39: #{tpu_custom_call.1} parent=1 // pred_check_branch
      %83 = sbr.rel (0) target = $region41
    $region40: #{tpu_custom_call.1} parent=1 // pred_region
      %84 = dma.done [#allocation10], 384
    $region41: #{tpu_custom_call.1} parent=1 // pred_fallthru
      _
    %v86 = vld [vmem:[#allocation8] sm:$0xf]
    %s87 = scalar_lea.vmem [#allocation8], 4
    %v88 = vld [vmem:[%s87] sm:$0xf]
    %v89 = vld [vmem:[#allocation9] sm:$0xff]
    %v90 = vld [vmem:[#allocation9 + $0x8] sm:$0xf]
    %v91 = vld [vmem:[#allocation9 + $0xc] sm:$0xff]
    %v92 = vld [vmem:[#allocation9 + $0x14] sm:$0xf]
    %v93 = vld [vmem:[#allocation9 + $0x18] sm:$0xff]
    %v94 = vld [vmem:[#allocation9 + $0x20] sm:$0xf]
    %v95 = vld [vmem:[#allocation9 + $0x24] sm:$0xff]
    %v96 = vld [vmem:[#allocation9 + $0x2c] sm:$0xf]
    %v97 = vld [vmem:[#allocation9 + $0x30] sm:$0xff]
    %v98 = vld [vmem:[#allocation9 + $0x38] sm:$0xf]
    %v99 = vld [vmem:[#allocation9 + $0x3c] sm:$0xff]
    %v100 = vld [vmem:[#allocation9 + $0x44] sm:$0xf]
    %v101 = vld [vmem:[#allocation9 + $0x48] sm:$0xff]
    %v102 = vld [vmem:[#allocation9 + $0x50] sm:$0xf]
    %v103 = vld [vmem:[#allocation9 + $0x54] sm:$0xff]
    %v104 = vld [vmem:[#allocation9 + $0x5c] sm:$0xf]
    %v105 = vld [vmem:[#allocation9 + $0x60] sm:$0xff]
    %v106 = vld [vmem:[#allocation9 + $0x68] sm:$0xf]
    %v107 = vld [vmem:[#allocation9 + $0x6c] sm:$0xff]
    %v108 = vld [vmem:[#allocation9 + $0x74] sm:$0xf]
    %v109 = vld [vmem:[#allocation9 + $0x78] sm:$0xff]
    %v110 = vld [vmem:[#allocation9 + $0x80] sm:$0xf]
    %v111 = vld [vmem:[#allocation9 + $0x84] sm:$0xff]
    %v112 = vld [vmem:[#allocation9 + $0x8c] sm:$0xf]
    %v113 = vld [vmem:[#allocation9 + $0x90] sm:$0xff]
    %v114 = vld [vmem:[#allocation9 + $0x98] sm:$0xf]
    %v115 = vld [vmem:[#allocation9 + $0x9c] sm:$0xff]
    %v116 = vld [vmem:[#allocation9 + $0xa4] sm:$0xf]
    %v117 = vld [vmem:[#allocation9 + $0xa8] sm:$0xff]
    %v118 = vld [vmem:[#allocation9 + $0xb0] sm:$0xf]
    %v119 = vld [vmem:[#allocation9 + $0xb4] sm:$0xff]
    %v120 = vld [vmem:[#allocation9 + $0xbc] sm:$0xf]
    %v121 = vld [vmem:[#allocation9 + $0xc0] sm:$0xff]
    %v122 = vld [vmem:[#allocation9 + $0xc8] sm:$0xf]
    %v123 = vld [vmem:[#allocation9 + $0xcc] sm:$0xff]
    %v124 = vld [vmem:[#allocation9 + $0xd4] sm:$0xf]
    %v125 = vld [vmem:[#allocation9 + $0xd8] sm:$0xff]
    %v126 = vld [vmem:[#allocation9 + $0xe0] sm:$0xf]
    %v127 = vld [vmem:[#allocation9 + $0xe4] sm:$0xff]
    %v128 = vld [vmem:[#allocation9 + $0xec] sm:$0xf]
    %v129 = vld [vmem:[#allocation9 + $0xf0] sm:$0xff]
    %v130 = vld [vmem:[#allocation9 + $0xf8] sm:$0xf]
    %v131 = vld [vmem:[#allocation9 + $0xfc] sm:$0xff]
    %v132 = vld [vmem:[#allocation9 + $0x104] sm:$0xf]
    %v133 = vld [vmem:[#allocation9 + $0x108] sm:$0xff]
    %v134 = vld [vmem:[#allocation9 + $0x110] sm:$0xf]
    %v135 = vld [vmem:[#allocation9 + $0x114] sm:$0xff]
    %v136 = vld [vmem:[#allocation9 + $0x11c] sm:$0xf]
    %v137 = vld [vmem:[#allocation9 + $0x120] sm:$0xff]
    %v138 = vld [vmem:[#allocation9 + $0x128] sm:$0xf]
    %v139 = vld [vmem:[#allocation9 + $0x12c] sm:$0xff]
    %v140 = vld [vmem:[#allocation9 + $0x134] sm:$0xf]
    %v141 = vld [vmem:[#allocation9 + $0x138] sm:$0xff]
    %v142 = vld [vmem:[#allocation9 + $0x140] sm:$0xf]
    %v143 = vld [vmem:[#allocation9 + $0x144] sm:$0xff]
    %v144 = vld [vmem:[#allocation9 + $0x14c] sm:$0xf]
    %v145 = vld [vmem:[#allocation9 + $0x150] sm:$0xff]
    %v146 = vld [vmem:[#allocation9 + $0x158] sm:$0xf]
    %v147 = vld [vmem:[#allocation9 + $0x15c] sm:$0xff]
    %v148 = vld [vmem:[#allocation9 + $0x164] sm:$0xf]
    %v149 = vld [vmem:[#allocation9 + $0x168] sm:$0xff]
    %v150 = vld [vmem:[#allocation9 + $0x170] sm:$0xf]
    %v151 = vld [vmem:[#allocation9 + $0x174] sm:$0xff]
    %v152 = vld [vmem:[#allocation9 + $0x17c] sm:$0xf]
    %v153 = vld [vmem:[#allocation9 + $0x180] sm:$0xf]
    %v154 = vld [vmem:[#allocation9 + $0x18c] sm:$0xf]
    %v155 = vld [vmem:[#allocation9 + $0x198] sm:$0xf]
    %v156 = vld [vmem:[#allocation9 + $0x1a4] sm:$0xf]
    %v157 = vld [vmem:[#allocation9 + $0x1b0] sm:$0xf]
    %v158 = vld [vmem:[#allocation9 + $0x1bc] sm:$0xf]
    %v159 = vld [vmem:[#allocation9 + $0x1c8] sm:$0xf]
    %v160 = vld [vmem:[#allocation9 + $0x1d4] sm:$0xf]
    %v161 = vld [vmem:[#allocation11] ss:$8 sm:$0x7]
    %v162 = vld [vmem:[#allocation11 + $0x1] ss:$0 sm:$0xff]
    %s163 = scalar_lea.vmem [#allocation11], 2
    %v164 = vld [vmem:[%s163] ss:$8 sm:$0x7]
    %v165 = vld [vmem:[#allocation11 + $0x3] ss:$0 sm:$0xff]
    %v166 = vld [vmem:[#allocation11 + $0x4] ss:$0 sm:$0xff]
    %v167 = vld [vmem:[#allocation6] sm:$0xf]
    %v168 = vld [vmem:[#allocation6 + $0x4] sm:$0xf]
    %v169 = vld [vmem:[#allocation6 + $0x8] sm:$0xf]
    %v170 = vld [vmem:[#allocation6 + $0xc] sm:$0xf]
    %v172 = vlaneseq
    %v173 = vshrl.u32 %v172, 7
    %v174 = vsub.s32 0, %v173
    %v175 = vrot.slane %v161, %v174
    %v176 = vlaneseq
    %v177 = vshrl.u32 %v176, 7
    %v178 = vsub.s32 1, %v177
    %v179 = vrot.slane %v161, %v178
    %v180 = vlaneseq
    %v181 = vshrl.u32 %v180, 7
    %v182 = vsub.s32 2, %v181
    %v183 = vrot.slane %v161, %v182
    %v191 = vunpack.c.l.b16 %v167
    %v192 = vunpack.c.l.b16 %v168
    %v193 = vunpack.c.l.b16 %v169
    %v194 = vunpack.c.l.b16 %v170
    %v195 = vpack.c.b16 %v192, %v191
    %v196 = vpack.c.b16 %v194, %v193
    %v213 = vunpack.c.l.b16 %v89
    %v214 = vunpack.c.h.b16 %v89
    %v215 = vunpack.c.l.b16 %v90
    %v216 = vunpack.c.l.b16 %v91
    %v217 = vunpack.c.h.b16 %v91
    %v218 = vunpack.c.l.b16 %v92
    %v219 = vunpack.c.l.b16 %v93
    %v220 = vunpack.c.h.b16 %v93
    %v221 = vunpack.c.l.b16 %v94
    %v222 = vunpack.c.l.b16 %v95
    %v223 = vunpack.c.h.b16 %v95
    %v224 = vunpack.c.l.b16 %v96
    %v225 = vunpack.c.l.b16 %v97
    %v226 = vunpack.c.h.b16 %v97
    %v227 = vunpack.c.l.b16 %v98
    %v228 = vunpack.c.l.b16 %v99
    %v229 = vunpack.c.h.b16 %v99
    %v230 = vunpack.c.l.b16 %v100
    %v231 = vunpack.c.l.b16 %v101
    %v232 = vunpack.c.h.b16 %v101
    %v233 = vunpack.c.l.b16 %v102
    %v234 = vunpack.c.l.b16 %v103
    %v235 = vunpack.c.h.b16 %v103
    %v236 = vunpack.c.l.b16 %v104
    %v237 = vpack.c.b16 %v216, %v213
    %v238 = vpack.c.b16 %v217, %v214
    %v239 = vpack.c.b16 %v218, %v215
    %v240 = vpack.c.b16 %v222, %v219
    %v241 = vpack.c.b16 %v223, %v220
    %v242 = vpack.c.b16 %v224, %v221
    %v243 = vpack.c.b16 %v228, %v225
    %v244 = vpack.c.b16 %v229, %v226
    %v245 = vpack.c.b16 %v230, %v227
    %v246 = vpack.c.b16 %v234, %v231
    %v247 = vpack.c.b16 %v235, %v232
    %v248 = vpack.c.b16 %v236, %v233
    %vm261 = vcmask 523264
    %v263 = vsel %vm261, %v195, 0
    %v266 = vsel %vm261, %v196, 0
    %268 = vmatprep.subr.bf16.mxu0 %v238
    %269 = vmatpush1.bf16.msra.mxu0 %v237
    %270 = vmatprep.subr.bf16.mxu0 %v241
    %271 = vmatpush1.bf16.msra.mxu0 %v240
    %272 = vmatprep.subr.bf16.mxu0 %v244
    %273 = vmatpush1.bf16.msra.mxu0 %v243
    %274 = vmatprep.subr.bf16.mxu0 %v247
    %275 = vmatpush1.bf16.msra.mxu0 %v246
    %276 = vmatprep.subr.bf16.mxu0 0
    %277 = vmatpush1.bf16.msra.mxu0 0
    %278 = vmatprep.subr.bf16.mxu0 0
    %279 = vmatpush1.bf16.msra.mxu0 0
    %280 = vmatprep.subr.bf16.mxu0 0
    %281 = vmatpush1.bf16.msra.mxu0 0
    %282 = vmatprep.subr.bf16.mxu0 0
    %283 = vmatpush1.bf16.msra.mxu0 0
    %284 = vmatprep.subr.bf16.mxu0 0
    %285 = vmatpush1.bf16.msra.mxu0 0
    %286 = vmatprep.subr.bf16.mxu0 0
    %287 = vmatpush1.bf16.msra.mxu0 0
    %288 = vmatprep.subr.bf16.mxu0 0
    %289 = vmatpush1.bf16.msra.mxu0 0
    %290 = vmatprep.subr.bf16.mxu0 0
    %291 = vmatpush1.bf16.msra.mxu0 0
    %292 = vmatprep.subr.bf16.mxu0 0
    %293 = vmatpush1.bf16.msra.mxu0 0
    %294 = vmatprep.subr.bf16.mxu0 0
    %295 = vmatpush1.bf16.msra.mxu0 0
    %296 = vmatprep.subr.bf16.mxu0 0
    %297 = vmatpush1.bf16.msra.mxu0 0
    %298 = vmatprep.subr.bf16.mxu0 0
    %299 = vmatpush1.bf16.msra.mxu0 0
    %300 = vmatprep.mubr.bf16.mxu0 0
    %301 = vmatmul.mubr.bf16.gmra.mrb[0].mxu0 %v263
    %v302 = vpop.f32.mrb[0].mxu0
    %v303 = vadd.f32 %v175, %v302
    %v304 = vpop.f32.mrb[0].mxu0
    %v305 = vadd.f32 %v179, %v304
    %v306 = vpop.f32.mrb[0].mxu0
    %v307 = vadd.f32 %v175, %v306
    %v308 = vpop.f32.mrb[0].mxu0
    %v309 = vadd.f32 %v179, %v308
    %310 = vmatprep.mubr.bf16.mxu0 0
    %311 = vmatmul.mubr.bf16.gmra.mrb[0].mxu0 %v266
    %v312 = vpop.f32.mrb[0].mxu0
    %v313 = vadd.f32 %v175, %v312
    %v314 = vpop.f32.mrb[0].mxu0
    %v315 = vadd.f32 %v179, %v314
    %v316 = vpop.f32.mrb[0].mxu0
    %v317 = vadd.f32 %v175, %v316
    %v318 = vpop.f32.mrb[0].mxu0
    %v319 = vadd.f32 %v179, %v318
    %320 = vdwg.mxu0
    %321 = vmatprep.subr.bf16.mxu0 0
    %322 = vmatpush1.bf16.msra.mxu0 %v239
    %323 = vmatprep.subr.bf16.mxu0 0
    %324 = vmatpush1.bf16.msra.mxu0 %v242
    %325 = vmatprep.subr.bf16.mxu0 0
    %326 = vmatpush1.bf16.msra.mxu0 %v245
    %327 = vmatprep.subr.bf16.mxu0 0
    %328 = vmatpush1.bf16.msra.mxu0 %v248
    %329 = vmatprep.subr.bf16.mxu0 0
    %330 = vmatpush1.bf16.msra.mxu0 0
    %331 = vmatprep.subr.bf16.mxu0 0
    %332 = vmatpush1.bf16.msra.mxu0 0
    %333 = vmatprep.subr.bf16.mxu0 0
    %334 = vmatpush1.bf16.msra.mxu0 0
    %335 = vmatprep.subr.bf16.mxu0 0
    %336 = vmatpush1.bf16.msra.mxu0 0
    %337 = vmatprep.subr.bf16.mxu0 0
    %338 = vmatpush1.bf16.msra.mxu0 0
    %339 = vmatprep.subr.bf16.mxu0 0
    %340 = vmatpush1.bf16.msra.mxu0 0
    %341 = vmatprep.subr.bf16.mxu0 0
    %342 = vmatpush1.bf16.msra.mxu0 0
    %343 = vmatprep.subr.bf16.mxu0 0
    %344 = vmatpush1.bf16.msra.mxu0 0
    %345 = vmatprep.subr.bf16.mxu0 0
    %346 = vmatpush1.bf16.msra.mxu0 0
    %347 = vmatprep.subr.bf16.mxu0 0
    %348 = vmatpush1.bf16.msra.mxu0 0
    %349 = vmatprep.subr.bf16.mxu0 0
    %350 = vmatpush1.bf16.msra.mxu0 0
    %351 = vmatprep.subr.bf16.mxu0 0
    %352 = vmatpush1.bf16.msra.mxu0 0
    %353 = vmatprep.mubr.bf16.mxu0 0
    %354 = vmatmul.mubr.bf16.gmra.mrb[0].mxu0 %v263
    %v355 = vpop.f32.mrb[0].mxu0
    %v356 = vadd.f32 %v183, %v355
    %v357 = vpop.f32.mrb[0].mxu0
    %v358 = vpop.f32.mrb[0].mxu0
    %v359 = vadd.f32 %v183, %v358
    %v360 = vpop.f32.mrb[0].mxu0
    %361 = vmatprep.mubr.bf16.mxu0 0
    %362 = vmatmul.mubr.bf16.gmra.mrb[0].mxu0 %v266
    %v363 = vpop.f32.mrb[0].mxu0
    %v364 = vadd.f32 %v183, %v363
    %v365 = vpop.f32.mrb[0].mxu0
    %v366 = vpop.f32.mrb[0].mxu0
    %v367 = vadd.f32 %v183, %v366
    %v368 = vpop.f32.mrb[0].mxu0
    %369 = vdwg.mxu0
    %v382 = vcombine.low %v303, %v305
    %v383 = vcombine.high %v303, %v305
    %v384 = vcombine.high %v356, %v356
    %v385 = vcombine.low %v307, %v309
    %v386 = vcombine.high %v307, %v309
    %v387 = vcombine.high %v359, %v359
    %v388 = vcombine.low %v313, %v315
    %v389 = vcombine.high %v313, %v315
    %v390 = vcombine.high %v364, %v364
    %v391 = vcombine.low %v317, %v319
    %v392 = vcombine.high %v317, %v319
    %v393 = vcombine.high %v367, %v367
    %v406 = vlaneseq
    %v407 = vand.u32 %v406, 127
    %vm408 = vcmp.lt.s32.totalorder %v407, 32
    %410 = vset.pattern.permute.xlu0 0
    %411 = vperm.xlu0 %410, %v86
    %v412 = vpop.permute.xlu0 %411
    %415 = vset.pattern.permute.xlu0 0
    %416 = vperm.xlu0 %415, %v88
    %v417 = vpop.permute.xlu0 %416
    %v419 = vsel %vm408, %v412, %v417
    %420 = vset.pattern.permute.xlu0 1
    %421 = vperm.xlu0 %420, %v86
    %v422 = vpop.permute.xlu0 %421
    %424 = vset.pattern.permute.xlu0 1
    %425 = vperm.xlu0 %424, %v88
    %v426 = vpop.permute.xlu0 %425
    %v428 = vsel %vm408, %v422, %v426
    %429 = vset.pattern.permute.xlu0 2
    %430 = vperm.xlu0 %429, %v86
    %v431 = vpop.permute.xlu0 %430
    %433 = vset.pattern.permute.xlu0 2
    %434 = vperm.xlu0 %433, %v88
    %v435 = vpop.permute.xlu0 %434
    %v437 = vsel %vm408, %v431, %v435
    %438 = vset.pattern.permute.xlu0 3
    %439 = vperm.xlu0 %438, %v86
    %v440 = vpop.permute.xlu0 %439
    %442 = vset.pattern.permute.xlu0 3
    %443 = vperm.xlu0 %442, %v88
    %v444 = vpop.permute.xlu0 %443
    %v446 = vsel %vm408, %v440, %v444
    %447 = vset.pattern.permute.xlu0 4
    %448 = vperm.xlu0 %447, %v86
    %v449 = vpop.permute.xlu0 %448
    %451 = vset.pattern.permute.xlu0 4
    %452 = vperm.xlu0 %451, %v88
    %v453 = vpop.permute.xlu0 %452
    %v455 = vsel %vm408, %v449, %v453
    %456 = vset.pattern.permute.xlu0 5
    %457 = vperm.xlu0 %456, %v86
    %v458 = vpop.permute.xlu0 %457
    %460 = vset.pattern.permute.xlu0 5
    %461 = vperm.xlu0 %460, %v88
    %v462 = vpop.permute.xlu0 %461
    %v464 = vsel %vm408, %v458, %v462
    %465 = vset.pattern.permute.xlu0 6
    %466 = vperm.xlu0 %465, %v86
    %v467 = vpop.permute.xlu0 %466
    %469 = vset.pattern.permute.xlu0 6
    %470 = vperm.xlu0 %469, %v88
    %v471 = vpop.permute.xlu0 %470
    %v473 = vsel %vm408, %v467, %v471
    %474 = vset.pattern.permute.xlu0 7
    %475 = vperm.xlu0 %474, %v86
    %v476 = vpop.permute.xlu0 %475
    %478 = vset.pattern.permute.xlu0 7
    %479 = vperm.xlu0 %478, %v88
    %v480 = vpop.permute.xlu0 %479
    %v482 = vsel %vm408, %v476, %v480
    %v499 = vunpack.c.l.b16 %v105
    %v500 = vunpack.c.h.b16 %v105
    %v501 = vunpack.c.l.b16 %v106
    %v502 = vunpack.c.l.b16 %v107
    %v503 = vunpack.c.h.b16 %v107
    %v504 = vunpack.c.l.b16 %v108
    %v505 = vunpack.c.l.b16 %v109
    %v506 = vunpack.c.h.b16 %v109
    %v507 = vunpack.c.l.b16 %v110
    %v508 = vunpack.c.l.b16 %v111
    %v509 = vunpack.c.h.b16 %v111
    %v510 = vunpack.c.l.b16 %v112
    %v511 = vunpack.c.l.b16 %v113
    %v512 = vunpack.c.h.b16 %v113
    %v513 = vunpack.c.l.b16 %v114
    %v514 = vunpack.c.l.b16 %v115
    %v515 = vunpack.c.h.b16 %v115
    %v516 = vunpack.c.l.b16 %v116
    %v517 = vunpack.c.l.b16 %v117
    %v518 = vunpack.c.h.b16 %v117
    %v519 = vunpack.c.l.b16 %v118
    %v520 = vunpack.c.l.b16 %v119
    %v521 = vunpack.c.h.b16 %v119
    %v522 = vunpack.c.l.b16 %v120
    %v523 = vpack.c.b16 %v502, %v499
    %v524 = vpack.c.b16 %v503, %v500
    %v525 = vpack.c.b16 %v504, %v501
    %v526 = vpack.c.b16 %v508, %v505
    %v527 = vpack.c.b16 %v509, %v506
    %v528 = vpack.c.b16 %v510, %v507
    %v529 = vpack.c.b16 %v514, %v511
    %v530 = vpack.c.b16 %v515, %v512
    %v531 = vpack.c.b16 %v516, %v513
    %v532 = vpack.c.b16 %v520, %v517
    %v533 = vpack.c.b16 %v521, %v518
    %v534 = vpack.c.b16 %v522, %v519
    %v548 = vsel %vm261, 0, 0
    %550 = vmatprep.subr.bf16.mxu0 %v524
    %551 = vmatpush1.bf16.msra.mxu0 %v523
    %552 = vmatprep.subr.bf16.mxu0 %v527
    %553 = vmatpush1.bf16.msra.mxu0 %v526
    %554 = vmatprep.subr.bf16.mxu0 %v530
    %555 = vmatpush1.bf16.msra.mxu0 %v529
    %556 = vmatprep.subr.bf16.mxu0 %v533
    %557 = vmatpush1.bf16.msra.mxu0 %v532
    %558 = vmatprep.subr.bf16.mxu0 0
    %559 = vmatpush1.bf16.msra.mxu0 0
    %560 = vmatprep.subr.bf16.mxu0 0
    %561 = vmatpush1.bf16.msra.mxu0 0
    %562 = vmatprep.subr.bf16.mxu0 0
    %563 = vmatpush1.bf16.msra.mxu0 0
    %564 = vmatprep.subr.bf16.mxu0 0
    %565 = vmatpush1.bf16.msra.mxu0 0
    %566 = vmatprep.subr.bf16.mxu0 0
    %567 = vmatpush1.bf16.msra.mxu0 0
    %568 = vmatprep.subr.bf16.mxu0 0
    %569 = vmatpush1.bf16.msra.mxu0 0
    %570 = vmatprep.subr.bf16.mxu0 0
    %571 = vmatpush1.bf16.msra.mxu0 0
    %572 = vmatprep.subr.bf16.mxu0 0
    %573 = vmatpush1.bf16.msra.mxu0 0
    %574 = vmatprep.subr.bf16.mxu0 0
    %575 = vmatpush1.bf16.msra.mxu0 0
    %576 = vmatprep.subr.bf16.mxu0 0
    %577 = vmatpush1.bf16.msra.mxu0 0
    %578 = vmatprep.subr.bf16.mxu0 0
    %579 = vmatpush1.bf16.msra.mxu0 0
    %580 = vmatprep.subr.bf16.mxu0 0
    %581 = vmatpush1.bf16.msra.mxu0 0
    %582 = vmatprep.mubr.bf16.mxu0 0
    %583 = vmatmul.mubr.bf16.gmra.mrb[0].mxu0 %v548
    %v584 = vpop.f32.mrb[0].mxu0
    %v585 = vadd.f32 0.0, %v584
    %v586 = vpop.f32.mrb[0].mxu0
    %v587 = vadd.f32 0.0, %v586
    %v588 = vpop.f32.mrb[0].mxu0
    %v589 = vpop.f32.mrb[0].mxu0
    %590 = vdwg.mxu0
    %591 = vmatprep.subr.bf16.mxu0 0
    %592 = vmatpush1.bf16.msra.mxu0 %v525
    %593 = vmatprep.subr.bf16.mxu0 0
    %594 = vmatpush1.bf16.msra.mxu0 %v528
    %595 = vmatprep.subr.bf16.mxu0 0
    %596 = vmatpush1.bf16.msra.mxu0 %v531
    %597 = vmatprep.subr.bf16.mxu0 0
    %598 = vmatpush1.bf16.msra.mxu0 %v534
    %599 = vmatprep.subr.bf16.mxu0 0
    %600 = vmatpush1.bf16.msra.mxu0 0
    %601 = vmatprep.subr.bf16.mxu0 0
    %602 = vmatpush1.bf16.msra.mxu0 0
    %603 = vmatprep.subr.bf16.mxu0 0
    %604 = vmatpush1.bf16.msra.mxu0 0
    %605 = vmatprep.subr.bf16.mxu0 0
    %606 = vmatpush1.bf16.msra.mxu0 0
    %607 = vmatprep.subr.bf16.mxu0 0
    %608 = vmatpush1.bf16.msra.mxu0 0
    %609 = vmatprep.subr.bf16.mxu0 0
    %610 = vmatpush1.bf16.msra.mxu0 0
    %611 = vmatprep.subr.bf16.mxu0 0
    %612 = vmatpush1.bf16.msra.mxu0 0
    %613 = vmatprep.subr.bf16.mxu0 0
    %614 = vmatpush1.bf16.msra.mxu0 0
    %615 = vmatprep.subr.bf16.mxu0 0
    %616 = vmatpush1.bf16.msra.mxu0 0
    %617 = vmatprep.subr.bf16.mxu0 0
    %618 = vmatpush1.bf16.msra.mxu0 0
    %619 = vmatprep.subr.bf16.mxu0 0
    %620 = vmatpush1.bf16.msra.mxu0 0
    %621 = vmatprep.subr.bf16.mxu0 0
    %622 = vmatpush1.bf16.msra.mxu0 0
    %623 = vmatprep.mubr.bf16.mxu0 0
    %624 = vmatmul.mubr.bf16.gmra.mrb[0].mxu0 %v548
    %v625 = vpop.f32.mrb[0].mxu0
    %v626 = vadd.f32 0.0, %v625
    %v627 = vpop.f32.mrb[0].mxu0
    %v628 = vpop.f32.mrb[0].mxu0
    %v629 = vpop.f32.mrb[0].mxu0
    %630 = vdwg.mxu0
    %v633 = vcombine.low %v585, %v587
    %v635 = vadd.f32 %v382, %v633
    %v636 = vxor.u32 %v635, 2147483648
    %v637 = vmul.f32 %v636, 1.442695
    %v638 = vpow.pop %v637
    %v639 = vadd.f32 %v638, 1.0
    %v640 = vrcp.pop %v639
    %v641 = vmul.f32 1.0, %v640
    %v642 = vadd.f32 %v626, %v162
    %v643 = vmul.f32 %v641, %v642
    %v644 = vadd.f32 %v356, %v643
    %v645 = vtanh.pop %v644
    %v647 = vrot.slane %v641, 4
    %v649 = vsub.f32 1.0, %v647
    %v650 = vmul.f32 %v649, %v645
    %v651 = vmul.f32 %v647, 0.0
    %v652 = vadd.f32 %v650, %v651
    %v653 = vmul.f32 %v652, %v419
    %v654 = vsub.f32 1.0, %v419
    %v655 = vmul.f32 %v654, 0.0
    %v656 = vadd.f32 %v653, %v655
    %v659 = vunpack.c.l.s4 1966171168
    %v660 = vunpack.c.0.s8 %v659
    %v661 = vlaneseq
    %v662 = vshrl.u32 %v661, 7
    %v663 = vsub.s32 %v660, %v662
    %v664 = vrot.slane %v656, %v663
    %v665 = vcombine.high %v664, %v664
    %v667 = vunpack.c.l.s4 1966171168
    %v668 = vunpack.c.0.s8 %v667
    %v669 = vlaneseq
    %v670 = vshrl.u32 %v669, 7
    %v671 = vsub.s32 %v668, %v670
    %v672 = vrot.slane %v664, %v671
    %v674 = vunpack.c.l.s4 1966171168
    %v675 = vunpack.c.0.s8 %v674
    %v676 = vlaneseq
    %v677 = vshrl.u32 %v676, 7
    %v678 = vsub.s32 %v675, %v677
    %v679 = vrot.slane %v665, %v678
    %v680 = vcombine.high %v672, %v672
    %v681 = vcombine.high %v679, %v679
    %vm686 = vcmask 516096
    %687 = vst.msk [vmem:[#allocation2] sm:$0x1] %vm686, %v672
    %688 = vst.msk [vmem:[#allocation2 + $0x8] sm:$0x1] %vm686, %v679
    %689 = vst.msk [vmem:[#allocation2 + $0x10] sm:$0x1] %vm686, %v680
    %690 = vst.msk [vmem:[#allocation2 + $0x18] sm:$0x1] %vm686, %v681
    %v691 = vpack.c.bf16 %v656, %v656
    %v693 = vsel %vm261, %v691, 0
    %695 = vmatprep.subr.bf16.mxu0 %v524
    %696 = vmatpush1.bf16.msra.mxu0 %v523
    %697 = vmatprep.subr.bf16.mxu0 %v527
    %698 = vmatpush1.bf16.msra.mxu0 %v526
    %699 = vmatprep.subr.bf16.mxu0 %v530
    %700 = vmatpush1.bf16.msra.mxu0 %v529
    %701 = vmatprep.subr.bf16.mxu0 %v533
    %702 = vmatpush1.bf16.msra.mxu0 %v532
    %703 = vmatprep.subr.bf16.mxu0 0
    %704 = vmatpush1.bf16.msra.mxu0 0
    %705 = vmatprep.subr.bf16.mxu0 0
    %706 = vmatpush1.bf16.msra.mxu0 0
    %707 = vmatprep.subr.bf16.mxu0 0
    %708 = vmatpush1.bf16.msra.mxu0 0
    %709 = vmatprep.subr.bf16.mxu0 0
    %710 = vmatpush1.bf16.msra.mxu0 0
    %711 = vmatprep.subr.bf16.mxu0 0
    %712 = vmatpush1.bf16.msra.mxu0 0
    %713 = vmatprep.subr.bf16.mxu0 0
    %714 = vmatpush1.bf16.msra.mxu0 0
    %715 = vmatprep.subr.bf16.mxu0 0
    %716 = vmatpush1.bf16.msra.mxu0 0
    %717 = vmatprep.subr.bf16.mxu0 0
    %718 = vmatpush1.bf16.msra.mxu0 0
    %719 = vmatprep.subr.bf16.mxu0 0
    %720 = vmatpush1.bf16.msra.mxu0 0
    %721 = vmatprep.subr.bf16.mxu0 0
    %722 = vmatpush1.bf16.msra.mxu0 0
    %723 = vmatprep.subr.bf16.mxu0 0
    %724 = vmatpush1.bf16.msra.mxu0 0
    %725 = vmatprep.subr.bf16.mxu0 0
    %726 = vmatpush1.bf16.msra.mxu0 0
    %727 = vmatprep.mubr.bf16.mxu0 0
    %728 = vmatmul.mubr.bf16.gmra.mrb[0].mxu0 %v693
    %v729 = vpop.f32.mrb[0].mxu0
    %v730 = vadd.f32 0.0, %v729
    %v731 = vpop.f32.mrb[0].mxu0
    %v732 = vadd.f32 0.0, %v731
    %v733 = vpop.f32.mrb[0].mxu0
    %v734 = vpop.f32.mrb[0].mxu0
    %735 = vdwg.mxu0
    %736 = vmatprep.subr.bf16.mxu0 0
    %737 = vmatpush1.bf16.msra.mxu0 %v525
    %738 = vmatprep.subr.bf16.mxu0 0
    %739 = vmatpush1.bf16.msra.mxu0 %v528
    %740 = vmatprep.subr.bf16.mxu0 0
    %741 = vmatpush1.bf16.msra.mxu0 %v531
    %742 = vmatprep.subr.bf16.mxu0 0
    %743 = vmatpush1.bf16.msra.mxu0 %v534
    %744 = vmatprep.subr.bf16.mxu0 0
    %745 = vmatpush1.bf16.msra.mxu0 0
    %746 = vmatprep.subr.bf16.mxu0 0
    %747 = vmatpush1.bf16.msra.mxu0 0
    %748 = vmatprep.subr.bf16.mxu0 0
    %749 = vmatpush1.bf16.msra.mxu0 0
    %750 = vmatprep.subr.bf16.mxu0 0
    %751 = vmatpush1.bf16.msra.mxu0 0
    %752 = vmatprep.subr.bf16.mxu0 0
    %753 = vmatpush1.bf16.msra.mxu0 0
    %754 = vmatprep.subr.bf16.mxu0 0
    %755 = vmatpush1.bf16.msra.mxu0 0
    %756 = vmatprep.subr.bf16.mxu0 0
    %757 = vmatpush1.bf16.msra.mxu0 0
    %758 = vmatprep.subr.bf16.mxu0 0
    %759 = vmatpush1.bf16.msra.mxu0 0
    %760 = vmatprep.subr.bf16.mxu0 0
    %761 = vmatpush1.bf16.msra.mxu0 0
    %762 = vmatprep.subr.bf16.mxu0 0
    %763 = vmatpush1.bf16.msra.mxu0 0
    %764 = vmatprep.subr.bf16.mxu0 0
    %765 = vmatpush1.bf16.msra.mxu0 0
    %766 = vmatprep.subr.bf16.mxu0 0
    %767 = vmatpush1.bf16.msra.mxu0 0
    %768 = vmatprep.mubr.bf16.mxu0 0
    %769 = vmatmul.mubr.bf16.gmra.mrb[0].mxu0 %v693
    %v770 = vpop.f32.mrb[0].mxu0
    %v771 = vadd.f32 0.0, %v770
    %v772 = vpop.f32.mrb[0].mxu0
    %v773 = vpop.f32.mrb[0].mxu0
    %v774 = vpop.f32.mrb[0].mxu0
    %775 = vdwg.mxu0
    %v778 = vcombine.low %v730, %v732
    %v780 = vadd.f32 %v383, %v778
    %v781 = vxor.u32 %v780, 2147483648
    %v782 = vmul.f32 %v781, 1.442695
    %v783 = vpow.pop %v782
    %v784 = vadd.f32 %v783, 1.0
    %v785 = vrcp.pop %v784
    %v786 = vmul.f32 1.0, %v785
    %v787 = vadd.f32 %v771, %v162
    %v788 = vmul.f32 %v786, %v787
    %v789 = vadd.f32 %v384, %v788
    %v790 = vtanh.pop %v789
    %v792 = vrot.slane %v786, 4
    %v794 = vsub.f32 1.0, %v792
    %v795 = vmul.f32 %v794, %v790
    %v796 = vmul.f32 %v792, %v656
    %v797 = vadd.f32 %v795, %v796
    %v798 = vmul.f32 %v797, %v428
    %v799 = vsub.f32 1.0, %v428
    %v800 = vmul.f32 %v656, %v799
    %v801 = vadd.f32 %v798, %v800
    %v804 = vunpack.c.l.s4 1966171168
    %v805 = vunpack.c.0.s8 %v804
    %v806 = vlaneseq
    %v807 = vshrl.u32 %v806, 7
    %v808 = vsub.s32 %v805, %v807
    %v809 = vrot.slane %v801, %v808
    %v810 = vcombine.high %v809, %v809
    %v812 = vunpack.c.l.s4 1966171168
    %v813 = vunpack.c.0.s8 %v812
    %v814 = vlaneseq
    %v815 = vshrl.u32 %v814, 7
    %v816 = vsub.s32 %v813, %v815
    %v817 = vrot.slane %v809, %v816
    %v819 = vunpack.c.l.s4 1966171168
    %v820 = vunpack.c.0.s8 %v819
    %v821 = vlaneseq
    %v822 = vshrl.u32 %v821, 7
    %v823 = vsub.s32 %v820, %v822
    %v824 = vrot.slane %v810, %v823
    %v825 = vcombine.high %v817, %v817
    %v826 = vcombine.high %v824, %v824
    %831 = vst.msk [vmem:[#allocation2 + $0x1] sm:$0x1] %vm686, %v817
    %832 = vst.msk [vmem:[#allocation2 + $0x9] sm:$0x1] %vm686, %v824
    %833 = vst.msk [vmem:[#allocation2 + $0x11] sm:$0x1] %vm686, %v825
    %834 = vst.msk [vmem:[#allocation2 + $0x19] sm:$0x1] %vm686, %v826
    %v835 = vpack.c.bf16 %v801, %v801
    %v837 = vsel %vm261, %v835, 0
    %839 = vmatprep.subr.bf16.mxu0 %v524
    %840 = vmatpush1.bf16.msra.mxu0 %v523
    %841 = vmatprep.subr.bf16.mxu0 %v527
    %842 = vmatpush1.bf16.msra.mxu0 %v526
    %843 = vmatprep.subr.bf16.mxu0 %v530
    %844 = vmatpush1.bf16.msra.mxu0 %v529
    %845 = vmatprep.subr.bf16.mxu0 %v533
    %846 = vmatpush1.bf16.msra.mxu0 %v532
    %847 = vmatprep.subr.bf16.mxu0 0
    %848 = vmatpush1.bf16.msra.mxu0 0
    %849 = vmatprep.subr.bf16.mxu0 0
    %850 = vmatpush1.bf16.msra.mxu0 0
    %851 = vmatprep.subr.bf16.mxu0 0
    %852 = vmatpush1.bf16.msra.mxu0 0
    %853 = vmatprep.subr.bf16.mxu0 0
    %854 = vmatpush1.bf16.msra.mxu0 0
    %855 = vmatprep.subr.bf16.mxu0 0
    %856 = vmatpush1.bf16.msra.mxu0 0
    %857 = vmatprep.subr.bf16.mxu0 0
    %858 = vmatpush1.bf16.msra.mxu0 0
    %859 = vmatprep.subr.bf16.mxu0 0
    %860 = vmatpush1.bf16.msra.mxu0 0
    %861 = vmatprep.subr.bf16.mxu0 0
    %862 = vmatpush1.bf16.msra.mxu0 0
    %863 = vmatprep.subr.bf16.mxu0 0
    %864 = vmatpush1.bf16.msra.mxu0 0
    %865 = vmatprep.subr.bf16.mxu0 0
    %866 = vmatpush1.bf16.msra.mxu0 0
    %867 = vmatprep.subr.bf16.mxu0 0
    %868 = vmatpush1.bf16.msra.mxu0 0
    %869 = vmatprep.subr.bf16.mxu0 0
    %870 = vmatpush1.bf16.msra.mxu0 0
    %871 = vmatprep.mubr.bf16.mxu0 0
    %872 = vmatmul.mubr.bf16.gmra.mrb[0].mxu0 %v837
    %v873 = vpop.f32.mrb[0].mxu0
    %v874 = vadd.f32 0.0, %v873
    %v875 = vpop.f32.mrb[0].mxu0
    %v876 = vadd.f32 0.0, %v875
    %v877 = vpop.f32.mrb[0].mxu0
    %v878 = vpop.f32.mrb[0].mxu0
    %879 = vdwg.mxu0
    %880 = vmatprep.subr.bf16.mxu0 0
    %881 = vmatpush1.bf16.msra.mxu0 %v525
    %882 = vmatprep.subr.bf16.mxu0 0
    %883 = vmatpush1.bf16.msra.mxu0 %v528
    %884 = vmatprep.subr.bf16.mxu0 0
    %885 = vmatpush1.bf16.msra.mxu0 %v531
    %886 = vmatprep.subr.bf16.mxu0 0
    %887 = vmatpush1.bf16.msra.mxu0 %v534
    %888 = vmatprep.subr.bf16.mxu0 0
    %889 = vmatpush1.bf16.msra.mxu0 0
    %890 = vmatprep.subr.bf16.mxu0 0
    %891 = vmatpush1.bf16.msra.mxu0 0
    %892 = vmatprep.subr.bf16.mxu0 0
    %893 = vmatpush1.bf16.msra.mxu0 0
    %894 = vmatprep.subr.bf16.mxu0 0
    %895 = vmatpush1.bf16.msra.mxu0 0
    %896 = vmatprep.subr.bf16.mxu0 0
    %897 = vmatpush1.bf16.msra.mxu0 0
    %898 = vmatprep.subr.bf16.mxu0 0
    %899 = vmatpush1.bf16.msra.mxu0 0
    %900 = vmatprep.subr.bf16.mxu0 0
    %901 = vmatpush1.bf16.msra.mxu0 0
    %902 = vmatprep.subr.bf16.mxu0 0
    %903 = vmatpush1.bf16.msra.mxu0 0
    %904 = vmatprep.subr.bf16.mxu0 0
    %905 = vmatpush1.bf16.msra.mxu0 0
    %906 = vmatprep.subr.bf16.mxu0 0
    %907 = vmatpush1.bf16.msra.mxu0 0
    %908 = vmatprep.subr.bf16.mxu0 0
    %909 = vmatpush1.bf16.msra.mxu0 0
    %910 = vmatprep.subr.bf16.mxu0 0
    %911 = vmatpush1.bf16.msra.mxu0 0
    %912 = vmatprep.mubr.bf16.mxu0 0
    %913 = vmatmul.mubr.bf16.gmra.mrb[0].mxu0 %v837
    %v914 = vpop.f32.mrb[0].mxu0
    %v915 = vadd.f32 0.0, %v914
    %v916 = vpop.f32.mrb[0].mxu0
    %v917 = vpop.f32.mrb[0].mxu0
    %v918 = vpop.f32.mrb[0].mxu0
    %919 = vdwg.mxu0
    %v922 = vcombine.low %v874, %v876
    %v924 = vadd.f32 %v385, %v922
    %v925 = vxor.u32 %v924, 2147483648
    %v926 = vmul.f32 %v925, 1.442695
    %v927 = vpow.pop %v926
    %v928 = vadd.f32 %v927, 1.0
    %v929 = vrcp.pop %v928
    %v930 = vmul.f32 1.0, %v929
    %v931 = vadd.f32 %v915, %v162
    %v932 = vmul.f32 %v930, %v931
    %v933 = vadd.f32 %v359, %v932
    %v934 = vtanh.pop %v933
    %v936 = vrot.slane %v930, 4
    %v938 = vsub.f32 1.0, %v936
    %v939 = vmul.f32 %v938, %v934
    %v940 = vmul.f32 %v936, %v801
    %v941 = vadd.f32 %v939, %v940
    %v942 = vmul.f32 %v941, %v437
    %v943 = vsub.f32 1.0, %v437
    %v944 = vmul.f32 %v801, %v943
    %v945 = vadd.f32 %v942, %v944
    %v948 = vunpack.c.l.s4 1966171168
    %v949 = vunpack.c.0.s8 %v948
    %v950 = vlaneseq
    %v951 = vshrl.u32 %v950, 7
    %v952 = vsub.s32 %v949, %v951
    %v953 = vrot.slane %v945, %v952
    %v954 = vcombine.high %v953, %v953
    %v956 = vunpack.c.l.s4 1966171168
    %v957 = vunpack.c.0.s8 %v956
    %v958 = vlaneseq
    %v959 = vshrl.u32 %v958, 7
    %v960 = vsub.s32 %v957, %v959
    %v961 = vrot.slane %v953, %v960
    %v963 = vunpack.c.l.s4 1966171168
    %v964 = vunpack.c.0.s8 %v963
    %v965 = vlaneseq
    %v966 = vshrl.u32 %v965, 7
    %v967 = vsub.s32 %v964, %v966
    %v968 = vrot.slane %v954, %v967
    %v969 = vcombine.high %v961, %v961
    %v970 = vcombine.high %v968, %v968
    %975 = vst.msk [vmem:[#allocation2 + $0x2] sm:$0x1] %vm686, %v961
    %976 = vst.msk [vmem:[#allocation2 + $0xa] sm:$0x1] %vm686, %v968
    %977 = vst.msk [vmem:[#allocation2 + $0x12] sm:$0x1] %vm686, %v969
    %978 = vst.msk [vmem:[#allocation2 + $0x1a] sm:$0x1] %vm686, %v970
    %v979 = vpack.c.bf16 %v945, %v945
    %v981 = vsel %vm261, %v979, 0
    %983 = vmatprep.subr.bf16.mxu0 %v524
    %984 = vmatpush1.bf16.msra.mxu0 %v523
    %985 = vmatprep.subr.bf16.mxu0 %v527
    %986 = vmatpush1.bf16.msra.mxu0 %v526
    %987 = vmatprep.subr.bf16.mxu0 %v530
    %988 = vmatpush1.bf16.msra.mxu0 %v529
    %989 = vmatprep.subr.bf16.mxu0 %v533
    %990 = vmatpush1.bf16.msra.mxu0 %v532
    %991 = vmatprep.subr.bf16.mxu0 0
    %992 = vmatpush1.bf16.msra.mxu0 0
    %993 = vmatprep.subr.bf16.mxu0 0
    %994 = vmatpush1.bf16.msra.mxu0 0
    %995 = vmatprep.subr.bf16.mxu0 0
    %996 = vmatpush1.bf16.msra.mxu0 0
    %997 = vmatprep.subr.bf16.mxu0 0
    %998 = vmatpush1.bf16.msra.mxu0 0
    %999 = vmatprep.subr.bf16.mxu0 0
    %1000 = vmatpush1.bf16.msra.mxu0 0
    %1001 = vmatprep.subr.bf16.mxu0 0
    %1002 = vmatpush1.bf16.msra.mxu0 0
    %1003 = vmatprep.subr.bf16.mxu0 0
    %1004 = vmatpush1.bf16.msra.mxu0 0
    %1005 = vmatprep.subr.bf16.mxu0 0
    %1006 = vmatpush1.bf16.msra.mxu0 0
    %1007 = vmatprep.subr.bf16.mxu0 0
    %1008 = vmatpush1.bf16.msra.mxu0 0
    %1009 = vmatprep.subr.bf16.mxu0 0
    %1010 = vmatpush1.bf16.msra.mxu0 0
    %1011 = vmatprep.subr.bf16.mxu0 0
    %1012 = vmatpush1.bf16.msra.mxu0 0
    %1013 = vmatprep.subr.bf16.mxu0 0
    %1014 = vmatpush1.bf16.msra.mxu0 0
    %1015 = vmatprep.mubr.bf16.mxu0 0
    %1016 = vmatmul.mubr.bf16.gmra.mrb[0].mxu0 %v981
    %v1017 = vpop.f32.mrb[0].mxu0
    %v1018 = vadd.f32 0.0, %v1017
    %v1019 = vpop.f32.mrb[0].mxu0
    %v1020 = vadd.f32 0.0, %v1019
    %v1021 = vpop.f32.mrb[0].mxu0
    %v1022 = vpop.f32.mrb[0].mxu0
    %1023 = vdwg.mxu0
    %1024 = vmatprep.subr.bf16.mxu0 0
    %1025 = vmatpush1.bf16.msra.mxu0 %v525
    %1026 = vmatprep.subr.bf16.mxu0 0
    %1027 = vmatpush1.bf16.msra.mxu0 %v528
    %1028 = vmatprep.subr.bf16.mxu0 0
    %1029 = vmatpush1.bf16.msra.mxu0 %v531
    %1030 = vmatprep.subr.bf16.mxu0 0
    %1031 = vmatpush1.bf16.msra.mxu0 %v534
    %1032 = vmatprep.subr.bf16.mxu0 0
    %1033 = vmatpush1.bf16.msra.mxu0 0
    %1034 = vmatprep.subr.bf16.mxu0 0
    %1035 = vmatpush1.bf16.msra.mxu0 0
    %1036 = vmatprep.subr.bf16.mxu0 0
    %1037 = vmatpush1.bf16.msra.mxu0 0
    %1038 = vmatprep.subr.bf16.mxu0 0
    %1039 = vmatpush1.bf16.msra.mxu0 0
    %1040 = vmatprep.subr.bf16.mxu0 0
    %1041 = vmatpush1.bf16.msra.mxu0 0
    %1042 = vmatprep.subr.bf16.mxu0 0
    %1043 = vmatpush1.bf16.msra.mxu0 0
    %1044 = vmatprep.subr.bf16.mxu0 0
    %1045 = vmatpush1.bf16.msra.mxu0 0
    %1046 = vmatprep.subr.bf16.mxu0 0
    %1047 = vmatpush1.bf16.msra.mxu0 0
    %1048 = vmatprep.subr.bf16.mxu0 0
    %1049 = vmatpush1.bf16.msra.mxu0 0
    %1050 = vmatprep.subr.bf16.mxu0 0
    %1051 = vmatpush1.bf16.msra.mxu0 0
    %1052 = vmatprep.subr.bf16.mxu0 0
    %1053 = vmatpush1.bf16.msra.mxu0 0
    %1054 = vmatprep.subr.bf16.mxu0 0
    %1055 = vmatpush1.bf16.msra.mxu0 0
    %1056 = vmatprep.mubr.bf16.mxu0 0
    %1057 = vmatmul.mubr.bf16.gmra.mrb[0].mxu0 %v981
    %v1058 = vpop.f32.mrb[0].mxu0
    %v1059 = vadd.f32 0.0, %v1058
    %v1060 = vpop.f32.mrb[0].mxu0
    %v1061 = vpop.f32.mrb[0].mxu0
    %v1062 = vpop.f32.mrb[0].mxu0
    %1063 = vdwg.mxu0
    %v1066 = vcombine.low %v1018, %v1020
    %v1068 = vadd.f32 %v386, %v1066
    %v1069 = vxor.u32 %v1068, 2147483648
    %v1070 = vmul.f32 %v1069, 1.442695
    %v1071 = vpow.pop %v1070
    %v1072 = vadd.f32 %v1071, 1.0
    %v1073 = vrcp.pop %v1072
    %v1074 = vmul.f32 1.0, %v1073
    %v1075 = vadd.f32 %v1059, %v162
    %v1076 = vmul.f32 %v1074, %v1075
    %v1077 = vadd.f32 %v387, %v1076
    %v1078 = vtanh.pop %v1077
    %v1080 = vrot.slane %v1074, 4
    %v1082 = vsub.f32 1.0, %v1080
    %v1083 = vmul.f32 %v1082, %v1078
    %v1084 = vmul.f32 %v1080, %v945
    %v1085 = vadd.f32 %v1083, %v1084
    %v1086 = vmul.f32 %v1085, %v446
    %v1087 = vsub.f32 1.0, %v446
    %v1088 = vmul.f32 %v945, %v1087
    %v1089 = vadd.f32 %v1086, %v1088
    %v1092 = vunpack.c.l.s4 1966171168
    %v1093 = vunpack.c.0.s8 %v1092
    %v1094 = vlaneseq
    %v1095 = vshrl.u32 %v1094, 7
    %v1096 = vsub.s32 %v1093, %v1095
    %v1097 = vrot.slane %v1089, %v1096
    %v1098 = vcombine.high %v1097, %v1097
    %v1100 = vunpack.c.l.s4 1966171168
    %v1101 = vunpack.c.0.s8 %v1100
    %v1102 = vlaneseq
    %v1103 = vshrl.u32 %v1102, 7
    %v1104 = vsub.s32 %v1101, %v1103
    %v1105 = vrot.slane %v1097, %v1104
    %v1107 = vunpack.c.l.s4 1966171168
    %v1108 = vunpack.c.0.s8 %v1107
    %v1109 = vlaneseq
    %v1110 = vshrl.u32 %v1109, 7
    %v1111 = vsub.s32 %v1108, %v1110
    %v1112 = vrot.slane %v1098, %v1111
    %v1113 = vcombine.high %v1105, %v1105
    %v1114 = vcombine.high %v1112, %v1112
    %1119 = vst.msk [vmem:[#allocation2 + $0x3] sm:$0x1] %vm686, %v1105
    %1120 = vst.msk [vmem:[#allocation2 + $0xb] sm:$0x1] %vm686, %v1112
    %1121 = vst.msk [vmem:[#allocation2 + $0x13] sm:$0x1] %vm686, %v1113
    %1122 = vst.msk [vmem:[#allocation2 + $0x1b] sm:$0x1] %vm686, %v1114
    %v1123 = vpack.c.bf16 %v1089, %v1089
    %v1125 = vsel %vm261, %v1123, 0
    %1127 = vmatprep.subr.bf16.mxu0 %v524
    %1128 = vmatpush1.bf16.msra.mxu0 %v523
    %1129 = vmatprep.subr.bf16.mxu0 %v527
    %1130 = vmatpush1.bf16.msra.mxu0 %v526
    %1131 = vmatprep.subr.bf16.mxu0 %v530
    %1132 = vmatpush1.bf16.msra.mxu0 %v529
    %1133 = vmatprep.subr.bf16.mxu0 %v533
    %1134 = vmatpush1.bf16.msra.mxu0 %v532
    %1135 = vmatprep.subr.bf16.mxu0 0
    %1136 = vmatpush1.bf16.msra.mxu0 0
    %1137 = vmatprep.subr.bf16.mxu0 0
    %1138 = vmatpush1.bf16.msra.mxu0 0
    %1139 = vmatprep.subr.bf16.mxu0 0
    %1140 = vmatpush1.bf16.msra.mxu0 0
    %1141 = vmatprep.subr.bf16.mxu0 0
    %1142 = vmatpush1.bf16.msra.mxu0 0
    %1143 = vmatprep.subr.bf16.mxu0 0
    %1144 = vmatpush1.bf16.msra.mxu0 0
    %1145 = vmatprep.subr.bf16.mxu0 0
    %1146 = vmatpush1.bf16.msra.mxu0 0
    %1147 = vmatprep.subr.bf16.mxu0 0
    %1148 = vmatpush1.bf16.msra.mxu0 0
    %1149 = vmatprep.subr.bf16.mxu0 0
    %1150 = vmatpush1.bf16.msra.mxu0 0
    %1151 = vmatprep.subr.bf16.mxu0 0
    %1152 = vmatpush1.bf16.msra.mxu0 0
    %1153 = vmatprep.subr.bf16.mxu0 0
    %1154 = vmatpush1.bf16.msra.mxu0 0
    %1155 = vmatprep.subr.bf16.mxu0 0
    %1156 = vmatpush1.bf16.msra.mxu0 0
    %1157 = vmatprep.subr.bf16.mxu0 0
    %1158 = vmatpush1.bf16.msra.mxu0 0
    %1159 = vmatprep.mubr.bf16.mxu0 0
    %1160 = vmatmul.mubr.bf16.gmra.mrb[0].mxu0 %v1125
    %v1161 = vpop.f32.mrb[0].mxu0
    %v1162 = vadd.f32 0.0, %v1161
    %v1163 = vpop.f32.mrb[0].mxu0
    %v1164 = vadd.f32 0.0, %v1163
    %v1165 = vpop.f32.mrb[0].mxu0
    %v1166 = vpop.f32.mrb[0].mxu0
    %1167 = vdwg.mxu0
    %1168 = vmatprep.subr.bf16.mxu0 0
    %1169 = vmatpush1.bf16.msra.mxu0 %v525
    %1170 = vmatprep.subr.bf16.mxu0 0
    %1171 = vmatpush1.bf16.msra.mxu0 %v528
    %1172 = vmatprep.subr.bf16.mxu0 0
    %1173 = vmatpush1.bf16.msra.mxu0 %v531
    %1174 = vmatprep.subr.bf16.mxu0 0
    %1175 = vmatpush1.bf16.msra.mxu0 %v534
    %1176 = vmatprep.subr.bf16.mxu0 0
    %1177 = vmatpush1.bf16.msra.mxu0 0
    %1178 = vmatprep.subr.bf16.mxu0 0
    %1179 = vmatpush1.bf16.msra.mxu0 0
    %1180 = vmatprep.subr.bf16.mxu0 0
    %1181 = vmatpush1.bf16.msra.mxu0 0
    %1182 = vmatprep.subr.bf16.mxu0 0
    %1183 = vmatpush1.bf16.msra.mxu0 0
    %1184 = vmatprep.subr.bf16.mxu0 0
    %1185 = vmatpush1.bf16.msra.mxu0 0
    %1186 = vmatprep.subr.bf16.mxu0 0
    %1187 = vmatpush1.bf16.msra.mxu0 0
    %1188 = vmatprep.subr.bf16.mxu0 0
    %1189 = vmatpush1.bf16.msra.mxu0 0
    %1190 = vmatprep.subr.bf16.mxu0 0
    %1191 = vmatpush1.bf16.msra.mxu0 0
    %1192 = vmatprep.subr.bf16.mxu0 0
    %1193 = vmatpush1.bf16.msra.mxu0 0
    %1194 = vmatprep.subr.bf16.mxu0 0
    %1195 = vmatpush1.bf16.msra.mxu0 0
    %1196 = vmatprep.subr.bf16.mxu0 0
    %1197 = vmatpush1.bf16.msra.mxu0 0
    %1198 = vmatprep.subr.bf16.mxu0 0
    %1199 = vmatpush1.bf16.msra.mxu0 0
    %1200 = vmatprep.mubr.bf16.mxu0 0
    %1201 = vmatmul.mubr.bf16.gmra.mrb[0].mxu0 %v1125
    %v1202 = vpop.f32.mrb[0].mxu0
    %v1203 = vadd.f32 0.0, %v1202
    %v1204 = vpop.f32.mrb[0].mxu0
    %v1205 = vpop.f32.mrb[0].mxu0
    %v1206 = vpop.f32.mrb[0].mxu0
    %1207 = vdwg.mxu0
    %v1210 = vcombine.low %v1162, %v1164
    %v1212 = vadd.f32 %v388, %v1210
    %v1213 = vxor.u32 %v1212, 2147483648
    %v1214 = vmul.f32 %v1213, 1.442695
    %v1215 = vpow.pop %v1214
    %v1216 = vadd.f32 %v1215, 1.0
    %v1217 = vrcp.pop %v1216
    %v1218 = vmul.f32 1.0, %v1217
    %v1219 = vadd.f32 %v1203, %v162
    %v1220 = vmul.f32 %v1218, %v1219
    %v1221 = vadd.f32 %v364, %v1220
    %v1222 = vtanh.pop %v1221
    %v1224 = vrot.slane %v1218, 4
    %v1226 = vsub.f32 1.0, %v1224
    %v1227 = vmul.f32 %v1226, %v1222
    %v1228 = vmul.f32 %v1224, %v1089
    %v1229 = vadd.f32 %v1227, %v1228
    %v1230 = vmul.f32 %v1229, %v455
    %v1231 = vsub.f32 1.0, %v455
    %v1232 = vmul.f32 %v1089, %v1231
    %v1233 = vadd.f32 %v1230, %v1232
    %v1236 = vunpack.c.l.s4 1966171168
    %v1237 = vunpack.c.0.s8 %v1236
    %v1238 = vlaneseq
    %v1239 = vshrl.u32 %v1238, 7
    %v1240 = vsub.s32 %v1237, %v1239
    %v1241 = vrot.slane %v1233, %v1240
    %v1242 = vcombine.high %v1241, %v1241
    %v1244 = vunpack.c.l.s4 1966171168
    %v1245 = vunpack.c.0.s8 %v1244
    %v1246 = vlaneseq
    %v1247 = vshrl.u32 %v1246, 7
    %v1248 = vsub.s32 %v1245, %v1247
    %v1249 = vrot.slane %v1241, %v1248
    %v1251 = vunpack.c.l.s4 1966171168
    %v1252 = vunpack.c.0.s8 %v1251
    %v1253 = vlaneseq
    %v1254 = vshrl.u32 %v1253, 7
    %v1255 = vsub.s32 %v1252, %v1254
    %v1256 = vrot.slane %v1242, %v1255
    %v1257 = vcombine.high %v1249, %v1249
    %v1258 = vcombine.high %v1256, %v1256
    %1263 = vst.msk [vmem:[#allocation2 + $0x4] sm:$0x1] %vm686, %v1249
    %1264 = vst.msk [vmem:[#allocation2 + $0xc] sm:$0x1] %vm686, %v1256
    %1265 = vst.msk [vmem:[#allocation2 + $0x14] sm:$0x1] %vm686, %v1257
    %1266 = vst.msk [vmem:[#allocation2 + $0x1c] sm:$0x1] %vm686, %v1258
    %v1267 = vpack.c.bf16 %v1233, %v1233
    %v1269 = vsel %vm261, %v1267, 0
    %1271 = vmatprep.subr.bf16.mxu0 %v524
    %1272 = vmatpush1.bf16.msra.mxu0 %v523
    %1273 = vmatprep.subr.bf16.mxu0 %v527
    %1274 = vmatpush1.bf16.msra.mxu0 %v526
    %1275 = vmatprep.subr.bf16.mxu0 %v530
    %1276 = vmatpush1.bf16.msra.mxu0 %v529
    %1277 = vmatprep.subr.bf16.mxu0 %v533
    %1278 = vmatpush1.bf16.msra.mxu0 %v532
    %1279 = vmatprep.subr.bf16.mxu0 0
    %1280 = vmatpush1.bf16.msra.mxu0 0
    %1281 = vmatprep.subr.bf16.mxu0 0
    %1282 = vmatpush1.bf16.msra.mxu0 0
    %1283 = vmatprep.subr.bf16.mxu0 0
    %1284 = vmatpush1.bf16.msra.mxu0 0
    %1285 = vmatprep.subr.bf16.mxu0 0
    %1286 = vmatpush1.bf16.msra.mxu0 0
    %1287 = vmatprep.subr.bf16.mxu0 0
    %1288 = vmatpush1.bf16.msra.mxu0 0
    %1289 = vmatprep.subr.bf16.mxu0 0
    %1290 = vmatpush1.bf16.msra.mxu0 0
    %1291 = vmatprep.subr.bf16.mxu0 0
    %1292 = vmatpush1.bf16.msra.mxu0 0
    %1293 = vmatprep.subr.bf16.mxu0 0
    %1294 = vmatpush1.bf16.msra.mxu0 0
    %1295 = vmatprep.subr.bf16.mxu0 0
    %1296 = vmatpush1.bf16.msra.mxu0 0
    %1297 = vmatprep.subr.bf16.mxu0 0
    %1298 = vmatpush1.bf16.msra.mxu0 0
    %1299 = vmatprep.subr.bf16.mxu0 0
    %1300 = vmatpush1.bf16.msra.mxu0 0
    %1301 = vmatprep.subr.bf16.mxu0 0
    %1302 = vmatpush1.bf16.msra.mxu0 0
    %1303 = vmatprep.mubr.bf16.mxu0 0
    %1304 = vmatmul.mubr.bf16.gmra.mrb[0].mxu0 %v1269
    %v1305 = vpop.f32.mrb[0].mxu0
    %v1306 = vadd.f32 0.0, %v1305
    %v1307 = vpop.f32.mrb[0].mxu0
    %v1308 = vadd.f32 0.0, %v1307
    %v1309 = vpop.f32.mrb[0].mxu0
    %v1310 = vpop.f32.mrb[0].mxu0
    %1311 = vdwg.mxu0
    %1312 = vmatprep.subr.bf16.mxu0 0
    %1313 = vmatpush1.bf16.msra.mxu0 %v525
    %1314 = vmatprep.subr.bf16.mxu0 0
    %1315 = vmatpush1.bf16.msra.mxu0 %v528
    %1316 = vmatprep.subr.bf16.mxu0 0
    %1317 = vmatpush1.bf16.msra.mxu0 %v531
    %1318 = vmatprep.subr.bf16.mxu0 0
    %1319 = vmatpush1.bf16.msra.mxu0 %v534
    %1320 = vmatprep.subr.bf16.mxu0 0
    %1321 = vmatpush1.bf16.msra.mxu0 0
    %1322 = vmatprep.subr.bf16.mxu0 0
    %1323 = vmatpush1.bf16.msra.mxu0 0
    %1324 = vmatprep.subr.bf16.mxu0 0
    %1325 = vmatpush1.bf16.msra.mxu0 0
    %1326 = vmatprep.subr.bf16.mxu0 0
    %1327 = vmatpush1.bf16.msra.mxu0 0
    %1328 = vmatprep.subr.bf16.mxu0 0
    %1329 = vmatpush1.bf16.msra.mxu0 0
    %1330 = vmatprep.subr.bf16.mxu0 0
    %1331 = vmatpush1.bf16.msra.mxu0 0
    %1332 = vmatprep.subr.bf16.mxu0 0
    %1333 = vmatpush1.bf16.msra.mxu0 0
    %1334 = vmatprep.subr.bf16.mxu0 0
    %1335 = vmatpush1.bf16.msra.mxu0 0
    %1336 = vmatprep.subr.bf16.mxu0 0
    %1337 = vmatpush1.bf16.msra.mxu0 0
    %1338 = vmatprep.subr.bf16.mxu0 0
    %1339 = vmatpush1.bf16.msra.mxu0 0
    %1340 = vmatprep.subr.bf16.mxu0 0
    %1341 = vmatpush1.bf16.msra.mxu0 0
    %1342 = vmatprep.subr.bf16.mxu0 0
    %1343 = vmatpush1.bf16.msra.mxu0 0
    %1344 = vmatprep.mubr.bf16.mxu0 0
    %1345 = vmatmul.mubr.bf16.gmra.mrb[0].mxu0 %v1269
    %v1346 = vpop.f32.mrb[0].mxu0
    %v1347 = vadd.f32 0.0, %v1346
    %v1348 = vpop.f32.mrb[0].mxu0
    %v1349 = vpop.f32.mrb[0].mxu0
    %v1350 = vpop.f32.mrb[0].mxu0
    %1351 = vdwg.mxu0
    %v1354 = vcombine.low %v1306, %v1308
    %v1356 = vadd.f32 %v389, %v1354
    %v1357 = vxor.u32 %v1356, 2147483648
    %v1358 = vmul.f32 %v1357, 1.442695
    %v1359 = vpow.pop %v1358
    %v1360 = vadd.f32 %v1359, 1.0
    %v1361 = vrcp.pop %v1360
    %v1362 = vmul.f32 1.0, %v1361
    %v1363 = vadd.f32 %v1347, %v162
    %v1364 = vmul.f32 %v1362, %v1363
    %v1365 = vadd.f32 %v390, %v1364
    %v1366 = vtanh.pop %v1365
    %v1368 = vrot.slane %v1362, 4
    %v1370 = vsub.f32 1.0, %v1368
    %v1371 = vmul.f32 %v1370, %v1366
    %v1372 = vmul.f32 %v1368, %v1233
    %v1373 = vadd.f32 %v1371, %v1372
    %v1374 = vmul.f32 %v1373, %v464
    %v1375 = vsub.f32 1.0, %v464
    %v1376 = vmul.f32 %v1233, %v1375
    %v1377 = vadd.f32 %v1374, %v1376
    %v1380 = vunpack.c.l.s4 1966171168
    %v1381 = vunpack.c.0.s8 %v1380
    %v1382 = vlaneseq
    %v1383 = vshrl.u32 %v1382, 7
    %v1384 = vsub.s32 %v1381, %v1383
    %v1385 = vrot.slane %v1377, %v1384
    %v1386 = vcombine.high %v1385, %v1385
    %v1388 = vunpack.c.l.s4 1966171168
    %v1389 = vunpack.c.0.s8 %v1388
    %v1390 = vlaneseq
    %v1391 = vshrl.u32 %v1390, 7
    %v1392 = vsub.s32 %v1389, %v1391
    %v1393 = vrot.slane %v1385, %v1392
    %v1395 = vunpack.c.l.s4 1966171168
    %v1396 = vunpack.c.0.s8 %v1395
    %v1397 = vlaneseq
    %v1398 = vshrl.u32 %v1397, 7
    %v1399 = vsub.s32 %v1396, %v1398
    %v1400 = vrot.slane %v1386, %v1399
    %v1401 = vcombine.high %v1393, %v1393
    %v1402 = vcombine.high %v1400, %v1400
    %1407 = vst.msk [vmem:[#allocation2 + $0x5] sm:$0x1] %vm686, %v1393
    %1408 = vst.msk [vmem:[#allocation2 + $0xd] sm:$0x1] %vm686, %v1400
    %1409 = vst.msk [vmem:[#allocation2 + $0x15] sm:$0x1] %vm686, %v1401
    %1410 = vst.msk [vmem:[#allocation2 + $0x1d] sm:$0x1] %vm686, %v1402
    %v1411 = vpack.c.bf16 %v1377, %v1377
    %v1413 = vsel %vm261, %v1411, 0
    %1415 = vmatprep.subr.bf16.mxu0 %v524
    %1416 = vmatpush1.bf16.msra.mxu0 %v523
    %1417 = vmatprep.subr.bf16.mxu0 %v527
    %1418 = vmatpush1.bf16.msra.mxu0 %v526
    %1419 = vmatprep.subr.bf16.mxu0 %v530
    %1420 = vmatpush1.bf16.msra.mxu0 %v529
    %1421 = vmatprep.subr.bf16.mxu0 %v533
    %1422 = vmatpush1.bf16.msra.mxu0 %v532
    %1423 = vmatprep.subr.bf16.mxu0 0
    %1424 = vmatpush1.bf16.msra.mxu0 0
    %1425 = vmatprep.subr.bf16.mxu0 0
    %1426 = vmatpush1.bf16.msra.mxu0 0
    %1427 = vmatprep.subr.bf16.mxu0 0
    %1428 = vmatpush1.bf16.msra.mxu0 0
    %1429 = vmatprep.subr.bf16.mxu0 0
    %1430 = vmatpush1.bf16.msra.mxu0 0
    %1431 = vmatprep.subr.bf16.mxu0 0
    %1432 = vmatpush1.bf16.msra.mxu0 0
    %1433 = vmatprep.subr.bf16.mxu0 0
    %1434 = vmatpush1.bf16.msra.mxu0 0
    %1435 = vmatprep.subr.bf16.mxu0 0
    %1436 = vmatpush1.bf16.msra.mxu0 0
    %1437 = vmatprep.subr.bf16.mxu0 0
    %1438 = vmatpush1.bf16.msra.mxu0 0
    %1439 = vmatprep.subr.bf16.mxu0 0
    %1440 = vmatpush1.bf16.msra.mxu0 0
    %1441 = vmatprep.subr.bf16.mxu0 0
    %1442 = vmatpush1.bf16.msra.mxu0 0
    %1443 = vmatprep.subr.bf16.mxu0 0
    %1444 = vmatpush1.bf16.msra.mxu0 0
    %1445 = vmatprep.subr.bf16.mxu0 0
    %1446 = vmatpush1.bf16.msra.mxu0 0
    %1447 = vmatprep.mubr.bf16.mxu0 0
    %1448 = vmatmul.mubr.bf16.gmra.mrb[0].mxu0 %v1413
    %v1449 = vpop.f32.mrb[0].mxu0
    %v1450 = vadd.f32 0.0, %v1449
    %v1451 = vpop.f32.mrb[0].mxu0
    %v1452 = vadd.f32 0.0, %v1451
    %v1453 = vpop.f32.mrb[0].mxu0
    %v1454 = vpop.f32.mrb[0].mxu0
    %1455 = vdwg.mxu0
    %1456 = vmatprep.subr.bf16.mxu0 0
    %1457 = vmatpush1.bf16.msra.mxu0 %v525
    %1458 = vmatprep.subr.bf16.mxu0 0
    %1459 = vmatpush1.bf16.msra.mxu0 %v528
    %1460 = vmatprep.subr.bf16.mxu0 0
    %1461 = vmatpush1.bf16.msra.mxu0 %v531
    %1462 = vmatprep.subr.bf16.mxu0 0
    %1463 = vmatpush1.bf16.msra.mxu0 %v534
    %1464 = vmatprep.subr.bf16.mxu0 0
    %1465 = vmatpush1.bf16.msra.mxu0 0
    %1466 = vmatprep.subr.bf16.mxu0 0
    %1467 = vmatpush1.bf16.msra.mxu0 0
    %1468 = vmatprep.subr.bf16.mxu0 0
    %1469 = vmatpush1.bf16.msra.mxu0 0
    %1470 = vmatprep.subr.bf16.mxu0 0
    %1471 = vmatpush1.bf16.msra.mxu0 0
    %1472 = vmatprep.subr.bf16.mxu0 0
    %1473 = vmatpush1.bf16.msra.mxu0 0
    %1474 = vmatprep.subr.bf16.mxu0 0
    %1475 = vmatpush1.bf16.msra.mxu0 0
    %1476 = vmatprep.subr.bf16.mxu0 0
    %1477 = vmatpush1.bf16.msra.mxu0 0
    %1478 = vmatprep.subr.bf16.mxu0 0
    %1479 = vmatpush1.bf16.msra.mxu0 0
    %1480 = vmatprep.subr.bf16.mxu0 0
    %1481 = vmatpush1.bf16.msra.mxu0 0
    %1482 = vmatprep.subr.bf16.mxu0 0
    %1483 = vmatpush1.bf16.msra.mxu0 0
    %1484 = vmatprep.subr.bf16.mxu0 0
    %1485 = vmatpush1.bf16.msra.mxu0 0
    %1486 = vmatprep.subr.bf16.mxu0 0
    %1487 = vmatpush1.bf16.msra.mxu0 0
    %1488 = vmatprep.mubr.bf16.mxu0 0
    %1489 = vmatmul.mubr.bf16.gmra.mrb[0].mxu0 %v1413
    %v1490 = vpop.f32.mrb[0].mxu0
    %v1491 = vadd.f32 0.0, %v1490
    %v1492 = vpop.f32.mrb[0].mxu0
    %v1493 = vpop.f32.mrb[0].mxu0
    %v1494 = vpop.f32.mrb[0].mxu0
    %1495 = vdwg.mxu0
    %v1498 = vcombine.low %v1450, %v1452
    %v1500 = vadd.f32 %v391, %v1498
    %v1501 = vxor.u32 %v1500, 2147483648
    %v1502 = vmul.f32 %v1501, 1.442695
    %v1503 = vpow.pop %v1502
    %v1504 = vadd.f32 %v1503, 1.0
    %v1505 = vrcp.pop %v1504
    %v1506 = vmul.f32 1.0, %v1505
    %v1507 = vadd.f32 %v1491, %v162
    %v1508 = vmul.f32 %v1506, %v1507
    %v1509 = vadd.f32 %v367, %v1508
    %v1510 = vtanh.pop %v1509
    %v1512 = vrot.slane %v1506, 4
    %v1514 = vsub.f32 1.0, %v1512
    %v1515 = vmul.f32 %v1514, %v1510
    %v1516 = vmul.f32 %v1512, %v1377
    %v1517 = vadd.f32 %v1515, %v1516
    %v1518 = vmul.f32 %v1517, %v473
    %v1519 = vsub.f32 1.0, %v473
    %v1520 = vmul.f32 %v1377, %v1519
    %v1521 = vadd.f32 %v1518, %v1520
    %v1524 = vunpack.c.l.s4 1966171168
    %v1525 = vunpack.c.0.s8 %v1524
    %v1526 = vlaneseq
    %v1527 = vshrl.u32 %v1526, 7
    %v1528 = vsub.s32 %v1525, %v1527
    %v1529 = vrot.slane %v1521, %v1528
    %v1530 = vcombine.high %v1529, %v1529
    %v1532 = vunpack.c.l.s4 1966171168
    %v1533 = vunpack.c.0.s8 %v1532
    %v1534 = vlaneseq
    %v1535 = vshrl.u32 %v1534, 7
    %v1536 = vsub.s32 %v1533, %v1535
    %v1537 = vrot.slane %v1529, %v1536
    %v1539 = vunpack.c.l.s4 1966171168
    %v1540 = vunpack.c.0.s8 %v1539
    %v1541 = vlaneseq
    %v1542 = vshrl.u32 %v1541, 7
    %v1543 = vsub.s32 %v1540, %v1542
    %v1544 = vrot.slane %v1530, %v1543
    %v1545 = vcombine.high %v1537, %v1537
    %v1546 = vcombine.high %v1544, %v1544
    %1551 = vst.msk [vmem:[#allocation2 + $0x6] sm:$0x1] %vm686, %v1537
    %1552 = vst.msk [vmem:[#allocation2 + $0xe] sm:$0x1] %vm686, %v1544
    %1553 = vst.msk [vmem:[#allocation2 + $0x16] sm:$0x1] %vm686, %v1545
    %1554 = vst.msk [vmem:[#allocation2 + $0x1e] sm:$0x1] %vm686, %v1546
    %v1555 = vpack.c.bf16 %v1521, %v1521
    %v1557 = vsel %vm261, %v1555, 0
    %1559 = vmatprep.subr.bf16.mxu0 %v524
    %1560 = vmatpush1.bf16.msra.mxu0 %v523
    %1561 = vmatprep.subr.bf16.mxu0 %v527
    %1562 = vmatpush1.bf16.msra.mxu0 %v526
    %1563 = vmatprep.subr.bf16.mxu0 %v530
    %1564 = vmatpush1.bf16.msra.mxu0 %v529
    %1565 = vmatprep.subr.bf16.mxu0 %v533
    %1566 = vmatpush1.bf16.msra.mxu0 %v532
    %1567 = vmatprep.subr.bf16.mxu0 0
    %1568 = vmatpush1.bf16.msra.mxu0 0
    %1569 = vmatprep.subr.bf16.mxu0 0
    %1570 = vmatpush1.bf16.msra.mxu0 0
    %1571 = vmatprep.subr.bf16.mxu0 0
    %1572 = vmatpush1.bf16.msra.mxu0 0
    %1573 = vmatprep.subr.bf16.mxu0 0
    %1574 = vmatpush1.bf16.msra.mxu0 0
    %1575 = vmatprep.subr.bf16.mxu0 0
    %1576 = vmatpush1.bf16.msra.mxu0 0
    %1577 = vmatprep.subr.bf16.mxu0 0
    %1578 = vmatpush1.bf16.msra.mxu0 0
    %1579 = vmatprep.subr.bf16.mxu0 0
    %1580 = vmatpush1.bf16.msra.mxu0 0
    %1581 = vmatprep.subr.bf16.mxu0 0
    %1582 = vmatpush1.bf16.msra.mxu0 0
    %1583 = vmatprep.subr.bf16.mxu0 0
    %1584 = vmatpush1.bf16.msra.mxu0 0
    %1585 = vmatprep.subr.bf16.mxu0 0
    %1586 = vmatpush1.bf16.msra.mxu0 0
    %1587 = vmatprep.subr.bf16.mxu0 0
    %1588 = vmatpush1.bf16.msra.mxu0 0
    %1589 = vmatprep.subr.bf16.mxu0 0
    %1590 = vmatpush1.bf16.msra.mxu0 0
    %1591 = vmatprep.mubr.bf16.mxu0 0
    %1592 = vmatmul.mubr.bf16.gmra.mrb[0].mxu0 %v1557
    %v1593 = vpop.f32.mrb[0].mxu0
    %v1594 = vadd.f32 0.0, %v1593
    %v1595 = vpop.f32.mrb[0].mxu0
    %v1596 = vadd.f32 0.0, %v1595
    %v1597 = vpop.f32.mrb[0].mxu0
    %v1598 = vpop.f32.mrb[0].mxu0
    %1599 = vdwg.mxu0
    %1600 = vmatprep.subr.bf16.mxu0 0
    %1601 = vmatpush1.bf16.msra.mxu0 %v525
    %1602 = vmatprep.subr.bf16.mxu0 0
    %1603 = vmatpush1.bf16.msra.mxu0 %v528
    %1604 = vmatprep.subr.bf16.mxu0 0
    %1605 = vmatpush1.bf16.msra.mxu0 %v531
    %1606 = vmatprep.subr.bf16.mxu0 0
    %1607 = vmatpush1.bf16.msra.mxu0 %v534
    %1608 = vmatprep.subr.bf16.mxu0 0
    %1609 = vmatpush1.bf16.msra.mxu0 0
    %1610 = vmatprep.subr.bf16.mxu0 0
    %1611 = vmatpush1.bf16.msra.mxu0 0
    %1612 = vmatprep.subr.bf16.mxu0 0
    %1613 = vmatpush1.bf16.msra.mxu0 0
    %1614 = vmatprep.subr.bf16.mxu0 0
    %1615 = vmatpush1.bf16.msra.mxu0 0
    %1616 = vmatprep.subr.bf16.mxu0 0
    %1617 = vmatpush1.bf16.msra.mxu0 0
    %1618 = vmatprep.subr.bf16.mxu0 0
    %1619 = vmatpush1.bf16.msra.mxu0 0
    %1620 = vmatprep.subr.bf16.mxu0 0
    %1621 = vmatpush1.bf16.msra.mxu0 0
    %1622 = vmatprep.subr.bf16.mxu0 0
    %1623 = vmatpush1.bf16.msra.mxu0 0
    %1624 = vmatprep.subr.bf16.mxu0 0
    %1625 = vmatpush1.bf16.msra.mxu0 0
    %1626 = vmatprep.subr.bf16.mxu0 0
    %1627 = vmatpush1.bf16.msra.mxu0 0
    %1628 = vmatprep.subr.bf16.mxu0 0
    %1629 = vmatpush1.bf16.msra.mxu0 0
    %1630 = vmatprep.subr.bf16.mxu0 0
    %1631 = vmatpush1.bf16.msra.mxu0 0
    %1632 = vmatprep.mubr.bf16.mxu0 0
    %1633 = vmatmul.mubr.bf16.gmra.mrb[0].mxu0 %v1557
    %v1634 = vpop.f32.mrb[0].mxu0
    %v1635 = vadd.f32 0.0, %v1634
    %v1636 = vpop.f32.mrb[0].mxu0
    %v1637 = vpop.f32.mrb[0].mxu0
    %v1638 = vpop.f32.mrb[0].mxu0
    %1639 = vdwg.mxu0
    %v1642 = vcombine.low %v1594, %v1596
    %v1644 = vadd.f32 %v392, %v1642
    %v1645 = vxor.u32 %v1644, 2147483648
    %v1646 = vmul.f32 %v1645, 1.442695
    %v1647 = vpow.pop %v1646
    %v1648 = vadd.f32 %v1647, 1.0
    %v1649 = vrcp.pop %v1648
    %v1650 = vmul.f32 1.0, %v1649
    %v1651 = vadd.f32 %v1635, %v162
    %v1652 = vmul.f32 %v1650, %v1651
    %v1653 = vadd.f32 %v393, %v1652
    %v1654 = vtanh.pop %v1653
    %v1656 = vrot.slane %v1650, 4
    %v1658 = vsub.f32 1.0, %v1656
    %v1659 = vmul.f32 %v1658, %v1654
    %v1660 = vmul.f32 %v1656, %v1521
    %v1661 = vadd.f32 %v1659, %v1660
    %v1662 = vmul.f32 %v1661, %v482
    %v1663 = vsub.f32 1.0, %v482
    %v1664 = vmul.f32 %v1521, %v1663
    %v1665 = vadd.f32 %v1662, %v1664
    %v1668 = vunpack.c.l.s4 1966171168
    %v1669 = vunpack.c.0.s8 %v1668
    %v1670 = vlaneseq
    %v1671 = vshrl.u32 %v1670, 7
    %v1672 = vsub.s32 %v1669, %v1671
    %v1673 = vrot.slane %v1665, %v1672
    %v1674 = vcombine.high %v1673, %v1673
    %v1676 = vunpack.c.l.s4 1966171168
    %v1677 = vunpack.c.0.s8 %v1676
    %v1678 = vlaneseq
    %v1679 = vshrl.u32 %v1678, 7
    %v1680 = vsub.s32 %v1677, %v1679
    %v1681 = vrot.slane %v1673, %v1680
    %v1683 = vunpack.c.l.s4 1966171168
    %v1684 = vunpack.c.0.s8 %v1683
    %v1685 = vlaneseq
    %v1686 = vshrl.u32 %v1685, 7
    %v1687 = vsub.s32 %v1684, %v1686
    %v1688 = vrot.slane %v1674, %v1687
    %v1689 = vcombine.high %v1681, %v1681
    %v1690 = vcombine.high %v1688, %v1688
    %1695 = vst.msk [vmem:[#allocation2 + $0x7] sm:$0x1] %vm686, %v1681
    %1696 = vst.msk [vmem:[#allocation2 + $0xf] sm:$0x1] %vm686, %v1688
    %1697 = vst.msk [vmem:[#allocation2 + $0x17] sm:$0x1] %vm686, %v1689
    %1698 = vst.msk [vmem:[#allocation2 + $0x1f] sm:$0x1] %vm686, %v1690
    %v1699 = vld [vmem:[#allocation2] sm:$0xff]
    %v1700 = vld [vmem:[#allocation2 + $0x8] sm:$0xff]
    %v1701 = vld [vmem:[#allocation2 + $0x10] sm:$0xff]
    %v1702 = vld [vmem:[#allocation2 + $0x18] sm:$0xff]
    %v1703 = vtanh.pop %v1699
    %v1704 = vtanh.pop %v1700
    %v1705 = vtanh.pop %v1701
    %v1706 = vtanh.pop %v1702
    %v1707 = vpack.c.bf16 %v1704, %v1703
    %v1708 = vpack.c.bf16 %v1706, %v1705
    %v1710 = vlaneseq
    %v1711 = vshrl.u32 %v1710, 7
    %v1712 = vsub.s32 0, %v1711
    %v1713 = vrot.slane %v164, %v1712
    %v1714 = vlaneseq
    %v1715 = vshrl.u32 %v1714, 7
    %v1716 = vsub.s32 1, %v1715
    %v1717 = vrot.slane %v164, %v1716
    %v1718 = vlaneseq
    %v1719 = vshrl.u32 %v1718, 7
    %v1720 = vsub.s32 2, %v1719
    %v1721 = vrot.slane %v164, %v1720
    %v1741 = vunpack.c.l.b16 %v121
    %v1742 = vunpack.c.h.b16 %v121
    %v1743 = vunpack.c.l.b16 %v122
    %v1744 = vunpack.c.l.b16 %v123
    %v1745 = vunpack.c.h.b16 %v123
    %v1746 = vunpack.c.l.b16 %v124
    %v1747 = vunpack.c.l.b16 %v125
    %v1748 = vunpack.c.h.b16 %v125
    %v1749 = vunpack.c.l.b16 %v126
    %v1750 = vunpack.c.l.b16 %v127
    %v1751 = vunpack.c.h.b16 %v127
    %v1752 = vunpack.c.l.b16 %v128
    %v1753 = vunpack.c.l.b16 %v129
    %v1754 = vunpack.c.h.b16 %v129
    %v1755 = vunpack.c.l.b16 %v130
    %v1756 = vunpack.c.l.b16 %v131
    %v1757 = vunpack.c.h.b16 %v131
    %v1758 = vunpack.c.l.b16 %v132
    %v1759 = vunpack.c.l.b16 %v133
    %v1760 = vunpack.c.h.b16 %v133
    %v1761 = vunpack.c.l.b16 %v134
    %v1762 = vunpack.c.l.b16 %v135
    %v1763 = vunpack.c.h.b16 %v135
    %v1764 = vunpack.c.l.b16 %v136
    %v1765 = vpack.c.b16 %v1744, %v1741
    %v1766 = vpack.c.b16 %v1745, %v1742
    %v1767 = vpack.c.b16 %v1746, %v1743
    %v1768 = vpack.c.b16 %v1750, %v1747
    %v1769 = vpack.c.b16 %v1751, %v1748
    %v1770 = vpack.c.b16 %v1752, %v1749
    %v1771 = vpack.c.b16 %v1756, %v1753
    %v1772 = vpack.c.b16 %v1757, %v1754
    %v1773 = vpack.c.b16 %v1758, %v1755
    %v1774 = vpack.c.b16 %v1762, %v1759
    %v1775 = vpack.c.b16 %v1763, %v1760
    %v1776 = vpack.c.b16 %v1764, %v1761
    %v1790 = vsel %vm261, %v1707, 0
    %v1793 = vsel %vm261, %v1708, 0
    %1795 = vmatprep.subr.bf16.mxu0 %v1766
    %1796 = vmatpush1.bf16.msra.mxu0 %v1765
    %1797 = vmatprep.subr.bf16.mxu0 %v1769
    %1798 = vmatpush1.bf16.msra.mxu0 %v1768
    %1799 = vmatprep.subr.bf16.mxu0 %v1772
    %1800 = vmatpush1.bf16.msra.mxu0 %v1771
    %1801 = vmatprep.subr.bf16.mxu0 %v1775
    %1802 = vmatpush1.bf16.msra.mxu0 %v1774
    %1803 = vmatprep.subr.bf16.mxu0 0
    %1804 = vmatpush1.bf16.msra.mxu0 0
    %1805 = vmatprep.subr.bf16.mxu0 0
    %1806 = vmatpush1.bf16.msra.mxu0 0
    %1807 = vmatprep.subr.bf16.mxu0 0
    %1808 = vmatpush1.bf16.msra.mxu0 0
    %1809 = vmatprep.subr.bf16.mxu0 0
    %1810 = vmatpush1.bf16.msra.mxu0 0
    %1811 = vmatprep.subr.bf16.mxu0 0
    %1812 = vmatpush1.bf16.msra.mxu0 0
    %1813 = vmatprep.subr.bf16.mxu0 0
    %1814 = vmatpush1.bf16.msra.mxu0 0
    %1815 = vmatprep.subr.bf16.mxu0 0
    %1816 = vmatpush1.bf16.msra.mxu0 0
    %1817 = vmatprep.subr.bf16.mxu0 0
    %1818 = vmatpush1.bf16.msra.mxu0 0
    %1819 = vmatprep.subr.bf16.mxu0 0
    %1820 = vmatpush1.bf16.msra.mxu0 0
    %1821 = vmatprep.subr.bf16.mxu0 0
    %1822 = vmatpush1.bf16.msra.mxu0 0
    %1823 = vmatprep.subr.bf16.mxu0 0
    %1824 = vmatpush1.bf16.msra.mxu0 0
    %1825 = vmatprep.subr.bf16.mxu0 0
    %1826 = vmatpush1.bf16.msra.mxu0 0
    %1827 = vmatprep.mubr.bf16.mxu0 0
    %1828 = vmatmul.mubr.bf16.gmra.mrb[0].mxu0 %v1790
    %v1829 = vpop.f32.mrb[0].mxu0
    %v1830 = vadd.f32 %v1713, %v1829
    %v1831 = vpop.f32.mrb[0].mxu0
    %v1832 = vadd.f32 %v1717, %v1831
    %v1833 = vpop.f32.mrb[0].mxu0
    %v1834 = vadd.f32 %v1713, %v1833
    %v1835 = vpop.f32.mrb[0].mxu0
    %v1836 = vadd.f32 %v1717, %v1835
    %1837 = vmatprep.mubr.bf16.mxu0 0
    %1838 = vmatmul.mubr.bf16.gmra.mrb[0].mxu0 %v1793
    %v1839 = vpop.f32.mrb[0].mxu0
    %v1840 = vadd.f32 %v1713, %v1839
    %v1841 = vpop.f32.mrb[0].mxu0
    %v1842 = vadd.f32 %v1717, %v1841
    %v1843 = vpop.f32.mrb[0].mxu0
    %v1844 = vadd.f32 %v1713, %v1843
    %v1845 = vpop.f32.mrb[0].mxu0
    %v1846 = vadd.f32 %v1717, %v1845
    %1847 = vdwg.mxu0
    %1848 = vmatprep.subr.bf16.mxu0 0
    %1849 = vmatpush1.bf16.msra.mxu0 %v1767
    %1850 = vmatprep.subr.bf16.mxu0 0
    %1851 = vmatpush1.bf16.msra.mxu0 %v1770
    %1852 = vmatprep.subr.bf16.mxu0 0
    %1853 = vmatpush1.bf16.msra.mxu0 %v1773
    %1854 = vmatprep.subr.bf16.mxu0 0
    %1855 = vmatpush1.bf16.msra.mxu0 %v1776
    %1856 = vmatprep.subr.bf16.mxu0 0
    %1857 = vmatpush1.bf16.msra.mxu0 0
    %1858 = vmatprep.subr.bf16.mxu0 0
    %1859 = vmatpush1.bf16.msra.mxu0 0
    %1860 = vmatprep.subr.bf16.mxu0 0
    %1861 = vmatpush1.bf16.msra.mxu0 0
    %1862 = vmatprep.subr.bf16.mxu0 0
    %1863 = vmatpush1.bf16.msra.mxu0 0
    %1864 = vmatprep.subr.bf16.mxu0 0
    %1865 = vmatpush1.bf16.msra.mxu0 0
    %1866 = vmatprep.subr.bf16.mxu0 0
    %1867 = vmatpush1.bf16.msra.mxu0 0
    %1868 = vmatprep.subr.bf16.mxu0 0
    %1869 = vmatpush1.bf16.msra.mxu0 0
    %1870 = vmatprep.subr.bf16.mxu0 0
    %1871 = vmatpush1.bf16.msra.mxu0 0
    %1872 = vmatprep.subr.bf16.mxu0 0
    %1873 = vmatpush1.bf16.msra.mxu0 0
    %1874 = vmatprep.subr.bf16.mxu0 0
    %1875 = vmatpush1.bf16.msra.mxu0 0
    %1876 = vmatprep.subr.bf16.mxu0 0
    %1877 = vmatpush1.bf16.msra.mxu0 0
    %1878 = vmatprep.subr.bf16.mxu0 0
    %1879 = vmatpush1.bf16.msra.mxu0 0
    %1880 = vmatprep.mubr.bf16.mxu0 0
    %1881 = vmatmul.mubr.bf16.gmra.mrb[0].mxu0 %v1790
    %v1882 = vpop.f32.mrb[0].mxu0
    %v1883 = vadd.f32 %v1721, %v1882
    %v1884 = vpop.f32.mrb[0].mxu0
    %v1885 = vpop.f32.mrb[0].mxu0
    %v1886 = vadd.f32 %v1721, %v1885
    %v1887 = vpop.f32.mrb[0].mxu0
    %1888 = vmatprep.mubr.bf16.mxu0 0
    %1889 = vmatmul.mubr.bf16.gmra.mrb[0].mxu0 %v1793
    %v1890 = vpop.f32.mrb[0].mxu0
    %v1891 = vadd.f32 %v1721, %v1890
    %v1892 = vpop.f32.mrb[0].mxu0
    %v1893 = vpop.f32.mrb[0].mxu0
    %v1894 = vadd.f32 %v1721, %v1893
    %v1895 = vpop.f32.mrb[0].mxu0
    %1896 = vdwg.mxu0
    %v1913 = vunpack.c.l.b16 %v137
    %v1914 = vunpack.c.h.b16 %v137
    %v1915 = vunpack.c.l.b16 %v138
    %v1916 = vunpack.c.l.b16 %v139
    %v1917 = vunpack.c.h.b16 %v139
    %v1918 = vunpack.c.l.b16 %v140
    %v1919 = vunpack.c.l.b16 %v141
    %v1920 = vunpack.c.h.b16 %v141
    %v1921 = vunpack.c.l.b16 %v142
    %v1922 = vunpack.c.l.b16 %v143
    %v1923 = vunpack.c.h.b16 %v143
    %v1924 = vunpack.c.l.b16 %v144
    %v1925 = vunpack.c.l.b16 %v145
    %v1926 = vunpack.c.h.b16 %v145
    %v1927 = vunpack.c.l.b16 %v146
    %v1928 = vunpack.c.l.b16 %v147
    %v1929 = vunpack.c.h.b16 %v147
    %v1930 = vunpack.c.l.b16 %v148
    %v1931 = vunpack.c.l.b16 %v149
    %v1932 = vunpack.c.h.b16 %v149
    %v1933 = vunpack.c.l.b16 %v150
    %v1934 = vunpack.c.l.b16 %v151
    %v1935 = vunpack.c.h.b16 %v151
    %v1936 = vunpack.c.l.b16 %v152
    %v1937 = vpack.c.b16 %v1916, %v1913
    %v1938 = vpack.c.b16 %v1917, %v1914
    %v1939 = vpack.c.b16 %v1918, %v1915
    %v1940 = vpack.c.b16 %v1922, %v1919
    %v1941 = vpack.c.b16 %v1923, %v1920
    %v1942 = vpack.c.b16 %v1924, %v1921
    %v1943 = vpack.c.b16 %v1928, %v1925
    %v1944 = vpack.c.b16 %v1929, %v1926
    %v1945 = vpack.c.b16 %v1930, %v1927
    %v1946 = vpack.c.b16 %v1934, %v1931
    %v1947 = vpack.c.b16 %v1935, %v1932
    %v1948 = vpack.c.b16 %v1936, %v1933
    %1961 = vmatprep.subr.bf16.mxu0 %v1938
    %1962 = vmatpush1.bf16.msra.mxu0 %v1937
    %1963 = vmatprep.subr.bf16.mxu0 %v1941
    %1964 = vmatpush1.bf16.msra.mxu0 %v1940
    %1965 = vmatprep.subr.bf16.mxu0 %v1944
    %1966 = vmatpush1.bf16.msra.mxu0 %v1943
    %1967 = vmatprep.subr.bf16.mxu0 %v1947
    %1968 = vmatpush1.bf16.msra.mxu0 %v1946
    %1969 = vmatprep.subr.bf16.mxu0 0
    %1970 = vmatpush1.bf16.msra.mxu0 0
    %1971 = vmatprep.subr.bf16.mxu0 0
    %1972 = vmatpush1.bf16.msra.mxu0 0
    %1973 = vmatprep.subr.bf16.mxu0 0
    %1974 = vmatpush1.bf16.msra.mxu0 0
    %1975 = vmatprep.subr.bf16.mxu0 0
    %1976 = vmatpush1.bf16.msra.mxu0 0
    %1977 = vmatprep.subr.bf16.mxu0 0
    %1978 = vmatpush1.bf16.msra.mxu0 0
    %1979 = vmatprep.subr.bf16.mxu0 0
    %1980 = vmatpush1.bf16.msra.mxu0 0
    %1981 = vmatprep.subr.bf16.mxu0 0
    %1982 = vmatpush1.bf16.msra.mxu0 0
    %1983 = vmatprep.subr.bf16.mxu0 0
    %1984 = vmatpush1.bf16.msra.mxu0 0
    %1985 = vmatprep.subr.bf16.mxu0 0
    %1986 = vmatpush1.bf16.msra.mxu0 0
    %1987 = vmatprep.subr.bf16.mxu0 0
    %1988 = vmatpush1.bf16.msra.mxu0 0
    %1989 = vmatprep.subr.bf16.mxu0 0
    %1990 = vmatpush1.bf16.msra.mxu0 0
    %1991 = vmatprep.subr.bf16.mxu0 0
    %1992 = vmatpush1.bf16.msra.mxu0 0
    %1993 = vmatprep.mubr.bf16.mxu0 0
    %1994 = vmatmul.mubr.bf16.gmra.mrb[0].mxu0 %v548
    %v1995 = vpop.f32.mrb[0].mxu0
    %v1996 = vadd.f32 0.0, %v1995
    %v1997 = vpop.f32.mrb[0].mxu0
    %v1998 = vadd.f32 0.0, %v1997
    %v1999 = vpop.f32.mrb[0].mxu0
    %v2000 = vpop.f32.mrb[0].mxu0
    %2001 = vdwg.mxu0
    %2002 = vmatprep.subr.bf16.mxu0 0
    %2003 = vmatpush1.bf16.msra.mxu0 %v1939
    %2004 = vmatprep.subr.bf16.mxu0 0
    %2005 = vmatpush1.bf16.msra.mxu0 %v1942
    %2006 = vmatprep.subr.bf16.mxu0 0
    %2007 = vmatpush1.bf16.msra.mxu0 %v1945
    %2008 = vmatprep.subr.bf16.mxu0 0
    %2009 = vmatpush1.bf16.msra.mxu0 %v1948
    %2010 = vmatprep.subr.bf16.mxu0 0
    %2011 = vmatpush1.bf16.msra.mxu0 0
    %2012 = vmatprep.subr.bf16.mxu0 0
    %2013 = vmatpush1.bf16.msra.mxu0 0
    %2014 = vmatprep.subr.bf16.mxu0 0
    %2015 = vmatpush1.bf16.msra.mxu0 0
    %2016 = vmatprep.subr.bf16.mxu0 0
    %2017 = vmatpush1.bf16.msra.mxu0 0
    %2018 = vmatprep.subr.bf16.mxu0 0
    %2019 = vmatpush1.bf16.msra.mxu0 0
    %2020 = vmatprep.subr.bf16.mxu0 0
    %2021 = vmatpush1.bf16.msra.mxu0 0
    %2022 = vmatprep.subr.bf16.mxu0 0
    %2023 = vmatpush1.bf16.msra.mxu0 0
    %2024 = vmatprep.subr.bf16.mxu0 0
    %2025 = vmatpush1.bf16.msra.mxu0 0
    %2026 = vmatprep.subr.bf16.mxu0 0
    %2027 = vmatpush1.bf16.msra.mxu0 0
    %2028 = vmatprep.subr.bf16.mxu0 0
    %2029 = vmatpush1.bf16.msra.mxu0 0
    %2030 = vmatprep.subr.bf16.mxu0 0
    %2031 = vmatpush1.bf16.msra.mxu0 0
    %2032 = vmatprep.subr.bf16.mxu0 0
    %2033 = vmatpush1.bf16.msra.mxu0 0
    %2034 = vmatprep.mubr.bf16.mxu0 0
    %2035 = vmatmul.mubr.bf16.gmra.mrb[0].mxu0 %v548
    %v2036 = vpop.f32.mrb[0].mxu0
    %v2037 = vadd.f32 0.0, %v2036
    %v2038 = vpop.f32.mrb[0].mxu0
    %v2039 = vpop.f32.mrb[0].mxu0
    %v2040 = vpop.f32.mrb[0].mxu0
    %2041 = vdwg.mxu0
    %v2042 = vadd.f32 %v1830, %v1996
    %v2043 = vadd.f32 %v1832, %v1998
    %v2044 = vxor.u32 %v2042, 2147483648
    %v2045 = vxor.u32 %v2043, 2147483648
    %v2046 = vmul.f32 %v2044, 1.442695
    %v2047 = vpow.pop %v2046
    %v2048 = vmul.f32 %v2045, 1.442695
    %v2049 = vpow.pop %v2048
    %v2050 = vadd.f32 %v2047, 1.0
    %v2051 = vadd.f32 %v2049, 1.0
    %v2052 = vrcp.pop %v2050
    %v2053 = vmul.f32 1.0, %v2052
    %v2054 = vrcp.pop %v2051
    %v2055 = vmul.f32 1.0, %v2054
    %v2056 = vadd.f32 %v2037, %v165
    %v2057 = vmul.f32 %v2053, %v2056
    %v2058 = vadd.f32 %v1883, %v2057
    %v2059 = vtanh.pop %v2058
    %v2060 = vsub.f32 1.0, %v2055
    %v2061 = vmul.f32 %v2060, %v2059
    %v2062 = vmul.f32 %v2055, 0.0
    %v2063 = vadd.f32 %v2061, %v2062
    %v2064 = vpack.c.bf16 %v2063, %v2063
    %v2066 = vsel %vm261, %v2064, 0
    %2068 = vmatprep.subr.bf16.mxu0 %v1938
    %2069 = vmatpush1.bf16.msra.mxu0 %v1937
    %2070 = vmatprep.subr.bf16.mxu0 %v1941
    %2071 = vmatpush1.bf16.msra.mxu0 %v1940
    %2072 = vmatprep.subr.bf16.mxu0 %v1944
    %2073 = vmatpush1.bf16.msra.mxu0 %v1943
    %2074 = vmatprep.subr.bf16.mxu0 %v1947
    %2075 = vmatpush1.bf16.msra.mxu0 %v1946
    %2076 = vmatprep.subr.bf16.mxu0 0
    %2077 = vmatpush1.bf16.msra.mxu0 0
    %2078 = vmatprep.subr.bf16.mxu0 0
    %2079 = vmatpush1.bf16.msra.mxu0 0
    %2080 = vmatprep.subr.bf16.mxu0 0
    %2081 = vmatpush1.bf16.msra.mxu0 0
    %2082 = vmatprep.subr.bf16.mxu0 0
    %2083 = vmatpush1.bf16.msra.mxu0 0
    %2084 = vmatprep.subr.bf16.mxu0 0
    %2085 = vmatpush1.bf16.msra.mxu0 0
    %2086 = vmatprep.subr.bf16.mxu0 0
    %2087 = vmatpush1.bf16.msra.mxu0 0
    %2088 = vmatprep.subr.bf16.mxu0 0
    %2089 = vmatpush1.bf16.msra.mxu0 0
    %2090 = vmatprep.subr.bf16.mxu0 0
    %2091 = vmatpush1.bf16.msra.mxu0 0
    %2092 = vmatprep.subr.bf16.mxu0 0
    %2093 = vmatpush1.bf16.msra.mxu0 0
    %2094 = vmatprep.subr.bf16.mxu0 0
    %2095 = vmatpush1.bf16.msra.mxu0 0
    %2096 = vmatprep.subr.bf16.mxu0 0
    %2097 = vmatpush1.bf16.msra.mxu0 0
    %2098 = vmatprep.subr.bf16.mxu0 0
    %2099 = vmatpush1.bf16.msra.mxu0 0
    %2100 = vmatprep.mubr.bf16.mxu0 0
    %2101 = vmatmul.mubr.bf16.gmra.mrb[0].mxu0 %v2066
    %v2102 = vpop.f32.mrb[0].mxu0
    %v2103 = vadd.f32 0.0, %v2102
    %v2104 = vpop.f32.mrb[0].mxu0
    %v2105 = vadd.f32 0.0, %v2104
    %v2106 = vpop.f32.mrb[0].mxu0
    %v2107 = vpop.f32.mrb[0].mxu0
    %2108 = vdwg.mxu0
    %2109 = vmatprep.subr.bf16.mxu0 0
    %2110 = vmatpush1.bf16.msra.mxu0 %v1939
    %2111 = vmatprep.subr.bf16.mxu0 0
    %2112 = vmatpush1.bf16.msra.mxu0 %v1942
    %2113 = vmatprep.subr.bf16.mxu0 0
    %2114 = vmatpush1.bf16.msra.mxu0 %v1945
    %2115 = vmatprep.subr.bf16.mxu0 0
    %2116 = vmatpush1.bf16.msra.mxu0 %v1948
    %2117 = vmatprep.subr.bf16.mxu0 0
    %2118 = vmatpush1.bf16.msra.mxu0 0
    %2119 = vmatprep.subr.bf16.mxu0 0
    %2120 = vmatpush1.bf16.msra.mxu0 0
    %2121 = vmatprep.subr.bf16.mxu0 0
    %2122 = vmatpush1.bf16.msra.mxu0 0
    %2123 = vmatprep.subr.bf16.mxu0 0
    %2124 = vmatpush1.bf16.msra.mxu0 0
    %2125 = vmatprep.subr.bf16.mxu0 0
    %2126 = vmatpush1.bf16.msra.mxu0 0
    %2127 = vmatprep.subr.bf16.mxu0 0
    %2128 = vmatpush1.bf16.msra.mxu0 0
    %2129 = vmatprep.subr.bf16.mxu0 0
    %2130 = vmatpush1.bf16.msra.mxu0 0
    %2131 = vmatprep.subr.bf16.mxu0 0
    %2132 = vmatpush1.bf16.msra.mxu0 0
    %2133 = vmatprep.subr.bf16.mxu0 0
    %2134 = vmatpush1.bf16.msra.mxu0 0
    %2135 = vmatprep.subr.bf16.mxu0 0
    %2136 = vmatpush1.bf16.msra.mxu0 0
    %2137 = vmatprep.subr.bf16.mxu0 0
    %2138 = vmatpush1.bf16.msra.mxu0 0
    %2139 = vmatprep.subr.bf16.mxu0 0
    %2140 = vmatpush1.bf16.msra.mxu0 0
    %2141 = vmatprep.mubr.bf16.mxu0 0
    %2142 = vmatmul.mubr.bf16.gmra.mrb[0].mxu0 %v2066
    %v2143 = vpop.f32.mrb[0].mxu0
    %v2144 = vadd.f32 0.0, %v2143
    %v2145 = vpop.f32.mrb[0].mxu0
    %v2146 = vpop.f32.mrb[0].mxu0
    %v2147 = vpop.f32.mrb[0].mxu0
    %2148 = vdwg.mxu0
    %v2149 = vadd.f32 %v1834, %v2103
    %v2150 = vadd.f32 %v1836, %v2105
    %v2151 = vxor.u32 %v2149, 2147483648
    %v2152 = vxor.u32 %v2150, 2147483648
    %v2153 = vmul.f32 %v2151, 1.442695
    %v2154 = vpow.pop %v2153
    %v2155 = vmul.f32 %v2152, 1.442695
    %v2156 = vpow.pop %v2155
    %v2157 = vadd.f32 %v2154, 1.0
    %v2158 = vadd.f32 %v2156, 1.0
    %v2159 = vrcp.pop %v2157
    %v2160 = vmul.f32 1.0, %v2159
    %v2161 = vrcp.pop %v2158
    %v2162 = vmul.f32 1.0, %v2161
    %v2163 = vadd.f32 %v2144, %v165
    %v2164 = vmul.f32 %v2160, %v2163
    %v2165 = vadd.f32 %v1886, %v2164
    %v2166 = vtanh.pop %v2165
    %v2167 = vsub.f32 1.0, %v2162
    %v2168 = vmul.f32 %v2167, %v2166
    %v2169 = vmul.f32 %v2162, %v2063
    %v2170 = vadd.f32 %v2168, %v2169
    %v2171 = vpack.c.bf16 %v2170, %v2170
    %v2173 = vsel %vm261, %v2171, 0
    %2175 = vmatprep.subr.bf16.mxu0 %v1938
    %2176 = vmatpush1.bf16.msra.mxu0 %v1937
    %2177 = vmatprep.subr.bf16.mxu0 %v1941
    %2178 = vmatpush1.bf16.msra.mxu0 %v1940
    %2179 = vmatprep.subr.bf16.mxu0 %v1944
    %2180 = vmatpush1.bf16.msra.mxu0 %v1943
    %2181 = vmatprep.subr.bf16.mxu0 %v1947
    %2182 = vmatpush1.bf16.msra.mxu0 %v1946
    %2183 = vmatprep.subr.bf16.mxu0 0
    %2184 = vmatpush1.bf16.msra.mxu0 0
    %2185 = vmatprep.subr.bf16.mxu0 0
    %2186 = vmatpush1.bf16.msra.mxu0 0
    %2187 = vmatprep.subr.bf16.mxu0 0
    %2188 = vmatpush1.bf16.msra.mxu0 0
    %2189 = vmatprep.subr.bf16.mxu0 0
    %2190 = vmatpush1.bf16.msra.mxu0 0
    %2191 = vmatprep.subr.bf16.mxu0 0
    %2192 = vmatpush1.bf16.msra.mxu0 0
    %2193 = vmatprep.subr.bf16.mxu0 0
    %2194 = vmatpush1.bf16.msra.mxu0 0
    %2195 = vmatprep.subr.bf16.mxu0 0
    %2196 = vmatpush1.bf16.msra.mxu0 0
    %2197 = vmatprep.subr.bf16.mxu0 0
    %2198 = vmatpush1.bf16.msra.mxu0 0
    %2199 = vmatprep.subr.bf16.mxu0 0
    %2200 = vmatpush1.bf16.msra.mxu0 0
    %2201 = vmatprep.subr.bf16.mxu0 0
    %2202 = vmatpush1.bf16.msra.mxu0 0
    %2203 = vmatprep.subr.bf16.mxu0 0
    %2204 = vmatpush1.bf16.msra.mxu0 0
    %2205 = vmatprep.subr.bf16.mxu0 0
    %2206 = vmatpush1.bf16.msra.mxu0 0
    %2207 = vmatprep.mubr.bf16.mxu0 0
    %2208 = vmatmul.mubr.bf16.gmra.mrb[0].mxu0 %v2173
    %v2209 = vpop.f32.mrb[0].mxu0
    %v2210 = vadd.f32 0.0, %v2209
    %v2211 = vpop.f32.mrb[0].mxu0
    %v2212 = vadd.f32 0.0, %v2211
    %v2213 = vpop.f32.mrb[0].mxu0
    %v2214 = vpop.f32.mrb[0].mxu0
    %2215 = vdwg.mxu0
    %2216 = vmatprep.subr.bf16.mxu0 0
    %2217 = vmatpush1.bf16.msra.mxu0 %v1939
    %2218 = vmatprep.subr.bf16.mxu0 0
    %2219 = vmatpush1.bf16.msra.mxu0 %v1942
    %2220 = vmatprep.subr.bf16.mxu0 0
    %2221 = vmatpush1.bf16.msra.mxu0 %v1945
    %2222 = vmatprep.subr.bf16.mxu0 0
    %2223 = vmatpush1.bf16.msra.mxu0 %v1948
    %2224 = vmatprep.subr.bf16.mxu0 0
    %2225 = vmatpush1.bf16.msra.mxu0 0
    %2226 = vmatprep.subr.bf16.mxu0 0
    %2227 = vmatpush1.bf16.msra.mxu0 0
    %2228 = vmatprep.subr.bf16.mxu0 0
    %2229 = vmatpush1.bf16.msra.mxu0 0
    %2230 = vmatprep.subr.bf16.mxu0 0
    %2231 = vmatpush1.bf16.msra.mxu0 0
    %2232 = vmatprep.subr.bf16.mxu0 0
    %2233 = vmatpush1.bf16.msra.mxu0 0
    %2234 = vmatprep.subr.bf16.mxu0 0
    %2235 = vmatpush1.bf16.msra.mxu0 0
    %2236 = vmatprep.subr.bf16.mxu0 0
    %2237 = vmatpush1.bf16.msra.mxu0 0
    %2238 = vmatprep.subr.bf16.mxu0 0
    %2239 = vmatpush1.bf16.msra.mxu0 0
    %2240 = vmatprep.subr.bf16.mxu0 0
    %2241 = vmatpush1.bf16.msra.mxu0 0
    %2242 = vmatprep.subr.bf16.mxu0 0
    %2243 = vmatpush1.bf16.msra.mxu0 0
    %2244 = vmatprep.subr.bf16.mxu0 0
    %2245 = vmatpush1.bf16.msra.mxu0 0
    %2246 = vmatprep.subr.bf16.mxu0 0
    %2247 = vmatpush1.bf16.msra.mxu0 0
    %2248 = vmatprep.mubr.bf16.mxu0 0
    %2249 = vmatmul.mubr.bf16.gmra.mrb[0].mxu0 %v2173
    %v2250 = vpop.f32.mrb[0].mxu0
    %v2251 = vadd.f32 0.0, %v2250
    %v2252 = vpop.f32.mrb[0].mxu0
    %v2253 = vpop.f32.mrb[0].mxu0
    %v2254 = vpop.f32.mrb[0].mxu0
    %2255 = vdwg.mxu0
    %v2256 = vadd.f32 %v1840, %v2210
    %v2257 = vadd.f32 %v1842, %v2212
    %v2258 = vxor.u32 %v2256, 2147483648
    %v2259 = vxor.u32 %v2257, 2147483648
    %v2260 = vmul.f32 %v2258, 1.442695
    %v2261 = vpow.pop %v2260
    %v2262 = vmul.f32 %v2259, 1.442695
    %v2263 = vpow.pop %v2262
    %v2264 = vadd.f32 %v2261, 1.0
    %v2265 = vadd.f32 %v2263, 1.0
    %v2266 = vrcp.pop %v2264
    %v2267 = vmul.f32 1.0, %v2266
    %v2268 = vrcp.pop %v2265
    %v2269 = vmul.f32 1.0, %v2268
    %v2270 = vadd.f32 %v2251, %v165
    %v2271 = vmul.f32 %v2267, %v2270
    %v2272 = vadd.f32 %v1891, %v2271
    %v2273 = vtanh.pop %v2272
    %v2274 = vsub.f32 1.0, %v2269
    %v2275 = vmul.f32 %v2274, %v2273
    %v2276 = vmul.f32 %v2269, %v2170
    %v2277 = vadd.f32 %v2275, %v2276
    %v2278 = vpack.c.bf16 %v2277, %v2277
    %v2280 = vsel %vm261, %v2278, 0
    %2282 = vmatprep.subr.bf16.mxu0 %v1938
    %2283 = vmatpush1.bf16.msra.mxu0 %v1937
    %2284 = vmatprep.subr.bf16.mxu0 %v1941
    %2285 = vmatpush1.bf16.msra.mxu0 %v1940
    %2286 = vmatprep.subr.bf16.mxu0 %v1944
    %2287 = vmatpush1.bf16.msra.mxu0 %v1943
    %2288 = vmatprep.subr.bf16.mxu0 %v1947
    %2289 = vmatpush1.bf16.msra.mxu0 %v1946
    %2290 = vmatprep.subr.bf16.mxu0 0
    %2291 = vmatpush1.bf16.msra.mxu0 0
    %2292 = vmatprep.subr.bf16.mxu0 0
    %2293 = vmatpush1.bf16.msra.mxu0 0
    %2294 = vmatprep.subr.bf16.mxu0 0
    %2295 = vmatpush1.bf16.msra.mxu0 0
    %2296 = vmatprep.subr.bf16.mxu0 0
    %2297 = vmatpush1.bf16.msra.mxu0 0
    %2298 = vmatprep.subr.bf16.mxu0 0
    %2299 = vmatpush1.bf16.msra.mxu0 0
    %2300 = vmatprep.subr.bf16.mxu0 0
    %2301 = vmatpush1.bf16.msra.mxu0 0
    %2302 = vmatprep.subr.bf16.mxu0 0
    %2303 = vmatpush1.bf16.msra.mxu0 0
    %2304 = vmatprep.subr.bf16.mxu0 0
    %2305 = vmatpush1.bf16.msra.mxu0 0
    %2306 = vmatprep.subr.bf16.mxu0 0
    %2307 = vmatpush1.bf16.msra.mxu0 0
    %2308 = vmatprep.subr.bf16.mxu0 0
    %2309 = vmatpush1.bf16.msra.mxu0 0
    %2310 = vmatprep.subr.bf16.mxu0 0
    %2311 = vmatpush1.bf16.msra.mxu0 0
    %2312 = vmatprep.subr.bf16.mxu0 0
    %2313 = vmatpush1.bf16.msra.mxu0 0
    %2314 = vmatprep.mubr.bf16.mxu0 0
    %2315 = vmatmul.mubr.bf16.gmra.mrb[0].mxu0 %v2280
    %v2316 = vpop.f32.mrb[0].mxu0
    %v2317 = vadd.f32 0.0, %v2316
    %v2318 = vpop.f32.mrb[0].mxu0
    %v2319 = vadd.f32 0.0, %v2318
    %v2320 = vpop.f32.mrb[0].mxu0
    %v2321 = vpop.f32.mrb[0].mxu0
    %2322 = vdwg.mxu0
    %2323 = vmatprep.subr.bf16.mxu0 0
    %2324 = vmatpush1.bf16.msra.mxu0 %v1939
    %2325 = vmatprep.subr.bf16.mxu0 0
    %2326 = vmatpush1.bf16.msra.mxu0 %v1942
    %2327 = vmatprep.subr.bf16.mxu0 0
    %2328 = vmatpush1.bf16.msra.mxu0 %v1945
    %2329 = vmatprep.subr.bf16.mxu0 0
    %2330 = vmatpush1.bf16.msra.mxu0 %v1948
    %2331 = vmatprep.subr.bf16.mxu0 0
    %2332 = vmatpush1.bf16.msra.mxu0 0
    %2333 = vmatprep.subr.bf16.mxu0 0
    %2334 = vmatpush1.bf16.msra.mxu0 0
    %2335 = vmatprep.subr.bf16.mxu0 0
    %2336 = vmatpush1.bf16.msra.mxu0 0
    %2337 = vmatprep.subr.bf16.mxu0 0
    %2338 = vmatpush1.bf16.msra.mxu0 0
    %2339 = vmatprep.subr.bf16.mxu0 0
    %2340 = vmatpush1.bf16.msra.mxu0 0
    %2341 = vmatprep.subr.bf16.mxu0 0
    %2342 = vmatpush1.bf16.msra.mxu0 0
    %2343 = vmatprep.subr.bf16.mxu0 0
    %2344 = vmatpush1.bf16.msra.mxu0 0
    %2345 = vmatprep.subr.bf16.mxu0 0
    %2346 = vmatpush1.bf16.msra.mxu0 0
    %2347 = vmatprep.subr.bf16.mxu0 0
    %2348 = vmatpush1.bf16.msra.mxu0 0
    %2349 = vmatprep.subr.bf16.mxu0 0
    %2350 = vmatpush1.bf16.msra.mxu0 0
    %2351 = vmatprep.subr.bf16.mxu0 0
    %2352 = vmatpush1.bf16.msra.mxu0 0
    %2353 = vmatprep.subr.bf16.mxu0 0
    %2354 = vmatpush1.bf16.msra.mxu0 0
    %2355 = vmatprep.mubr.bf16.mxu0 0
    %2356 = vmatmul.mubr.bf16.gmra.mrb[0].mxu0 %v2280
    %v2357 = vpop.f32.mrb[0].mxu0
    %v2358 = vadd.f32 0.0, %v2357
    %v2359 = vpop.f32.mrb[0].mxu0
    %v2360 = vpop.f32.mrb[0].mxu0
    %v2361 = vpop.f32.mrb[0].mxu0
    %2362 = vdwg.mxu0
    %v2363 = vadd.f32 %v1844, %v2317
    %v2364 = vadd.f32 %v1846, %v2319
    %v2365 = vxor.u32 %v2363, 2147483648
    %v2366 = vxor.u32 %v2364, 2147483648
    %v2367 = vmul.f32 %v2365, 1.442695
    %v2368 = vpow.pop %v2367
    %v2369 = vmul.f32 %v2366, 1.442695
    %v2370 = vpow.pop %v2369
    %v2371 = vadd.f32 %v2368, 1.0
    %v2372 = vadd.f32 %v2370, 1.0
    %v2373 = vrcp.pop %v2371
    %v2374 = vmul.f32 1.0, %v2373
    %v2375 = vrcp.pop %v2372
    %v2376 = vmul.f32 1.0, %v2375
    %v2377 = vadd.f32 %v2358, %v165
    %v2378 = vmul.f32 %v2374, %v2377
    %v2379 = vadd.f32 %v1894, %v2378
    %v2380 = vtanh.pop %v2379
    %v2381 = vsub.f32 1.0, %v2376
    %v2382 = vmul.f32 %v2381, %v2380
    %v2383 = vmul.f32 %v2376, %v2277
    %v2384 = vadd.f32 %v2382, %v2383
    %v2385 = vlaneseq
    %v2386 = vshrl.u32 %v2385, 7
    %v2387 = vsub.s32 0, %v2386
    %v2388 = vrot.slane %v86, %v2387
    %2390 = vbcast.lane.b32.xlu0 %v2388, 256
    %v2391 = vpop.permute.xlu0 %2390
    %v2392 = vlaneseq
    %v2393 = vshrl.u32 %v2392, 7
    %v2394 = vsub.s32 1, %v2393
    %v2395 = vrot.slane %v86, %v2394
    %2397 = vbcast.lane.b32.xlu0 %v2395, 256
    %v2398 = vpop.permute.xlu0 %2397
    %v2399 = vlaneseq
    %v2400 = vshrl.u32 %v2399, 7
    %v2401 = vsub.s32 2, %v2400
    %v2402 = vrot.slane %v86, %v2401
    %2404 = vbcast.lane.b32.xlu0 %v2402, 256
    %v2405 = vpop.permute.xlu0 %2404
    %v2406 = vlaneseq
    %v2407 = vshrl.u32 %v2406, 7
    %v2408 = vsub.s32 3, %v2407
    %v2409 = vrot.slane %v86, %v2408
    %2411 = vbcast.lane.b32.xlu0 %v2409, 256
    %v2412 = vpop.permute.xlu0 %2411
    %v2413 = vmul.f32 %v2063, %v2391
    %v2414 = vmul.f32 %v2170, %v2398
    %v2415 = vmul.f32 %v2277, %v2405
    %v2416 = vmul.f32 %v2384, %v2412
    %v2417 = vlaneseq
    %v2418 = vshrl.u32 %v2417, 7
    %v2419 = vsub.s32 0, %v2418
    %v2420 = vrot.slane %v88, %v2419
    %2422 = vbcast.lane.b32.xlu0 %v2420, 256
    %v2423 = vpop.permute.xlu0 %2422
    %v2424 = vlaneseq
    %v2425 = vshrl.u32 %v2424, 7
    %v2426 = vsub.s32 1, %v2425
    %v2427 = vrot.slane %v88, %v2426
    %2429 = vbcast.lane.b32.xlu0 %v2427, 256
    %v2430 = vpop.permute.xlu0 %2429
    %v2431 = vlaneseq
    %v2432 = vshrl.u32 %v2431, 7
    %v2433 = vsub.s32 2, %v2432
    %v2434 = vrot.slane %v88, %v2433
    %2436 = vbcast.lane.b32.xlu0 %v2434, 256
    %v2437 = vpop.permute.xlu0 %2436
    %v2438 = vlaneseq
    %v2439 = vshrl.u32 %v2438, 7
    %v2440 = vsub.s32 3, %v2439
    %v2441 = vrot.slane %v88, %v2440
    %2443 = vbcast.lane.b32.xlu0 %v2441, 256
    %v2444 = vpop.permute.xlu0 %2443
    %v2445 = vmul.f32 %v2063, %v2423
    %v2446 = vmul.f32 %v2170, %v2430
    %v2447 = vmul.f32 %v2277, %v2437
    %v2448 = vmul.f32 %v2384, %v2444
    %v2449 = vadd.f32 %v86, %v88
    %v2450 = vld [vmem:[#allocation3] sm:$0x3]
    %v2455 = vunpack.c.l.b16 %v153
    %v2456 = vunpack.c.l.b16 %v154
    %v2457 = vunpack.c.l.b16 %v155
    %v2458 = vunpack.c.l.b16 %v156
    %v2459 = vpack.c.b16 %v2456, %v2455
    %v2460 = vpack.c.b16 %v2458, %v2457
    %vm2463 = vcmask 261120
    %v2465 = vsel %vm2463, %v2450, 0
    %2467 = vmatprep.subr.bf16.mxu0 0
    %2468 = vmatpush1.bf16.msra.mxu0 %v2459
    %2469 = vmatprep.subr.bf16.mxu0 0
    %2470 = vmatpush1.bf16.msra.mxu0 %v2460
    %2471 = vmatprep.subr.bf16.mxu0 0
    %2472 = vmatpush1.bf16.msra.mxu0 0
    %2473 = vmatprep.subr.bf16.mxu0 0
    %2474 = vmatpush1.bf16.msra.mxu0 0
    %2475 = vmatprep.subr.bf16.mxu0 0
    %2476 = vmatpush1.bf16.msra.mxu0 0
    %2477 = vmatprep.subr.bf16.mxu0 0
    %2478 = vmatpush1.bf16.msra.mxu0 0
    %2479 = vmatprep.subr.bf16.mxu0 0
    %2480 = vmatpush1.bf16.msra.mxu0 0
    %2481 = vmatprep.subr.bf16.mxu0 0
    %2482 = vmatpush1.bf16.msra.mxu0 0
    %2483 = vmatprep.subr.bf16.mxu0 0
    %2484 = vmatpush1.bf16.msra.mxu0 0
    %2485 = vmatprep.subr.bf16.mxu0 0
    %2486 = vmatpush1.bf16.msra.mxu0 0
    %2487 = vmatprep.subr.bf16.mxu0 0
    %2488 = vmatpush1.bf16.msra.mxu0 0
    %2489 = vmatprep.subr.bf16.mxu0 0
    %2490 = vmatpush1.bf16.msra.mxu0 0
    %2491 = vmatprep.subr.bf16.mxu0 0
    %2492 = vmatpush1.bf16.msra.mxu0 0
    %2493 = vmatprep.subr.bf16.mxu0 0
    %2494 = vmatpush1.bf16.msra.mxu0 0
    %2495 = vmatprep.subr.bf16.mxu0 0
    %2496 = vmatpush1.bf16.msra.mxu0 0
    %2497 = vmatprep.subr.bf16.mxu0 0
    %2498 = vmatpush1.bf16.msra.mxu0 0
    %2499 = vmatprep.mubr.bf16.mxu0 0
    %2500 = vmatmul.mubr.bf16.gmra.mrb[0].mxu0 %v2465
    %v2501 = vpop.f32.mrb[0].mxu0
    %v2502 = vadd.f32 0.0, %v2501
    %v2503 = vpop.f32.mrb[0].mxu0
    %v2504 = vpop.f32.mrb[0].mxu0
    %v2505 = vpop.f32.mrb[0].mxu0
    %2506 = vdwg.mxu0
    %v2507 = vtanh.pop %v2502
    %v2510 = vunpack.c.l.s4 1966171168
    %v2511 = vunpack.c.0.s8 %v2510
    %v2512 = vlaneseq
    %v2513 = vshrl.u32 %v2512, 7
    %v2514 = vsub.s32 %v2511, %v2513
    %v2515 = vrot.slane %v2507, %v2514
    %v2516 = vcombine.high %v2515, %v2515
    %v2518 = vunpack.c.l.s4 1966171168
    %v2519 = vunpack.c.0.s8 %v2518
    %v2520 = vlaneseq
    %v2521 = vshrl.u32 %v2520, 7
    %v2522 = vsub.s32 %v2519, %v2521
    %v2523 = vrot.slane %v2515, %v2522
    %v2525 = vunpack.c.l.s4 1966171168
    %v2526 = vunpack.c.0.s8 %v2525
    %v2527 = vlaneseq
    %v2528 = vshrl.u32 %v2527, 7
    %v2529 = vsub.s32 %v2526, %v2528
    %v2530 = vrot.slane %v2516, %v2529
    %v2531 = vcombine.high %v2523, %v2523
    %v2532 = vcombine.high %v2530, %v2530
    %v2533 = vlaneseq
    %v2534 = vshrl.u32 %v2533, 7
    %v2535 = vsub.s32 0, %v2534
    %v2536 = vrot.slane %v2523, %v2535
    %v2537 = vlaneseq
    %v2538 = vshrl.u32 %v2537, 7
    %v2539 = vsub.s32 0, %v2538
    %v2540 = vrot.slane %v2530, %v2539
    %v2541 = vlaneseq
    %v2542 = vshrl.u32 %v2541, 7
    %v2543 = vsub.s32 0, %v2542
    %v2544 = vrot.slane %v2531, %v2543
    %v2545 = vlaneseq
    %v2546 = vshrl.u32 %v2545, 7
    %v2547 = vsub.s32 0, %v2546
    %v2548 = vrot.slane %v2532, %v2547
    %v2553 = vmul.f32 %v2063, %v2536
    %v2554 = vmul.f32 %v2170, %v2540
    %v2555 = vmul.f32 %v2277, %v2544
    %v2556 = vmul.f32 %v2384, %v2548
    %v2557 = vsel %vm2463, %v2553, 0.0
    %2558 = vadd.xlane.f32.xlu0 %v2557
    %v2559 = vpop.xlane.xlu0 %2558
    %v2560 = vsel %vm2463, %v2554, 0.0
    %2561 = vadd.xlane.f32.xlu0 %v2560
    %v2562 = vpop.xlane.xlu0 %2561
    %v2563 = vsel %vm2463, %v2555, 0.0
    %2564 = vadd.xlane.f32.xlu0 %v2563
    %v2565 = vpop.xlane.xlu0 %2564
    %v2566 = vsel %vm2463, %v2556, 0.0
    %2567 = vadd.xlane.f32.xlu0 %v2566
    %v2568 = vpop.xlane.xlu0 %2567
    %v2569 = vtanh.pop %v2559
    %v2570 = vtanh.pop %v2562
    %v2571 = vtanh.pop %v2565
    %v2572 = vtanh.pop %v2568
    %v2577 = vlaneseq
    %v2578 = vshrl.u32 %v2577, 7
    %v2579 = vsub.s32 %v407, %v2578
    %v2580 = vrot.slane %v2569, %v2579
    %v2581 = vlaneseq
    %v2582 = vshrl.u32 %v2581, 7
    %v2583 = vsub.s32 %v407, %v2582
    %v2584 = vrot.slane %v2570, %v2583
    %v2585 = vlaneseq
    %v2586 = vshrl.u32 %v2585, 7
    %v2587 = vsub.s32 %v407, %v2586
    %v2588 = vrot.slane %v2571, %v2587
    %v2589 = vlaneseq
    %v2590 = vshrl.u32 %v2589, 7
    %v2591 = vsub.s32 %v407, %v2590
    %v2592 = vrot.slane %v2572, %v2591
    %vm2593 = vcmask 1041409
    %v2594 = vsel %vm2593, %v2584, %v2580
    %vm2595 = vcmask 1042434
    %v2596 = vsel %vm2595, %v2588, %v2594
    %vm2597 = vcmask 1043459
    %v2598 = vsel %vm2597, %v2592, %v2596
    %v2600 = vmul.f32 %v2449, %v2598
    %v2601 = vsub.f32 1.0, %v2449
    %v2602 = vmul.f32 %v2601, -10000.0
    %v2603 = vadd.f32 %v2600, %v2602
    %vm2604 = vcmask 60416
    %v2605 = vsel %vm2604, %v2603, -inf
    %2606 = vmax.xlane.f32.xlu0 %v2605
    %v2607 = vpop.xlane.xlu0 %2606
    %v2608 = vsub.f32 %v2603, %v2607
    %v2609 = vmul.f32 %v2608, 1.442695
    %v2610 = vpow.pop %v2609
    %v2611 = vsel %vm2604, %v2610, 0.0
    %2612 = vadd.xlane.f32.xlu0 %v2611
    %v2613 = vpop.xlane.xlu0 %2612
    %v2614 = vrcp.pop %v2613
    %v2615 = vmul.f32 %v2610, %v2614
    %v2616 = vmul.f32 %v2449, %v2615
    %v2617 = vlaneseq
    %v2618 = vshrl.u32 %v2617, 7
    %v2619 = vsub.s32 0, %v2618
    %v2620 = vrot.slane %v2616, %v2619
    %2622 = vbcast.lane.b32.xlu0 %v2620, 256
    %v2623 = vpop.permute.xlu0 %2622
    %v2624 = vlaneseq
    %v2625 = vshrl.u32 %v2624, 7
    %v2626 = vsub.s32 1, %v2625
    %v2627 = vrot.slane %v2616, %v2626
    %2629 = vbcast.lane.b32.xlu0 %v2627, 256
    %v2630 = vpop.permute.xlu0 %2629
    %v2631 = vlaneseq
    %v2632 = vshrl.u32 %v2631, 7
    %v2633 = vsub.s32 2, %v2632
    %v2634 = vrot.slane %v2616, %v2633
    %2636 = vbcast.lane.b32.xlu0 %v2634, 256
    %v2637 = vpop.permute.xlu0 %2636
    %v2638 = vlaneseq
    %v2639 = vshrl.u32 %v2638, 7
    %v2640 = vsub.s32 3, %v2639
    %v2641 = vrot.slane %v2616, %v2640
    %2643 = vbcast.lane.b32.xlu0 %v2641, 256
    %v2644 = vpop.permute.xlu0 %2643
    %v2645 = vmul.f32 %v2623, %v2413
    %v2646 = vmul.f32 %v2630, %v2414
    %v2647 = vmul.f32 %v2637, %v2415
    %v2648 = vmul.f32 %v2644, %v2416
    %v2649 = vsel %vm2463, %v2645, 0.0
    %v2650 = vrot.slane %v2649, 4
    %v2651 = vadd.f32 %v2649, %v2650
    %v2652 = vrot.slane %v2651, 2
    %v2653 = vadd.f32 %v2651, %v2652
    %v2654 = vrot.slane %v2653, 1
    %v2655 = vadd.f32 %v2653, %v2654
    %v2656 = vsel %vm2463, %v2646, 0.0
    %v2657 = vrot.slane %v2656, 4
    %v2658 = vadd.f32 %v2656, %v2657
    %v2659 = vrot.slane %v2658, 2
    %v2660 = vadd.f32 %v2658, %v2659
    %v2661 = vrot.slane %v2660, 1
    %v2662 = vadd.f32 %v2660, %v2661
    %v2663 = vsel %vm2463, %v2647, 0.0
    %v2664 = vrot.slane %v2663, 4
    %v2665 = vadd.f32 %v2663, %v2664
    %v2666 = vrot.slane %v2665, 2
    %v2667 = vadd.f32 %v2665, %v2666
    %v2668 = vrot.slane %v2667, 1
    %v2669 = vadd.f32 %v2667, %v2668
    %v2670 = vsel %vm2463, %v2648, 0.0
    %v2671 = vrot.slane %v2670, 4
    %v2672 = vadd.f32 %v2670, %v2671
    %v2673 = vrot.slane %v2672, 2
    %v2674 = vadd.f32 %v2672, %v2673
    %v2675 = vrot.slane %v2674, 1
    %v2676 = vadd.f32 %v2674, %v2675
    %2677 = vrot.lane.b32.xlu0 %v2536, 32
    %v2678 = vpop.permute.xlu0 %2677
    %2679 = vrot.lane.b32.xlu0 %v2540, 32
    %v2680 = vpop.permute.xlu0 %2679
    %2681 = vrot.lane.b32.xlu0 %v2544, 32
    %v2682 = vpop.permute.xlu0 %2681
    %2683 = vrot.lane.b32.xlu0 %v2548, 32
    %v2684 = vpop.permute.xlu0 %2683
    %v2689 = vmul.f32 %v2063, %v2678
    %v2690 = vmul.f32 %v2170, %v2680
    %v2691 = vmul.f32 %v2277, %v2682
    %v2692 = vmul.f32 %v2384, %v2684
    %2697 = vrot.lane.b32.xlu0 %v2689, 96
    %v2698 = vpop.permute.xlu0 %2697
    %2699 = vrot.lane.b32.xlu0 %v2690, 96
    %v2700 = vpop.permute.xlu0 %2699
    %2701 = vrot.lane.b32.xlu0 %v2691, 96
    %v2702 = vpop.permute.xlu0 %2701
    %2703 = vrot.lane.b32.xlu0 %v2692, 96
    %v2704 = vpop.permute.xlu0 %2703
    %v2709 = vsel %vm2463, %v2698, 0.0
    %2710 = vadd.xlane.f32.xlu0 %v2709
    %v2711 = vpop.xlane.xlu0 %2710
    %v2712 = vsel %vm2463, %v2700, 0.0
    %2713 = vadd.xlane.f32.xlu0 %v2712
    %v2714 = vpop.xlane.xlu0 %2713
    %v2715 = vsel %vm2463, %v2702, 0.0
    %2716 = vadd.xlane.f32.xlu0 %v2715
    %v2717 = vpop.xlane.xlu0 %2716
    %v2718 = vsel %vm2463, %v2704, 0.0
    %2719 = vadd.xlane.f32.xlu0 %v2718
    %v2720 = vpop.xlane.xlu0 %2719
    %v2721 = vtanh.pop %v2711
    %v2722 = vtanh.pop %v2714
    %v2723 = vtanh.pop %v2717
    %v2724 = vtanh.pop %v2720
    %v2729 = vlaneseq
    %v2730 = vshrl.u32 %v2729, 7
    %v2731 = vsub.s32 %v407, %v2730
    %v2732 = vrot.slane %v2721, %v2731
    %v2733 = vlaneseq
    %v2734 = vshrl.u32 %v2733, 7
    %v2735 = vsub.s32 %v407, %v2734
    %v2736 = vrot.slane %v2722, %v2735
    %v2737 = vlaneseq
    %v2738 = vshrl.u32 %v2737, 7
    %v2739 = vsub.s32 %v407, %v2738
    %v2740 = vrot.slane %v2723, %v2739
    %v2741 = vlaneseq
    %v2742 = vshrl.u32 %v2741, 7
    %v2743 = vsub.s32 %v407, %v2742
    %v2744 = vrot.slane %v2724, %v2743
    %v2745 = vsel %vm2593, %v2736, %v2732
    %v2746 = vsel %vm2595, %v2740, %v2745
    %v2747 = vsel %vm2597, %v2744, %v2746
    %v2749 = vmul.f32 %v2449, %v2747
    %v2750 = vadd.f32 %v2749, %v2602
    %v2751 = vsel %vm2604, %v2750, -inf
    %2752 = vmax.xlane.f32.xlu0 %v2751
    %v2753 = vpop.xlane.xlu0 %2752
    %v2754 = vsub.f32 %v2750, %v2753
    %v2755 = vmul.f32 %v2754, 1.442695
    %v2756 = vpow.pop %v2755
    %v2757 = vsel %vm2604, %v2756, 0.0
    %2758 = vadd.xlane.f32.xlu0 %v2757
    %v2759 = vpop.xlane.xlu0 %2758
    %v2760 = vrcp.pop %v2759
    %v2761 = vmul.f32 %v2756, %v2760
    %v2762 = vmul.f32 %v2449, %v2761
    %v2763 = vlaneseq
    %v2764 = vshrl.u32 %v2763, 7
    %v2765 = vsub.s32 0, %v2764
    %v2766 = vrot.slane %v2762, %v2765
    %2768 = vbcast.lane.b32.xlu0 %v2766, 256
    %v2769 = vpop.permute.xlu0 %2768
    %v2770 = vlaneseq
    %v2771 = vshrl.u32 %v2770, 7
    %v2772 = vsub.s32 1, %v2771
    %v2773 = vrot.slane %v2762, %v2772
    %2775 = vbcast.lane.b32.xlu0 %v2773, 256
    %v2776 = vpop.permute.xlu0 %2775
    %v2777 = vlaneseq
    %v2778 = vshrl.u32 %v2777, 7
    %v2779 = vsub.s32 2, %v2778
    %v2780 = vrot.slane %v2762, %v2779
    %2782 = vbcast.lane.b32.xlu0 %v2780, 256
    %v2783 = vpop.permute.xlu0 %2782
    %v2784 = vlaneseq
    %v2785 = vshrl.u32 %v2784, 7
    %v2786 = vsub.s32 3, %v2785
    %v2787 = vrot.slane %v2762, %v2786
    %2789 = vbcast.lane.b32.xlu0 %v2787, 256
    %v2790 = vpop.permute.xlu0 %2789
    %v2791 = vmul.f32 %v2769, %v2445
    %v2792 = vmul.f32 %v2776, %v2446
    %v2793 = vmul.f32 %v2783, %v2447
    %v2794 = vmul.f32 %v2790, %v2448
    %vm2795 = vcmask 523520
    %v2796 = vsel %vm2795, %v2791, 0.0
    %v2797 = vrot.slane %v2796, 4
    %v2798 = vadd.f32 %v2796, %v2797
    %v2799 = vrot.slane %v2798, 2
    %v2800 = vadd.f32 %v2798, %v2799
    %v2801 = vrot.slane %v2800, 1
    %v2802 = vadd.f32 %v2800, %v2801
    %v2803 = vsel %vm2795, %v2792, 0.0
    %v2804 = vrot.slane %v2803, 4
    %v2805 = vadd.f32 %v2803, %v2804
    %v2806 = vrot.slane %v2805, 2
    %v2807 = vadd.f32 %v2805, %v2806
    %v2808 = vrot.slane %v2807, 1
    %v2809 = vadd.f32 %v2807, %v2808
    %v2810 = vsel %vm2795, %v2793, 0.0
    %v2811 = vrot.slane %v2810, 4
    %v2812 = vadd.f32 %v2810, %v2811
    %v2813 = vrot.slane %v2812, 2
    %v2814 = vadd.f32 %v2812, %v2813
    %v2815 = vrot.slane %v2814, 1
    %v2816 = vadd.f32 %v2814, %v2815
    %v2817 = vsel %vm2795, %v2794, 0.0
    %v2818 = vrot.slane %v2817, 4
    %v2819 = vadd.f32 %v2817, %v2818
    %v2820 = vrot.slane %v2819, 2
    %v2821 = vadd.f32 %v2819, %v2820
    %v2822 = vrot.slane %v2821, 1
    %v2823 = vadd.f32 %v2821, %v2822
    %v2828 = vsel %vm2593, %v2662, %v2655
    %v2829 = vsel %vm2595, %v2669, %v2828
    %v2830 = vsel %vm2597, %v2676, %v2829
    %v2832 = vadd.f32 %v2507, %v2830
    %v2837 = vsel %vm2593, %v2809, %v2802
    %v2838 = vsel %vm2595, %v2816, %v2837
    %v2839 = vsel %vm2597, %v2823, %v2838
    %2840 = vrot.lane.b32.xlu0 %v2839, 96
    %v2841 = vpop.permute.xlu0 %2840
    %v2843 = vadd.f32 %v2832, %v2841
    %v2844 = vtanh.pop %v2843
    %v2847 = vunpack.c.l.s4 1966171168
    %v2848 = vunpack.c.0.s8 %v2847
    %v2849 = vlaneseq
    %v2850 = vshrl.u32 %v2849, 7
    %v2851 = vsub.s32 %v2848, %v2850
    %v2852 = vrot.slane %v2844, %v2851
    %v2853 = vcombine.high %v2852, %v2852
    %v2855 = vunpack.c.l.s4 1966171168
    %v2856 = vunpack.c.0.s8 %v2855
    %v2857 = vlaneseq
    %v2858 = vshrl.u32 %v2857, 7
    %v2859 = vsub.s32 %v2856, %v2858
    %v2860 = vrot.slane %v2852, %v2859
    %v2862 = vunpack.c.l.s4 1966171168
    %v2863 = vunpack.c.0.s8 %v2862
    %v2864 = vlaneseq
    %v2865 = vshrl.u32 %v2864, 7
    %v2866 = vsub.s32 %v2863, %v2865
    %v2867 = vrot.slane %v2853, %v2866
    %v2868 = vcombine.high %v2860, %v2860
    %v2869 = vcombine.high %v2867, %v2867
    %v2870 = vlaneseq
    %v2871 = vshrl.u32 %v2870, 7
    %v2872 = vsub.s32 0, %v2871
    %v2873 = vrot.slane %v2860, %v2872
    %v2874 = vlaneseq
    %v2875 = vshrl.u32 %v2874, 7
    %v2876 = vsub.s32 0, %v2875
    %v2877 = vrot.slane %v2867, %v2876
    %v2878 = vlaneseq
    %v2879 = vshrl.u32 %v2878, 7
    %v2880 = vsub.s32 0, %v2879
    %v2881 = vrot.slane %v2868, %v2880
    %v2882 = vlaneseq
    %v2883 = vshrl.u32 %v2882, 7
    %v2884 = vsub.s32 0, %v2883
    %v2885 = vrot.slane %v2869, %v2884
    %v2890 = vmul.f32 %v2413, %v2873
    %v2891 = vmul.f32 %v2414, %v2877
    %v2892 = vmul.f32 %v2415, %v2881
    %v2893 = vmul.f32 %v2416, %v2885
    %v2894 = vsel %vm2463, %v2890, 0.0
    %2895 = vadd.xlane.f32.xlu0 %v2894
    %v2896 = vpop.xlane.xlu0 %2895
    %v2897 = vsel %vm2463, %v2891, 0.0
    %2898 = vadd.xlane.f32.xlu0 %v2897
    %v2899 = vpop.xlane.xlu0 %2898
    %v2900 = vsel %vm2463, %v2892, 0.0
    %2901 = vadd.xlane.f32.xlu0 %v2900
    %v2902 = vpop.xlane.xlu0 %2901
    %v2903 = vsel %vm2463, %v2893, 0.0
    %2904 = vadd.xlane.f32.xlu0 %v2903
    %v2905 = vpop.xlane.xlu0 %2904
    %v2906 = vtanh.pop %v2896
    %v2907 = vtanh.pop %v2899
    %v2908 = vtanh.pop %v2902
    %v2909 = vtanh.pop %v2905
    %v2914 = vlaneseq
    %v2915 = vshrl.u32 %v2914, 7
    %v2916 = vsub.s32 %v407, %v2915
    %v2917 = vrot.slane %v2906, %v2916
    %v2918 = vlaneseq
    %v2919 = vshrl.u32 %v2918, 7
    %v2920 = vsub.s32 %v407, %v2919
    %v2921 = vrot.slane %v2907, %v2920
    %v2922 = vlaneseq
    %v2923 = vshrl.u32 %v2922, 7
    %v2924 = vsub.s32 %v407, %v2923
    %v2925 = vrot.slane %v2908, %v2924
    %v2926 = vlaneseq
    %v2927 = vshrl.u32 %v2926, 7
    %v2928 = vsub.s32 %v407, %v2927
    %v2929 = vrot.slane %v2909, %v2928
    %v2930 = vsel %vm2593, %v2921, %v2917
    %v2931 = vsel %vm2595, %v2925, %v2930
    %v2932 = vsel %vm2597, %v2929, %v2931
    %v2934 = vmul.f32 %v2449, %v2932
    %v2935 = vadd.f32 %v2934, %v2602
    %v2936 = vsel %vm2604, %v2935, -inf
    %2937 = vmax.xlane.f32.xlu0 %v2936
    %v2938 = vpop.xlane.xlu0 %2937
    %v2939 = vsub.f32 %v2935, %v2938
    %v2940 = vmul.f32 %v2939, 1.442695
    %v2941 = vpow.pop %v2940
    %v2942 = vsel %vm2604, %v2941, 0.0
    %2943 = vadd.xlane.f32.xlu0 %v2942
    %v2944 = vpop.xlane.xlu0 %2943
    %v2945 = vrcp.pop %v2944
    %v2946 = vmul.f32 %v2941, %v2945
    %v2947 = vmul.f32 %v2449, %v2946
    %v2948 = vlaneseq
    %v2949 = vshrl.u32 %v2948, 7
    %v2950 = vsub.s32 0, %v2949
    %v2951 = vrot.slane %v2947, %v2950
    %2953 = vbcast.lane.b32.xlu0 %v2951, 256
    %v2954 = vpop.permute.xlu0 %2953
    %v2955 = vlaneseq
    %v2956 = vshrl.u32 %v2955, 7
    %v2957 = vsub.s32 1, %v2956
    %v2958 = vrot.slane %v2947, %v2957
    %2960 = vbcast.lane.b32.xlu0 %v2958, 256
    %v2961 = vpop.permute.xlu0 %2960
    %v2962 = vlaneseq
    %v2963 = vshrl.u32 %v2962, 7
    %v2964 = vsub.s32 2, %v2963
    %v2965 = vrot.slane %v2947, %v2964
    %2967 = vbcast.lane.b32.xlu0 %v2965, 256
    %v2968 = vpop.permute.xlu0 %2967
    %v2969 = vlaneseq
    %v2970 = vshrl.u32 %v2969, 7
    %v2971 = vsub.s32 3, %v2970
    %v2972 = vrot.slane %v2947, %v2971
    %2974 = vbcast.lane.b32.xlu0 %v2972, 256
    %v2975 = vpop.permute.xlu0 %2974
    %v2976 = vmul.f32 %v2954, %v2413
    %v2977 = vmul.f32 %v2961, %v2414
    %v2978 = vmul.f32 %v2968, %v2415
    %v2979 = vmul.f32 %v2975, %v2416
    %v2980 = vsel %vm2463, %v2976, 0.0
    %v2981 = vrot.slane %v2980, 4
    %v2982 = vadd.f32 %v2980, %v2981
    %v2983 = vrot.slane %v2982, 2
    %v2984 = vadd.f32 %v2982, %v2983
    %v2985 = vrot.slane %v2984, 1
    %v2986 = vadd.f32 %v2984, %v2985
    %v2987 = vsel %vm2463, %v2977, 0.0
    %v2988 = vrot.slane %v2987, 4
    %v2989 = vadd.f32 %v2987, %v2988
    %v2990 = vrot.slane %v2989, 2
    %v2991 = vadd.f32 %v2989, %v2990
    %v2992 = vrot.slane %v2991, 1
    %v2993 = vadd.f32 %v2991, %v2992
    %v2994 = vsel %vm2463, %v2978, 0.0
    %v2995 = vrot.slane %v2994, 4
    %v2996 = vadd.f32 %v2994, %v2995
    %v2997 = vrot.slane %v2996, 2
    %v2998 = vadd.f32 %v2996, %v2997
    %v2999 = vrot.slane %v2998, 1
    %v3000 = vadd.f32 %v2998, %v2999
    %v3001 = vsel %vm2463, %v2979, 0.0
    %v3002 = vrot.slane %v3001, 4
    %v3003 = vadd.f32 %v3001, %v3002
    %v3004 = vrot.slane %v3003, 2
    %v3005 = vadd.f32 %v3003, %v3004
    %v3006 = vrot.slane %v3005, 1
    %v3007 = vadd.f32 %v3005, %v3006
    %3008 = vrot.lane.b32.xlu0 %v2873, 32
    %v3009 = vpop.permute.xlu0 %3008
    %3010 = vrot.lane.b32.xlu0 %v2877, 32
    %v3011 = vpop.permute.xlu0 %3010
    %3012 = vrot.lane.b32.xlu0 %v2881, 32
    %v3013 = vpop.permute.xlu0 %3012
    %3014 = vrot.lane.b32.xlu0 %v2885, 32
    %v3015 = vpop.permute.xlu0 %3014
    %v3020 = vmul.f32 %v2445, %v3009
    %v3021 = vmul.f32 %v2446, %v3011
    %v3022 = vmul.f32 %v2447, %v3013
    %v3023 = vmul.f32 %v2448, %v3015
    %3028 = vrot.lane.b32.xlu0 %v3020, 96
    %v3029 = vpop.permute.xlu0 %3028
    %3030 = vrot.lane.b32.xlu0 %v3021, 96
    %v3031 = vpop.permute.xlu0 %3030
    %3032 = vrot.lane.b32.xlu0 %v3022, 96
    %v3033 = vpop.permute.xlu0 %3032
    %3034 = vrot.lane.b32.xlu0 %v3023, 96
    %v3035 = vpop.permute.xlu0 %3034
    %v3040 = vsel %vm2463, %v3029, 0.0
    %3041 = vadd.xlane.f32.xlu0 %v3040
    %v3042 = vpop.xlane.xlu0 %3041
    %v3043 = vsel %vm2463, %v3031, 0.0
    %3044 = vadd.xlane.f32.xlu0 %v3043
    %v3045 = vpop.xlane.xlu0 %3044
    %v3046 = vsel %vm2463, %v3033, 0.0
    %3047 = vadd.xlane.f32.xlu0 %v3046
    %v3048 = vpop.xlane.xlu0 %3047
    %v3049 = vsel %vm2463, %v3035, 0.0
    %3050 = vadd.xlane.f32.xlu0 %v3049
    %v3051 = vpop.xlane.xlu0 %3050
    %v3052 = vtanh.pop %v3042
    %v3053 = vtanh.pop %v3045
    %v3054 = vtanh.pop %v3048
    %v3055 = vtanh.pop %v3051
    %v3060 = vlaneseq
    %v3061 = vshrl.u32 %v3060, 7
    %v3062 = vsub.s32 %v407, %v3061
    %v3063 = vrot.slane %v3052, %v3062
    %v3064 = vlaneseq
    %v3065 = vshrl.u32 %v3064, 7
    %v3066 = vsub.s32 %v407, %v3065
    %v3067 = vrot.slane %v3053, %v3066
    %v3068 = vlaneseq
    %v3069 = vshrl.u32 %v3068, 7
    %v3070 = vsub.s32 %v407, %v3069
    %v3071 = vrot.slane %v3054, %v3070
    %v3072 = vlaneseq
    %v3073 = vshrl.u32 %v3072, 7
    %v3074 = vsub.s32 %v407, %v3073
    %v3075 = vrot.slane %v3055, %v3074
    %v3076 = vsel %vm2593, %v3067, %v3063
    %v3077 = vsel %vm2595, %v3071, %v3076
    %v3078 = vsel %vm2597, %v3075, %v3077
    %v3080 = vmul.f32 %v2449, %v3078
    %v3081 = vadd.f32 %v3080, %v2602
    %v3082 = vsel %vm2604, %v3081, -inf
    %3083 = vmax.xlane.f32.xlu0 %v3082
    %v3084 = vpop.xlane.xlu0 %3083
    %v3085 = vsub.f32 %v3081, %v3084
    %v3086 = vmul.f32 %v3085, 1.442695
    %v3087 = vpow.pop %v3086
    %v3088 = vsel %vm2604, %v3087, 0.0
    %3089 = vadd.xlane.f32.xlu0 %v3088
    %v3090 = vpop.xlane.xlu0 %3089
    %v3091 = vrcp.pop %v3090
    %v3092 = vmul.f32 %v3087, %v3091
    %v3093 = vmul.f32 %v2449, %v3092
    %v3094 = vlaneseq
    %v3095 = vshrl.u32 %v3094, 7
    %v3096 = vsub.s32 0, %v3095
    %v3097 = vrot.slane %v3093, %v3096
    %3099 = vbcast.lane.b32.xlu0 %v3097, 256
    %v3100 = vpop.permute.xlu0 %3099
    %v3101 = vlaneseq
    %v3102 = vshrl.u32 %v3101, 7
    %v3103 = vsub.s32 1, %v3102
    %v3104 = vrot.slane %v3093, %v3103
    %3106 = vbcast.lane.b32.xlu0 %v3104, 256
    %v3107 = vpop.permute.xlu0 %3106
    %v3108 = vlaneseq
    %v3109 = vshrl.u32 %v3108, 7
    %v3110 = vsub.s32 2, %v3109
    %v3111 = vrot.slane %v3093, %v3110
    %3113 = vbcast.lane.b32.xlu0 %v3111, 256
    %v3114 = vpop.permute.xlu0 %3113
    %v3115 = vlaneseq
    %v3116 = vshrl.u32 %v3115, 7
    %v3117 = vsub.s32 3, %v3116
    %v3118 = vrot.slane %v3093, %v3117
    %3120 = vbcast.lane.b32.xlu0 %v3118, 256
    %v3121 = vpop.permute.xlu0 %3120
    %v3122 = vmul.f32 %v3100, %v2445
    %v3123 = vmul.f32 %v3107, %v2446
    %v3124 = vmul.f32 %v3114, %v2447
    %v3125 = vmul.f32 %v3121, %v2448
    %v3126 = vsel %vm2795, %v3122, 0.0
    %v3127 = vrot.slane %v3126, 4
    %v3128 = vadd.f32 %v3126, %v3127
    %v3129 = vrot.slane %v3128, 2
    %v3130 = vadd.f32 %v3128, %v3129
    %v3131 = vrot.slane %v3130, 1
    %v3132 = vadd.f32 %v3130, %v3131
    %v3133 = vsel %vm2795, %v3123, 0.0
    %v3134 = vrot.slane %v3133, 4
    %v3135 = vadd.f32 %v3133, %v3134
    %v3136 = vrot.slane %v3135, 2
    %v3137 = vadd.f32 %v3135, %v3136
    %v3138 = vrot.slane %v3137, 1
    %v3139 = vadd.f32 %v3137, %v3138
    %v3140 = vsel %vm2795, %v3124, 0.0
    %v3141 = vrot.slane %v3140, 4
    %v3142 = vadd.f32 %v3140, %v3141
    %v3143 = vrot.slane %v3142, 2
    %v3144 = vadd.f32 %v3142, %v3143
    %v3145 = vrot.slane %v3144, 1
    %v3146 = vadd.f32 %v3144, %v3145
    %v3147 = vsel %vm2795, %v3125, 0.0
    %v3148 = vrot.slane %v3147, 4
    %v3149 = vadd.f32 %v3147, %v3148
    %v3150 = vrot.slane %v3149, 2
    %v3151 = vadd.f32 %v3149, %v3150
    %v3152 = vrot.slane %v3151, 1
    %v3153 = vadd.f32 %v3151, %v3152
    %v3158 = vsel %vm2593, %v2993, %v2986
    %v3159 = vsel %vm2595, %v3000, %v3158
    %v3160 = vsel %vm2597, %v3007, %v3159
    %v3162 = vadd.f32 %v2844, %v3160
    %v3167 = vsel %vm2593, %v3139, %v3132
    %v3168 = vsel %vm2595, %v3146, %v3167
    %v3169 = vsel %vm2597, %v3153, %v3168
    %3170 = vrot.lane.b32.xlu0 %v3169, 96
    %v3171 = vpop.permute.xlu0 %3170
    %v3173 = vadd.f32 %v3162, %v3171
    %v3174 = vtanh.pop %v3173
    %v3177 = vunpack.c.l.s4 1966171168
    %v3178 = vunpack.c.0.s8 %v3177
    %v3179 = vlaneseq
    %v3180 = vshrl.u32 %v3179, 7
    %v3181 = vsub.s32 %v3178, %v3180
    %v3182 = vrot.slane %v3174, %v3181
    %v3183 = vcombine.high %v3182, %v3182
    %v3185 = vunpack.c.l.s4 1966171168
    %v3186 = vunpack.c.0.s8 %v3185
    %v3187 = vlaneseq
    %v3188 = vshrl.u32 %v3187, 7
    %v3189 = vsub.s32 %v3186, %v3188
    %v3190 = vrot.slane %v3182, %v3189
    %v3192 = vunpack.c.l.s4 1966171168
    %v3193 = vunpack.c.0.s8 %v3192
    %v3194 = vlaneseq
    %v3195 = vshrl.u32 %v3194, 7
    %v3196 = vsub.s32 %v3193, %v3195
    %v3197 = vrot.slane %v3183, %v3196
    %v3198 = vcombine.high %v3190, %v3190
    %v3199 = vcombine.high %v3197, %v3197
    %v3200 = vlaneseq
    %v3201 = vshrl.u32 %v3200, 7
    %v3202 = vsub.s32 0, %v3201
    %v3203 = vrot.slane %v3190, %v3202
    %v3204 = vlaneseq
    %v3205 = vshrl.u32 %v3204, 7
    %v3206 = vsub.s32 0, %v3205
    %v3207 = vrot.slane %v3197, %v3206
    %v3208 = vlaneseq
    %v3209 = vshrl.u32 %v3208, 7
    %v3210 = vsub.s32 0, %v3209
    %v3211 = vrot.slane %v3198, %v3210
    %v3212 = vlaneseq
    %v3213 = vshrl.u32 %v3212, 7
    %v3214 = vsub.s32 0, %v3213
    %v3215 = vrot.slane %v3199, %v3214
    %v3220 = vmul.f32 %v2413, %v3203
    %v3221 = vmul.f32 %v2414, %v3207
    %v3222 = vmul.f32 %v2415, %v3211
    %v3223 = vmul.f32 %v2416, %v3215
    %v3224 = vsel %vm2463, %v3220, 0.0
    %3225 = vadd.xlane.f32.xlu0 %v3224
    %v3226 = vpop.xlane.xlu0 %3225
    %v3227 = vsel %vm2463, %v3221, 0.0
    %3228 = vadd.xlane.f32.xlu0 %v3227
    %v3229 = vpop.xlane.xlu0 %3228
    %v3230 = vsel %vm2463, %v3222, 0.0
    %3231 = vadd.xlane.f32.xlu0 %v3230
    %v3232 = vpop.xlane.xlu0 %3231
    %v3233 = vsel %vm2463, %v3223, 0.0
    %3234 = vadd.xlane.f32.xlu0 %v3233
    %v3235 = vpop.xlane.xlu0 %3234
    %v3236 = vtanh.pop %v3226
    %v3237 = vtanh.pop %v3229
    %v3238 = vtanh.pop %v3232
    %v3239 = vtanh.pop %v3235
    %v3244 = vlaneseq
    %v3245 = vshrl.u32 %v3244, 7
    %v3246 = vsub.s32 %v407, %v3245
    %v3247 = vrot.slane %v3236, %v3246
    %v3248 = vlaneseq
    %v3249 = vshrl.u32 %v3248, 7
    %v3250 = vsub.s32 %v407, %v3249
    %v3251 = vrot.slane %v3237, %v3250
    %v3252 = vlaneseq
    %v3253 = vshrl.u32 %v3252, 7
    %v3254 = vsub.s32 %v407, %v3253
    %v3255 = vrot.slane %v3238, %v3254
    %v3256 = vlaneseq
    %v3257 = vshrl.u32 %v3256, 7
    %v3258 = vsub.s32 %v407, %v3257
    %v3259 = vrot.slane %v3239, %v3258
    %v3260 = vsel %vm2593, %v3251, %v3247
    %v3261 = vsel %vm2595, %v3255, %v3260
    %v3262 = vsel %vm2597, %v3259, %v3261
    %v3264 = vmul.f32 %v2449, %v3262
    %v3265 = vadd.f32 %v3264, %v2602
    %v3266 = vsel %vm2604, %v3265, -inf
    %3267 = vmax.xlane.f32.xlu0 %v3266
    %v3268 = vpop.xlane.xlu0 %3267
    %v3269 = vsub.f32 %v3265, %v3268
    %v3270 = vmul.f32 %v3269, 1.442695
    %v3271 = vpow.pop %v3270
    %v3272 = vsel %vm2604, %v3271, 0.0
    %3273 = vadd.xlane.f32.xlu0 %v3272
    %v3274 = vpop.xlane.xlu0 %3273
    %v3275 = vrcp.pop %v3274
    %v3276 = vmul.f32 %v3271, %v3275
    %v3277 = vmul.f32 %v2449, %v3276
    %v3278 = vlaneseq
    %v3279 = vshrl.u32 %v3278, 7
    %v3280 = vsub.s32 0, %v3279
    %v3281 = vrot.slane %v3277, %v3280
    %3283 = vbcast.lane.b32.xlu0 %v3281, 256
    %v3284 = vpop.permute.xlu0 %3283
    %v3285 = vlaneseq
    %v3286 = vshrl.u32 %v3285, 7
    %v3287 = vsub.s32 1, %v3286
    %v3288 = vrot.slane %v3277, %v3287
    %3290 = vbcast.lane.b32.xlu0 %v3288, 256
    %v3291 = vpop.permute.xlu0 %3290
    %v3292 = vlaneseq
    %v3293 = vshrl.u32 %v3292, 7
    %v3294 = vsub.s32 2, %v3293
    %v3295 = vrot.slane %v3277, %v3294
    %3297 = vbcast.lane.b32.xlu0 %v3295, 256
    %v3298 = vpop.permute.xlu0 %3297
    %v3299 = vlaneseq
    %v3300 = vshrl.u32 %v3299, 7
    %v3301 = vsub.s32 3, %v3300
    %v3302 = vrot.slane %v3277, %v3301
    %3304 = vbcast.lane.b32.xlu0 %v3302, 256
    %v3305 = vpop.permute.xlu0 %3304
    %v3306 = vmul.f32 %v3284, %v2413
    %v3307 = vmul.f32 %v3291, %v2414
    %v3308 = vmul.f32 %v3298, %v2415
    %v3309 = vmul.f32 %v3305, %v2416
    %v3310 = vsel %vm2463, %v3306, 0.0
    %v3311 = vrot.slane %v3310, 4
    %v3312 = vadd.f32 %v3310, %v3311
    %v3313 = vrot.slane %v3312, 2
    %v3314 = vadd.f32 %v3312, %v3313
    %v3315 = vrot.slane %v3314, 1
    %v3316 = vadd.f32 %v3314, %v3315
    %v3317 = vsel %vm2463, %v3307, 0.0
    %v3318 = vrot.slane %v3317, 4
    %v3319 = vadd.f32 %v3317, %v3318
    %v3320 = vrot.slane %v3319, 2
    %v3321 = vadd.f32 %v3319, %v3320
    %v3322 = vrot.slane %v3321, 1
    %v3323 = vadd.f32 %v3321, %v3322
    %v3324 = vsel %vm2463, %v3308, 0.0
    %v3325 = vrot.slane %v3324, 4
    %v3326 = vadd.f32 %v3324, %v3325
    %v3327 = vrot.slane %v3326, 2
    %v3328 = vadd.f32 %v3326, %v3327
    %v3329 = vrot.slane %v3328, 1
    %v3330 = vadd.f32 %v3328, %v3329
    %v3331 = vsel %vm2463, %v3309, 0.0
    %v3332 = vrot.slane %v3331, 4
    %v3333 = vadd.f32 %v3331, %v3332
    %v3334 = vrot.slane %v3333, 2
    %v3335 = vadd.f32 %v3333, %v3334
    %v3336 = vrot.slane %v3335, 1
    %v3337 = vadd.f32 %v3335, %v3336
    %3338 = vrot.lane.b32.xlu0 %v3203, 32
    %v3339 = vpop.permute.xlu0 %3338
    %3340 = vrot.lane.b32.xlu0 %v3207, 32
    %v3341 = vpop.permute.xlu0 %3340
    %3342 = vrot.lane.b32.xlu0 %v3211, 32
    %v3343 = vpop.permute.xlu0 %3342
    %3344 = vrot.lane.b32.xlu0 %v3215, 32
    %v3345 = vpop.permute.xlu0 %3344
    %v3350 = vmul.f32 %v2445, %v3339
    %v3351 = vmul.f32 %v2446, %v3341
    %v3352 = vmul.f32 %v2447, %v3343
    %v3353 = vmul.f32 %v2448, %v3345
    %3358 = vrot.lane.b32.xlu0 %v3350, 96
    %v3359 = vpop.permute.xlu0 %3358
    %3360 = vrot.lane.b32.xlu0 %v3351, 96
    %v3361 = vpop.permute.xlu0 %3360
    %3362 = vrot.lane.b32.xlu0 %v3352, 96
    %v3363 = vpop.permute.xlu0 %3362
    %3364 = vrot.lane.b32.xlu0 %v3353, 96
    %v3365 = vpop.permute.xlu0 %3364
    %v3370 = vsel %vm2463, %v3359, 0.0
    %3371 = vadd.xlane.f32.xlu0 %v3370
    %v3372 = vpop.xlane.xlu0 %3371
    %v3373 = vsel %vm2463, %v3361, 0.0
    %3374 = vadd.xlane.f32.xlu0 %v3373
    %v3375 = vpop.xlane.xlu0 %3374
    %v3376 = vsel %vm2463, %v3363, 0.0
    %3377 = vadd.xlane.f32.xlu0 %v3376
    %v3378 = vpop.xlane.xlu0 %3377
    %v3379 = vsel %vm2463, %v3365, 0.0
    %3380 = vadd.xlane.f32.xlu0 %v3379
    %v3381 = vpop.xlane.xlu0 %3380
    %v3382 = vtanh.pop %v3372
    %v3383 = vtanh.pop %v3375
    %v3384 = vtanh.pop %v3378
    %v3385 = vtanh.pop %v3381
    %v3390 = vlaneseq
    %v3391 = vshrl.u32 %v3390, 7
    %v3392 = vsub.s32 %v407, %v3391
    %v3393 = vrot.slane %v3382, %v3392
    %v3394 = vlaneseq
    %v3395 = vshrl.u32 %v3394, 7
    %v3396 = vsub.s32 %v407, %v3395
    %v3397 = vrot.slane %v3383, %v3396
    %v3398 = vlaneseq
    %v3399 = vshrl.u32 %v3398, 7
    %v3400 = vsub.s32 %v407, %v3399
    %v3401 = vrot.slane %v3384, %v3400
    %v3402 = vlaneseq
    %v3403 = vshrl.u32 %v3402, 7
    %v3404 = vsub.s32 %v407, %v3403
    %v3405 = vrot.slane %v3385, %v3404
    %v3406 = vsel %vm2593, %v3397, %v3393
    %v3407 = vsel %vm2595, %v3401, %v3406
    %v3408 = vsel %vm2597, %v3405, %v3407
    %v3410 = vmul.f32 %v2449, %v3408
    %v3411 = vadd.f32 %v3410, %v2602
    %v3412 = vsel %vm2604, %v3411, -inf
    %3413 = vmax.xlane.f32.xlu0 %v3412
    %v3414 = vpop.xlane.xlu0 %3413
    %v3415 = vsub.f32 %v3411, %v3414
    %v3416 = vmul.f32 %v3415, 1.442695
    %v3417 = vpow.pop %v3416
    %v3418 = vsel %vm2604, %v3417, 0.0
    %3419 = vadd.xlane.f32.xlu0 %v3418
    %v3420 = vpop.xlane.xlu0 %3419
    %v3421 = vrcp.pop %v3420
    %v3422 = vmul.f32 %v3417, %v3421
    %v3423 = vmul.f32 %v2449, %v3422
    %v3424 = vlaneseq
    %v3425 = vshrl.u32 %v3424, 7
    %v3426 = vsub.s32 0, %v3425
    %v3427 = vrot.slane %v3423, %v3426
    %3429 = vbcast.lane.b32.xlu0 %v3427, 256
    %v3430 = vpop.permute.xlu0 %3429
    %v3431 = vlaneseq
    %v3432 = vshrl.u32 %v3431, 7
    %v3433 = vsub.s32 1, %v3432
    %v3434 = vrot.slane %v3423, %v3433
    %3436 = vbcast.lane.b32.xlu0 %v3434, 256
    %v3437 = vpop.permute.xlu0 %3436
    %v3438 = vlaneseq
    %v3439 = vshrl.u32 %v3438, 7
    %v3440 = vsub.s32 2, %v3439
    %v3441 = vrot.slane %v3423, %v3440
    %3443 = vbcast.lane.b32.xlu0 %v3441, 256
    %v3444 = vpop.permute.xlu0 %3443
    %v3445 = vlaneseq
    %v3446 = vshrl.u32 %v3445, 7
    %v3447 = vsub.s32 3, %v3446
    %v3448 = vrot.slane %v3423, %v3447
    %3450 = vbcast.lane.b32.xlu0 %v3448, 256
    %v3451 = vpop.permute.xlu0 %3450
    %v3452 = vmul.f32 %v3430, %v2445
    %v3453 = vmul.f32 %v3437, %v2446
    %v3454 = vmul.f32 %v3444, %v2447
    %v3455 = vmul.f32 %v3451, %v2448
    %v3456 = vsel %vm2795, %v3452, 0.0
    %v3457 = vrot.slane %v3456, 4
    %v3458 = vadd.f32 %v3456, %v3457
    %v3459 = vrot.slane %v3458, 2
    %v3460 = vadd.f32 %v3458, %v3459
    %v3461 = vrot.slane %v3460, 1
    %v3462 = vadd.f32 %v3460, %v3461
    %v3463 = vsel %vm2795, %v3453, 0.0
    %v3464 = vrot.slane %v3463, 4
    %v3465 = vadd.f32 %v3463, %v3464
    %v3466 = vrot.slane %v3465, 2
    %v3467 = vadd.f32 %v3465, %v3466
    %v3468 = vrot.slane %v3467, 1
    %v3469 = vadd.f32 %v3467, %v3468
    %v3470 = vsel %vm2795, %v3454, 0.0
    %v3471 = vrot.slane %v3470, 4
    %v3472 = vadd.f32 %v3470, %v3471
    %v3473 = vrot.slane %v3472, 2
    %v3474 = vadd.f32 %v3472, %v3473
    %v3475 = vrot.slane %v3474, 1
    %v3476 = vadd.f32 %v3474, %v3475
    %v3477 = vsel %vm2795, %v3455, 0.0
    %v3478 = vrot.slane %v3477, 4
    %v3479 = vadd.f32 %v3477, %v3478
    %v3480 = vrot.slane %v3479, 2
    %v3481 = vadd.f32 %v3479, %v3480
    %v3482 = vrot.slane %v3481, 1
    %v3483 = vadd.f32 %v3481, %v3482
    %v3488 = vsel %vm2593, %v3323, %v3316
    %v3489 = vsel %vm2595, %v3330, %v3488
    %v3490 = vsel %vm2597, %v3337, %v3489
    %v3492 = vadd.f32 %v3174, %v3490
    %v3497 = vsel %vm2593, %v3469, %v3462
    %v3498 = vsel %vm2595, %v3476, %v3497
    %v3499 = vsel %vm2597, %v3483, %v3498
    %3500 = vrot.lane.b32.xlu0 %v3499, 96
    %v3501 = vpop.permute.xlu0 %3500
    %v3503 = vadd.f32 %v3492, %v3501
    %v3504 = vtanh.pop %v3503
    %v3505 = vpack.c.bf16 %v3504, %v3504
    %v3510 = vunpack.c.l.b16 %v157
    %v3511 = vunpack.c.l.b16 %v158
    %v3512 = vunpack.c.l.b16 %v159
    %v3513 = vunpack.c.l.b16 %v160
    %v3514 = vpack.c.b16 %v3511, %v3510
    %v3515 = vpack.c.b16 %v3513, %v3512
    %v3519 = vsel %vm2463, %v3505, 0
    %3521 = vmatprep.subr.bf16.mxu0 0
    %3522 = vmatpush1.bf16.msra.mxu0 %v3514
    %3523 = vmatprep.subr.bf16.mxu0 0
    %3524 = vmatpush1.bf16.msra.mxu0 %v3515
    %3525 = vmatprep.subr.bf16.mxu0 0
    %3526 = vmatpush1.bf16.msra.mxu0 0
    %3527 = vmatprep.subr.bf16.mxu0 0
    %3528 = vmatpush1.bf16.msra.mxu0 0
    %3529 = vmatprep.subr.bf16.mxu0 0
    %3530 = vmatpush1.bf16.msra.mxu0 0
    %3531 = vmatprep.subr.bf16.mxu0 0
    %3532 = vmatpush1.bf16.msra.mxu0 0
    %3533 = vmatprep.subr.bf16.mxu0 0
    %3534 = vmatpush1.bf16.msra.mxu0 0
    %3535 = vmatprep.subr.bf16.mxu0 0
    %3536 = vmatpush1.bf16.msra.mxu0 0
    %3537 = vmatprep.subr.bf16.mxu0 0
    %3538 = vmatpush1.bf16.msra.mxu0 0
    %3539 = vmatprep.subr.bf16.mxu0 0
    %3540 = vmatpush1.bf16.msra.mxu0 0
    %3541 = vmatprep.subr.bf16.mxu0 0
    %3542 = vmatpush1.bf16.msra.mxu0 0
    %3543 = vmatprep.subr.bf16.mxu0 0
    %3544 = vmatpush1.bf16.msra.mxu0 0
    %3545 = vmatprep.subr.bf16.mxu0 0
    %3546 = vmatpush1.bf16.msra.mxu0 0
    %3547 = vmatprep.subr.bf16.mxu0 0
    %3548 = vmatpush1.bf16.msra.mxu0 0
    %3549 = vmatprep.subr.bf16.mxu0 0
    %3550 = vmatpush1.bf16.msra.mxu0 0
    %3551 = vmatprep.subr.bf16.mxu0 0
    %3552 = vmatpush1.bf16.msra.mxu0 0
    %3553 = vmatprep.mubr.bf16.mxu0 0
    %3554 = vmatmul.mubr.bf16.gmra.mrb[0].mxu0 %v3519
    %v3555 = vpop.f32.mrb[0].mxu0
    %v3556 = vadd.f32 %v166, %v3555
    %v3557 = vpop.f32.mrb[0].mxu0
    %v3558 = vpop.f32.mrb[0].mxu0
    %v3559 = vpop.f32.mrb[0].mxu0
    %3560 = vdwg.mxu0
    %vm3561 = vcmask 27648
    %v3562 = vsel %vm3561, %v3556, -inf
    %3563 = vmax.xlane.f32.xlu0 %v3562
    %v3564 = vpop.xlane.xlu0 %3563
    %v3565 = vsub.f32 %v3556, %v3564
    %v3566 = vmul.f32 %v3565, 1.442695
    %v3567 = vpow.pop %v3566
    %v3568 = vsel %vm3561, %v3567, 0.0
    %3569 = vadd.xlane.f32.xlu0 %v3568
    %v3570 = vpop.xlane.xlu0 %3569
    %v3571 = vlog2.pop %v3570
    %v3572 = vmul.f32 %v3571, 0.6931472
    %v3573 = vsub.f32 %v3565, %v3572
    %3574 = vst.msk [vmem:[#allocation12] sm:$0xf] %vm3561, %v3573
    // Predicated region
    $region42: #{tpu_custom_call.1} parent=1 // pred_check
      _
    $region43: #{tpu_custom_call.1} parent=1 // pred_check_branch
      %3576 = sbr.rel (0) target = $region45
    $region44: #{tpu_custom_call.1} parent=1 // pred_region
      %s3578 = ssub.s32 64, 64
      %3579 = vsyncadd [#allocation5], %s3578
      %s3581 = sshll.u32 [#allocation12], 4
      %s3582 = int_to_ptr.vmem [resolvable:$true] %s3581
      %3584 = dma.vmem_to_hbm [thread:$0]  %s3582, 64, %s5, [#allocation5]
    $region45: #{tpu_custom_call.1} parent=1 // pred_fallthru
      _
    // Predicated region
    $region46: #{tpu_custom_call.1} parent=1 // pred_check
      _
    $region47: #{tpu_custom_call.1} parent=1 // pred_check_branch
      %3586 = sbr.rel (0) target = $region49
    $region48: #{tpu_custom_call.1} parent=1 // pred_region
      %3587 = dma.done [#allocation5], 64
    $region49: #{tpu_custom_call.1} parent=1 // pred_fallthru
      _
    %3588 = vsyncpa [#allocation4], 1
    %3589 = vsyncpa [#allocation7], 1
    %3590 = vsyncpa [#allocation10], 1
    %3591 = vsyncpa [#allocation5], 1

</llo_original>
